<compile_context>
chip_gen: v7x
topology: tpu7x:2x2x1
jax: 0.10.0
libtpu: 0.0.40
codegen_flags: <defaults>
</compile_context>

<pallas_src>
import functools

import jax
import jax.numpy as jnp
from jax import lax
from jax.experimental import pallas as pl
from jax.experimental.pallas import tpu as pltpu


# ----------------------------------------------------------------------------
# host-side helpers
# ----------------------------------------------------------------------------
def _reach_bias(adj, max_hops, neg=-1e30):
    """adj: (N, L, L) f32.  Additive mask bias: 0 where a node is reachable
    within max_hops hops (with self-loops), `neg` elsewhere."""
    _, L, _ = adj.shape
    reach = jnp.eye(L, dtype=jnp.float32)[None] + adj
    hop = adj
    for _ in range(max_hops - 1):
        hop = jnp.matmul(hop, adj)
        reach = reach + hop
    return jnp.where(reach > 0, 0.0, neg).astype(jnp.float32)


def _vmem_limit_bytes():
    """Generation-aware VMEM budget: ~80% of physical per-core VMEM
    (~51 MiB on v7x's 64 MiB, ~102 MiB on v5e/v6e's 128 MiB)."""
    cap = 64 * 1024 * 1024                 # conservative fallback
    try:
        cap = int(pltpu.get_tpu_info().vmem_capacity_bytes)
    except Exception:
        pass
    cap = max(32 * 1024 * 1024, min(cap, 128 * 1024 * 1024))
    return int(cap * 0.8)


def _pick_batch_tile(N, L, S, E, G, nhead, vmem_budget):
    """Largest divisor of N such that (a) the flattened token count TB*L stays
    MXU-friendly (<= ~512), (b) a rough per-step activation/intermediate VMEM
    estimate stays within ~1/3 of the budget, and (c) the grid length is
    preferably even and >= 2 (v7x megacore; harmless on v5e/v6e)."""
    smax = max(S, L)
    per_b = (
        2 * 2 * (2 * L * E + 2 * S * E + L * L)    # bf16 input blocks, 2 bufs
        + 2 * 4 * (L * E + L * S)                  # f32 output blocks, 2 bufs
        + 4 * 3 * nhead * L * smax                 # f32 scores / probs
        + 4 * 4 * L * max(E, G)                    # f32 projections / residual
    )
    cap = max(1, int(vmem_budget // 3) // max(per_b, 1))
    target = max(1, min(512 // max(L, 1), cap))
    divs = [d for d in range(1, N + 1) if N % d == 0 and d <= target] or [1]
    even_grid = [d for d in divs if (N // d) >= 2 and (N // d) % 2 == 0]
    multi_grid = [d for d in divs if (N // d) >= 2]
    for cands in (even_grid, multi_grid, divs):
        if cands:
            return max(cands)
    return 1


def preprocess_params(params, d_model, nhead, dim_feedforward):
    """Pre-transpose weights (W^T feeds the MXU directly), fold the softmax
    scale into the q-projection, cast matmul weights to bf16 and pack the tiny
    bias / LayerNorm vectors into 3 small f32 arrays."""
    E = d_model
    d_head = E // nhead
    g_head = dim_feedforward // nhead
    G = g_head * nhead
    f32, bf16 = jnp.float32, jnp.bfloat16

    def fold_scale(w, b, proj_dim, head_dim):
        w_t = w.T.astype(f32)                                  # (E, 3*proj)
        bias = b.astype(f32).reshape(1, 3 * proj_dim)
        scale = 1.0 / float(head_dim) ** 0.5
        col = jnp.concatenate([jnp.full((proj_dim,), scale, f32),
                               jnp.ones((2 * proj_dim,), f32)])
        return w_t * col[None, :], bias * col[None, :]

    sa_wt, sa_b = fold_scale(params["sa_in_w"], params["sa_in_b"], E, d_head)
    ca_wt, ca_b = fold_scale(params["ca_in_w"], params["ca_in_b"], E, d_head)
    g_wt, g_b = fold_scale(params["g_in_w"], params["g_in_b"], G, g_head)

    return {
        "sa_wqk": sa_wt[:, :2 * E].astype(bf16),
        "sa_wv": sa_wt[:, 2 * E:].astype(bf16),
        "ca_wq": ca_wt[:, :E].astype(bf16),
        "ca_wk": ca_wt[:, E:2 * E].astype(bf16),
        "ca_wv": ca_wt[:, 2 * E:].astype(bf16),
        "g_wqkv": g_wt.astype(bf16),
        # full out-projection matrices (W_out^T), fused single-matmul path
        "sa_wo": params["sa_out_w"].T.astype(bf16),            # (E, E)
        "ca_wo": params["ca_out_w"].T.astype(bf16),            # (E, E)
        "g_wo": params["g_out_w"].T.astype(bf16),              # (G, E)
        "qkv_b": jnp.concatenate([sa_b, ca_b], axis=0),        # (2, 3E) f32
        "g_b": g_b,                                            # (1, 3G) f32
        "vec": jnp.concatenate(                                # (9, E)  f32
            [params["sa_out_b"], params["ca_out_b"], params["g_out_b"],
             params["n1_g"], params["n1_b"],
             params["n2_g"], params["n2_b"],
             params["n3_g"], params["n3_b"]], axis=0).astype(f32),
    }


# ----------------------------------------------------------------------------
# Pallas kernel: TB batch elements per grid step, weights resident in VMEM
# ----------------------------------------------------------------------------
def _tad_kernel(nhead, d_head, g_head, need_weights, *refs):
    (tgt_ref, tpos_ref, mem_ref, mpos_ref, bias_ref,
     sa_wqk_ref, sa_wv_ref,
     ca_wq_ref, ca_wk_ref, ca_wv_ref, g_wqkv_ref,
     sa_wo_ref, ca_wo_ref, g_wo_ref,
     qkvb_ref, gb_ref, vec_ref) = refs[:17]
    if need_weights:
        out_ref, attn_ref, mrg_e_ref, mrg_g_ref = refs[17:]
    else:
        out_ref, mrg_e_ref, mrg_g_ref = refs[17:]
        attn_ref = None

    TB, L, E = tgt_ref.shape
    S = mem_ref.shape[1]
    G = nhead * g_head
    bf16, f32 = jnp.bfloat16, jnp.float32

    tgt16 = tgt_ref[...].reshape(TB * L, E)                    # bf16
    mem16 = mem_ref[...].reshape(TB * S, E)                    # bf16
    x = tgt16.astype(f32)                                      # residual, f32
    vec = vec_ref[...]
    qkvb = qkvb_ref[...]

    def lnorm(v, gi, bi, eps=1e-5):
        mu = jnp.mean(v, axis=-1, keepdims=True)
        c = v - mu
        var = jnp.mean(c * c, axis=-1, keepdims=True)
        return c * lax.rsqrt(var + eps) * vec[gi:gi + 1, :] + vec[bi:bi + 1, :]

    def attention(qp, kp, vp, w_out_ref, b_out, mrg_ref, hd, S_kv,
                  bias=None, want_probs=False):
        """Head-batched MHA with a fused (full-K) output projection.
        qp: (TB*L, nhead*hd) f32, kp/vp: (TB*S_kv, nhead*hd) f32."""
        q16, k16, v16 = qp.astype(bf16), kp.astype(bf16), vp.astype(bf16)

        def heads(x2, T):
            # TODO(synk): per-head lane slices + axis-0 concat; a single
            # minor-dim-splitting reshape/transpose would be cheaper but is not
            # reliably lowered by Mosaic for hd < 128.
            parts = [x2[:, h * hd:(h + 1) * hd].reshape(TB, T, hd)
                     for h in range(nhead)]
            return jnp.concatenate(parts, axis=0)              # (H*TB, T, hd)

        qh, kh, vh = heads(q16, L), heads(k16, S_kv), heads(v16, S_kv)

        s = jnp.einsum('bld,bsd->bls', qh, kh,
                       preferred_element_type=f32)             # (H*TB, L, S)
        if bias is not None:
            # broadcast the (TB, L, S) mask bias over the head axis (no concat)
            s = (s.reshape(nhead, TB, L, S_kv) + bias[None]
                 ).reshape(nhead * TB, L, S_kv)
        m = jnp.max(s, axis=-1, keepdims=True)
        p = jnp.exp(s - m)
        p = p * pl.reciprocal(jnp.sum(p, axis=-1, keepdims=True), approx=True)

        o = jnp.einsum('bls,bsd->bld', p.astype(bf16), vh,
                       preferred_element_type=f32)             # (H*TB, L, hd)

        # merge heads back onto lanes via static-offset stores to bf16 scratch,
        # then ONE full-K matmul against the un-split W_out^T.
        for h in range(nhead):
            mrg_ref[:, h * hd:(h + 1) * hd] = (
                o[h * TB:(h + 1) * TB].reshape(TB * L, hd).astype(mrg_ref.dtype))
        out = jnp.dot(mrg_ref[...], w_out_ref[...],
                      preferred_element_type=f32) + b_out

        probs = None
        if want_probs:
            p4 = p.reshape(nhead, TB, L, S_kv)
            acc = p4[0]
            for h in range(1, nhead):
                acc = acc + p4[h]
            probs = acc * (1.0 / nhead)
        return out, probs

    # ---- 1. self-attention: q = k = tgt + tgt_pos, v = tgt -----------------
    qk_in = (tgt_ref[...] + tpos_ref[...]).reshape(TB * L, E)   # bf16
    qk = jnp.dot(qk_in, sa_wqk_ref[...],
                 preferred_element_type=f32) + qkvb[0:1, :2 * E]
    v_sa = jnp.dot(tgt16, sa_wv_ref[...],
                   preferred_element_type=f32) + qkvb[0:1, 2 * E:]
    sa, _ = attention(qk[:, :E], qk[:, E:], v_sa, sa_wo_ref, vec[0:1, :],
                      mrg_e_ref, d_head, L)
    x = lnorm(x + sa, 3, 4)                                     # dropout1 == id

    # ---- 2. cross-attention: q = x, k = mem + mem_pos, v = mem -------------
    k_in = (mem_ref[...] + mpos_ref[...]).reshape(TB * S, E)    # bf16
    q_ca = jnp.dot(x.astype(bf16), ca_wq_ref[...],
                   preferred_element_type=f32) + qkvb[1:2, :E]
    k_ca = jnp.dot(k_in, ca_wk_ref[...],
                   preferred_element_type=f32) + qkvb[1:2, E:2 * E]
    v_ca = jnp.dot(mem16, ca_wv_ref[...],
                   preferred_element_type=f32) + qkvb[1:2, 2 * E:]
    ca, attn_w = attention(q_ca, k_ca, v_ca, ca_wo_ref, vec[1:2, :],
                           mrg_e_ref, d_head, S, want_probs=need_weights)
    x = lnorm(x + ca, 5, 6)                                     # dropout2 == id

    # ---- 3. TSAttention (graph / tree-structured attention) ----------------
    # TODO(synk): TSAttention source is not provided; implemented as MHA
    # restricted to nodes reachable within max_num_hops hops (additive bias
    # precomputed on the host), per-head dim = dim_feedforward // nhead.
    qkv = jnp.dot(x.astype(bf16), g_wqkv_ref[...],
                  preferred_element_type=f32) + gb_ref[...]
    ga, _ = attention(qkv[:, :G], qkv[:, G:2 * G], qkv[:, 2 * G:],
                      g_wo_ref, vec[2:3, :], mrg_g_ref, g_head, L,
                      bias=bias_ref[...].astype(f32))
    x = lnorm(x + ga, 7, 8)                                     # dropout3 == id

    out_ref[...] = x.reshape(TB, L, E).astype(out_ref.dtype)
    if need_weights:
        attn_ref[...] = attn_w.astype(attn_ref.dtype)


# ----------------------------------------------------------------------------
# wrapper
# ----------------------------------------------------------------------------
def tad_layer_forward(params, tgt, mem, tgt_pos, mem_pos, tgt_adj_mat,
                      *, nhead, dim_feedforward, max_num_hops,
                      batch_tile=None, need_weights=True):
    """tgt/tgt_pos: (L, N, E); mem/mem_pos: (S, N, E); tgt_adj_mat: (N, L, L).
    Returns (tgt_out (L, N, E), attn_weights (N, L, S) or None)."""
    L, N, E = tgt.shape
    S = mem.shape[0]
    d_head = E // nhead
    g_head = dim_feedforward // nhead
    G = g_head * nhead
    bf16 = jnp.bfloat16

    prep = preprocess_params(params, E, nhead, dim_feedforward)

    # bf16 on the DMA path (half the HBM->VMEM bytes); f32 math stays in-kernel.
    to_bf = lambda a: jnp.transpose(a.astype(bf16), (1, 0, 2))
    tgt_b, tpos_b = to_bf(tgt), to_bf(tgt_pos)
    mem_b, mpos_b = to_bf(mem), to_bf(mem_pos)

    # reachability mask -> additive bias, computed once, batched, in XLA
    bias = _reach_bias(tgt_adj_mat.astype(jnp.float32), max_num_hops).astype(bf16)

    vmem_limit = _vmem_limit_bytes()
    TB = batch_tile or _pick_batch_tile(N, L, S, E, G, nhead, vmem_limit)
    assert N % TB == 0
    grid = (N // TB,)

    data = lambda d1, d2: pl.BlockSpec((TB, d1, d2), lambda n: (n, 0, 0))
    # weights/biases: whole-array, resident in VMEM, single-buffered (copied
    # HBM->VMEM once, never re-fetched, no double-buffering).
    wspec = lambda: pl.BlockSpec(memory_space=pltpu.MemorySpace.VMEM)

    out_shapes = [jax.ShapeDtypeStruct((N, L, E), jnp.float32)]
    out_specs = [data(L, E)]
    if need_weights:
        out_shapes.append(jax.ShapeDtypeStruct((N, L, S), jnp.float32))
        out_specs.append(data(L, S))

    kernel = functools.partial(_tad_kernel, nhead, d_head, g_head, need_weights)

    res = pl.pallas_call(
        kernel,
        out_shape=tuple(out_shapes),
        grid_spec=pltpu.PrefetchScalarGridSpec(
            num_scalar_prefetch=0,
            grid=grid,
            in_specs=[
                data(L, E), data(L, E), data(S, E), data(S, E), data(L, L),
                wspec(), wspec(), wspec(), wspec(), wspec(), wspec(),
                wspec(), wspec(), wspec(), wspec(), wspec(), wspec(),
            ],
            out_specs=tuple(out_specs),
            scratch_shapes=[pltpu.VMEM((TB * L, E), bf16),
                            pltpu.VMEM((TB * L, G), bf16)]),
        compiler_params=pltpu.CompilerParams(
            dimension_semantics=("parallel",),
            vmem_limit_bytes=vmem_limit),
    )(tgt_b, tpos_b, mem_b, mpos_b, bias,
      prep["sa_wqk"], prep["sa_wv"],
      prep["ca_wq"], prep["ca_wk"], prep["ca_wv"], prep["g_wqkv"],
      prep["sa_wo"], prep["ca_wo"], prep["g_wo"],
      prep["qkv_b"], prep["g_b"], prep["vec"])

    out = jnp.transpose(res[0], (1, 0, 2))
    attn = res[1] if need_weights else None
    return out, attn


# ----------------------------------------------------------------------------
# deterministic parameter init (xavier_uniform for matrices, zeros for biases,
# ones/zeros for LayerNorm — mirrors the module's _reset_parameters)
# ----------------------------------------------------------------------------
def init_params(key, d_model, nhead, dim_feedforward):
    g_dim = (dim_feedforward // nhead) * nhead
    keys = jax.random.split(key, 6)

    def xavier(k, shape):
        lim = jnp.sqrt(6.0 / (shape[0] + shape[1]))
        return jax.random.uniform(k, shape, jnp.float32, -lim, lim)

    return {
        "sa_in_w": xavier(keys[0], (3 * d_model, d_model)),
        "sa_in_b": jnp.zeros((1, 3 * d_model), jnp.float32),
        "sa_out_w": xavier(keys[1], (d_model, d_model)),
        "sa_out_b": jnp.zeros((1, d_model), jnp.float32),
        "ca_in_w": xavier(keys[2], (3 * d_model, d_model)),
        "ca_in_b": jnp.zeros((1, 3 * d_model), jnp.float32),
        "ca_out_w": xavier(keys[3], (d_model, d_model)),
        "ca_out_b": jnp.zeros((1, d_model), jnp.float32),
        "g_in_w": xavier(keys[4], (3 * g_dim, d_model)),
        "g_in_b": jnp.zeros((1, 3 * g_dim), jnp.float32),
        "g_out_w": xavier(keys[5], (d_model, g_dim)),
        "g_out_b": jnp.zeros((1, d_model), jnp.float32),
        "n1_g": jnp.ones((1, d_model), jnp.float32),
        "n1_b": jnp.zeros((1, d_model), jnp.float32),
        "n2_g": jnp.ones((1, d_model), jnp.float32),
        "n2_b": jnp.zeros((1, d_model), jnp.float32),
        "n3_g": jnp.ones((1, d_model), jnp.float32),
        "n3_b": jnp.zeros((1, d_model), jnp.float32),
    }


# ----------------------------------------------------------------------------
# pure-JAX reference (same math & precision choices, no Pallas)
# ----------------------------------------------------------------------------
def reference(prep, tgt, mem, tgt_pos, mem_pos, adj,
              *, nhead, d_head, g_head, max_hops):
    L, N, E = tgt.shape
    G = nhead * g_head
    bf16, f32 = jnp.bfloat16, jnp.float32
    vec, qkvb, gb = prep["vec"], prep["qkv_b"], prep["g_b"]

    tgt16, tpos16 = tgt.astype(bf16), tgt_pos.astype(bf16)
    mem16, mpos16 = mem.astype(bf16), mem_pos.astype(bf16)
    bias_all = _reach_bias(adj.astype(f32), max_hops).astype(bf16).astype(f32)

    def lnorm(v, gi, bi, eps=1e-5):
        mu = jnp.mean(v, axis=-1, keepdims=True)
        c = v - mu
        var = jnp.mean(c * c, axis=-1, keepdims=True)
        return c * lax.rsqrt(var + eps) * vec[gi:gi + 1] + vec[bi:bi + 1]

    def mha(q, k, v, wo, bo, hd, bias=None):
        o_parts, attn = [], 0.0
        for h in range(nhead):
            sl = slice(h * hd, (h + 1) * hd)
            s = jnp.dot(q[:, sl].astype(bf16), k[:, sl].astype(bf16).T,
                        preferred_element_type=f32)
            if bias is not None:
                s = s + bias
            p = jax.nn.softmax(s, axis=-1)
            o_parts.append(jnp.dot(p.astype(bf16), v[:, sl].astype(bf16),
                                   preferred_element_type=f32))
            attn = attn + p
        o_cat = jnp.concatenate(o_parts, axis=-1)
        out = jnp.dot(o_cat.astype(bf16), wo, preferred_element_type=f32) + bo
        return out, attn / nhead

    outs, attns = [], []
    for n in range(N):
        x16 = tgt16[:, n, :]
        x = x16.astype(f32)
        mem_n16 = mem16[:, n, :]

        qk_in = x16 + tpos16[:, n, :]
        qk = jnp.dot(qk_in, prep["sa_wqk"],
                     preferred_element_type=f32) + qkvb[0:1, :2 * E]
        vv = jnp.dot(x16, prep["sa_wv"],
                     preferred_element_type=f32) + qkvb[0:1, 2 * E:]
        sa, _ = mha(qk[:, :E], qk[:, E:], vv, prep["sa_wo"], vec[0:1], d_head)
        x = lnorm(x + sa, 3, 4)

        k_in = mem_n16 + mpos16[:, n, :]
        qc = jnp.dot(x.astype(bf16), prep["ca_wq"],
                     preferred_element_type=f32) + qkvb[1:2, :E]
        kc = jnp.dot(k_in, prep["ca_wk"],
                     preferred_element_type=f32) + qkvb[1:2, E:2 * E]
        vc = jnp.dot(mem_n16, prep["ca_wv"],
                     preferred_element_type=f32) + qkvb[1:2, 2 * E:]
        ca, aw = mha(qc, kc, vc, prep["ca_wo"], vec[1:2], d_head)
        x = lnorm(x + ca, 5, 6)

        qkv = jnp.dot(x.astype(bf16), prep["g_wqkv"],
                      preferred_element_type=f32) + gb
        ga, _ = mha(qkv[:, :G], qkv[:, G:2 * G], qkv[:, 2 * G:],
                    prep["g_wo"], vec[2:3], g_head, bias=bias_all[n])
        x = lnorm(x + ga, 7, 8)

        outs.append(x)
        attns.append(aw)
    return jnp.stack(outs, axis=1), jnp.stack(attns, axis=0)


if __name__ == "__main__":
    d_model, nhead, dim_feedforward, max_hops = 32, 4, 64, 2
    L, S, N = 8, 16, 2

    key = jax.random.PRNGKey(0)
    kp, k1, k2, k3, k4, k5 = jax.random.split(key, 6)
    params = init_params(kp, d_model, nhead, dim_feedforward)

    tgt = jax.random.normal(k1, (L, N, d_model), jnp.float32)
    mem = jax.random.normal(k2, (S, N, d_model), jnp.float32)
    tgt_pos = jax.random.normal(k3, (L, N, d_model), jnp.float32)
    mem_pos = jax.random.normal(k4, (S, N, d_model), jnp.float32)
    tgt_adj_mat = (jax.random.uniform(k5, (N, L, L)) > 0.6).astype(jnp.float32)

    out, attn = tad_layer_forward(
        params, tgt, mem, tgt_pos, mem_pos, tgt_adj_mat,
        nhead=nhead, dim_feedforward=dim_feedforward, max_num_hops=max_hops)
    out = jax.block_until_ready(out)
    attn = jax.block_until_ready(attn)

    prep = preprocess_params(params, d_model, nhead, dim_feedforward)
    ref_out, ref_attn = reference(
        prep, tgt, mem, tgt_pos, mem_pos, tgt_adj_mat,
        nhead=nhead, d_head=d_model // nhead,
        g_head=dim_feedforward // nhead, max_hops=max_hops)

    assert out.shape == (L, N, d_model)
    assert attn.shape == (N, L, S)
    assert bool(jnp.all(jnp.isfinite(out))) and bool(jnp.all(jnp.isfinite(attn)))
    assert bool(jnp.allclose(out, ref_out, rtol=2e-2, atol=2e-2))
    assert bool(jnp.allclose(attn, ref_attn, rtol=2e-2, atol=2e-2))
    print("KERNEL_OK")
</pallas_src>

<mosaic_0001>
module attributes {stable_mosaic.version = 11 : i64} {
  func.func @_tad_kernel(%arg0: i32, %arg1: memref<1x8x32xbf16, #tpu.memory_space<vmem>>, %arg2: memref<1x8x32xbf16, #tpu.memory_space<vmem>>, %arg3: memref<1x16x32xbf16, #tpu.memory_space<vmem>>, %arg4: memref<1x16x32xbf16, #tpu.memory_space<vmem>>, %arg5: memref<1x8x8xbf16, #tpu.memory_space<vmem>>, %arg6: memref<32x64xbf16, #tpu.memory_space<vmem>>, %arg7: memref<32x32xbf16, #tpu.memory_space<vmem>>, %arg8: memref<32x32xbf16, #tpu.memory_space<vmem>>, %arg9: memref<32x32xbf16, #tpu.memory_space<vmem>>, %arg10: memref<32x32xbf16, #tpu.memory_space<vmem>>, %arg11: memref<32x192xbf16, #tpu.memory_space<vmem>>, %arg12: memref<32x32xbf16, #tpu.memory_space<vmem>>, %arg13: memref<32x32xbf16, #tpu.memory_space<vmem>>, %arg14: memref<64x32xbf16, #tpu.memory_space<vmem>>, %arg15: memref<2x96xf32, #tpu.memory_space<vmem>>, %arg16: memref<1x192xf32, #tpu.memory_space<vmem>>, %arg17: memref<9x32xf32, #tpu.memory_space<vmem>>, %arg18: memref<1x8x32xf32, #tpu.memory_space<vmem>>, %arg19: memref<1x8x16xf32, #tpu.memory_space<vmem>>, %arg20: memref<8x32xbf16, #tpu.memory_space<vmem>>, %arg21: memref<8x64xbf16, #tpu.memory_space<vmem>>) attributes {dimension_semantics = [#tpu.dimension_semantics<parallel>], iteration_bounds = array<i64: 2>, scalar_prefetch = 0 : i64, scratch_operands = 2 : i64, tpu.core_type = #tpu.core_type<tc>, window_params = [{transform_indices = @transform_0, window_bounds = array<i64: 1, 8, 32>}, {transform_indices = @transform_1, window_bounds = array<i64: 1, 8, 32>}, {transform_indices = @transform_2, window_bounds = array<i64: 1, 16, 32>}, {transform_indices = @transform_3, window_bounds = array<i64: 1, 16, 32>}, {transform_indices = @transform_4, window_bounds = array<i64: 1, 8, 8>}, {pipeline_mode = #tpu.pipeline_mode<synchronous>, transform_indices = @transform_5, window_bounds = array<i64: 32, 64>}, {pipeline_mode = #tpu.pipeline_mode<synchronous>, transform_indices = @transform_6, window_bounds = array<i64: 32, 32>}, {pipeline_mode = #tpu.pipeline_mode<synchronous>, transform_indices = @transform_7, window_bounds = array<i64: 32, 32>}, {pipeline_mode = #tpu.pipeline_mode<synchronous>, transform_indices = @transform_8, window_bounds = array<i64: 32, 32>}, {pipeline_mode = #tpu.pipeline_mode<synchronous>, transform_indices = @transform_9, window_bounds = array<i64: 32, 32>}, {pipeline_mode = #tpu.pipeline_mode<synchronous>, transform_indices = @transform_10, window_bounds = array<i64: 32, 192>}, {pipeline_mode = #tpu.pipeline_mode<synchronous>, transform_indices = @transform_11, window_bounds = array<i64: 32, 32>}, {pipeline_mode = #tpu.pipeline_mode<synchronous>, transform_indices = @transform_12, window_bounds = array<i64: 32, 32>}, {pipeline_mode = #tpu.pipeline_mode<synchronous>, transform_indices = @transform_13, window_bounds = array<i64: 64, 32>}, {pipeline_mode = #tpu.pipeline_mode<synchronous>, transform_indices = @transform_14, window_bounds = array<i64: 2, 96>}, {pipeline_mode = #tpu.pipeline_mode<synchronous>, transform_indices = @transform_15, window_bounds = array<i64: 1, 192>}, {pipeline_mode = #tpu.pipeline_mode<synchronous>, transform_indices = @transform_16, window_bounds = array<i64: 9, 32>}, {transform_indices = @transform_17, window_bounds = array<i64: 1, 8, 32>}, {transform_indices = @transform_18, window_bounds = array<i64: 1, 8, 16>}]} {
    %c0 = arith.constant 0 : index
    %c0_0 = arith.constant 0 : index
    %c0_1 = arith.constant 0 : index
    %0 = vector.load %arg1[%c0, %c0_0, %c0_1] : memref<1x8x32xbf16, #tpu.memory_space<vmem>>, vector<1x8x32xbf16>
    %1 = vector.shape_cast %0 : vector<1x8x32xbf16> to vector<8x32xbf16>
    %c0_2 = arith.constant 0 : index
    %c0_3 = arith.constant 0 : index
    %c0_4 = arith.constant 0 : index
    %2 = vector.load %arg3[%c0_2, %c0_3, %c0_4] : memref<1x16x32xbf16, #tpu.memory_space<vmem>>, vector<1x16x32xbf16>
    %3 = vector.shape_cast %2 : vector<1x16x32xbf16> to vector<16x32xbf16>
    %4 = arith.extf %1 : vector<8x32xbf16> to vector<8x32xf32>
    %c0_5 = arith.constant 0 : index
    %c0_6 = arith.constant 0 : index
    %5 = vector.load %arg17[%c0_5, %c0_6] : memref<9x32xf32, #tpu.memory_space<vmem>>, vector<9x32xf32>
    %c0_7 = arith.constant 0 : index
    %c0_8 = arith.constant 0 : index
    %6 = vector.load %arg15[%c0_7, %c0_8] : memref<2x96xf32, #tpu.memory_space<vmem>>, vector<2x96xf32>
    %c0_9 = arith.constant 0 : index
    %c0_10 = arith.constant 0 : index
    %c0_11 = arith.constant 0 : index
    %7 = vector.load %arg1[%c0_9, %c0_10, %c0_11] : memref<1x8x32xbf16, #tpu.memory_space<vmem>>, vector<1x8x32xbf16>
    %c0_12 = arith.constant 0 : index
    %c0_13 = arith.constant 0 : index
    %c0_14 = arith.constant 0 : index
    %8 = vector.load %arg2[%c0_12, %c0_13, %c0_14] : memref<1x8x32xbf16, #tpu.memory_space<vmem>>, vector<1x8x32xbf16>
    %9 = arith.addf %7, %8 : vector<1x8x32xbf16>
    %10 = vector.shape_cast %9 : vector<1x8x32xbf16> to vector<8x32xbf16>
    %c0_15 = arith.constant 0 : index
    %c0_16 = arith.constant 0 : index
    %11 = vector.load %arg6[%c0_15, %c0_16] : memref<32x64xbf16, #tpu.memory_space<vmem>>, vector<32x64xbf16>
    %cst = arith.constant dense<0.000000e+00> : vector<8x64xf32>
    %12 = tpu.matmul %10, %11, %cst {dimension_numbers = #tpu.dot_dimension_numbers<[1], [0], [0], [1], [0, 0, 1, 1], [], []>} : vector<8x32xbf16>, vector<32x64xbf16>, vector<8x64xf32> -> vector<8x64xf32>
    %13 = vector.extract_strided_slice %6 {offsets = [0, 0], sizes = [1, 64], strides = [1, 1]} : vector<2x96xf32> to vector<1x64xf32>
    %14 = vector.broadcast %13 : vector<1x64xf32> to vector<8x64xf32>
    %15 = arith.addf %12, %14 : vector<8x64xf32>
    %c0_17 = arith.constant 0 : index
    %c0_18 = arith.constant 0 : index
    %16 = vector.load %arg7[%c0_17, %c0_18] : memref<32x32xbf16, #tpu.memory_space<vmem>>, vector<32x32xbf16>
    %cst_19 = arith.constant dense<0.000000e+00> : vector<8x32xf32>
    %17 = tpu.matmul %1, %16, %cst_19 {dimension_numbers = #tpu.dot_dimension_numbers<[1], [0], [0], [1], [0, 0, 1, 1], [], []>} : vector<8x32xbf16>, vector<32x32xbf16>, vector<8x32xf32> -> vector<8x32xf32>
    %18 = vector.extract_strided_slice %6 {offsets = [0, 64], sizes = [1, 32], strides = [1, 1]} : vector<2x96xf32> to vector<1x32xf32>
    %19 = vector.broadcast %18 : vector<1x32xf32> to vector<8x32xf32>
    %20 = arith.addf %17, %19 : vector<8x32xf32>
    %21 = vector.extract_strided_slice %15 {offsets = [0, 0], sizes = [8, 32], strides = [1, 1]} : vector<8x64xf32> to vector<8x32xf32>
    %22 = vector.extract_strided_slice %15 {offsets = [0, 32], sizes = [8, 32], strides = [1, 1]} : vector<8x64xf32> to vector<8x32xf32>
    %23 = vector.extract_strided_slice %5 {offsets = [0, 0], sizes = [1, 32], strides = [1, 1]} : vector<9x32xf32> to vector<1x32xf32>
    %24 = arith.truncf %21 : vector<8x32xf32> to vector<8x32xbf16>
    %25 = arith.truncf %22 : vector<8x32xf32> to vector<8x32xbf16>
    %26 = arith.truncf %20 : vector<8x32xf32> to vector<8x32xbf16>
    %27 = vector.extract_strided_slice %24 {offsets = [0, 0], sizes = [8, 8], strides = [1, 1]} : vector<8x32xbf16> to vector<8x8xbf16>
    %28 = vector.shape_cast %27 : vector<8x8xbf16> to vector<1x8x8xbf16>
    %29 = vector.extract_strided_slice %24 {offsets = [0, 8], sizes = [8, 8], strides = [1, 1]} : vector<8x32xbf16> to vector<8x8xbf16>
    %30 = vector.shape_cast %29 : vector<8x8xbf16> to vector<1x8x8xbf16>
    %31 = vector.extract_strided_slice %24 {offsets = [0, 16], sizes = [8, 8], strides = [1, 1]} : vector<8x32xbf16> to vector<8x8xbf16>
    %32 = vector.shape_cast %31 : vector<8x8xbf16> to vector<1x8x8xbf16>
    %33 = vector.extract_strided_slice %24 {offsets = [0, 24], sizes = [8, 8], strides = [1, 1]} : vector<8x32xbf16> to vector<8x8xbf16>
    %34 = vector.shape_cast %33 : vector<8x8xbf16> to vector<1x8x8xbf16>
    %35 = tpu.concatenate %28, %30, %32, %34 in 0 : vector<1x8x8xbf16>, vector<1x8x8xbf16>, vector<1x8x8xbf16>, vector<1x8x8xbf16> -> vector<4x8x8xbf16>
    %36 = vector.extract_strided_slice %25 {offsets = [0, 0], sizes = [8, 8], strides = [1, 1]} : vector<8x32xbf16> to vector<8x8xbf16>
    %37 = vector.shape_cast %36 : vector<8x8xbf16> to vector<1x8x8xbf16>
    %38 = vector.extract_strided_slice %25 {offsets = [0, 8], sizes = [8, 8], strides = [1, 1]} : vector<8x32xbf16> to vector<8x8xbf16>
    %39 = vector.shape_cast %38 : vector<8x8xbf16> to vector<1x8x8xbf16>
    %40 = vector.extract_strided_slice %25 {offsets = [0, 16], sizes = [8, 8], strides = [1, 1]} : vector<8x32xbf16> to vector<8x8xbf16>
    %41 = vector.shape_cast %40 : vector<8x8xbf16> to vector<1x8x8xbf16>
    %42 = vector.extract_strided_slice %25 {offsets = [0, 24], sizes = [8, 8], strides = [1, 1]} : vector<8x32xbf16> to vector<8x8xbf16>
    %43 = vector.shape_cast %42 : vector<8x8xbf16> to vector<1x8x8xbf16>
    %44 = tpu.concatenate %37, %39, %41, %43 in 0 : vector<1x8x8xbf16>, vector<1x8x8xbf16>, vector<1x8x8xbf16>, vector<1x8x8xbf16> -> vector<4x8x8xbf16>
    %45 = vector.extract_strided_slice %26 {offsets = [0, 0], sizes = [8, 8], strides = [1, 1]} : vector<8x32xbf16> to vector<8x8xbf16>
    %46 = vector.shape_cast %45 : vector<8x8xbf16> to vector<1x8x8xbf16>
    %47 = vector.extract_strided_slice %26 {offsets = [0, 8], sizes = [8, 8], strides = [1, 1]} : vector<8x32xbf16> to vector<8x8xbf16>
    %48 = vector.shape_cast %47 : vector<8x8xbf16> to vector<1x8x8xbf16>
    %49 = vector.extract_strided_slice %26 {offsets = [0, 16], sizes = [8, 8], strides = [1, 1]} : vector<8x32xbf16> to vector<8x8xbf16>
    %50 = vector.shape_cast %49 : vector<8x8xbf16> to vector<1x8x8xbf16>
    %51 = vector.extract_strided_slice %26 {offsets = [0, 24], sizes = [8, 8], strides = [1, 1]} : vector<8x32xbf16> to vector<8x8xbf16>
    %52 = vector.shape_cast %51 : vector<8x8xbf16> to vector<1x8x8xbf16>
    %53 = tpu.concatenate %46, %48, %50, %52 in 0 : vector<1x8x8xbf16>, vector<1x8x8xbf16>, vector<1x8x8xbf16>, vector<1x8x8xbf16> -> vector<4x8x8xbf16>
    "tpu.trace_start"() <{level = 10 : i32, message = "bld,bsd->bls"}> : () -> ()
    %cst_20 = arith.constant dense<0.000000e+00> : vector<4x8x8xf32>
    %54 = tpu.matmul %35, %44, %cst_20 {dimension_numbers = #tpu.dot_dimension_numbers<[2], [2], [1], [1], [0, 0, 0, 1, 1, 1], [0], [0]>} : vector<4x8x8xbf16>, vector<4x8x8xbf16>, vector<4x8x8xf32> -> vector<4x8x8xf32>
    "tpu.trace_stop"() : () -> ()
    %cst_21 = arith.constant dense<0xFF800000> : vector<4x8xf32>
    %55 = vector.multi_reduction <maximumf>, %54, %cst_21 [2] : vector<4x8x8xf32> to vector<4x8xf32>
    %56 = vector.shape_cast %55 : vector<4x8xf32> to vector<4x8x1xf32>
    %57 = vector.broadcast %56 : vector<4x8x1xf32> to vector<4x8x8xf32>
    %58 = arith.subf %54, %57 : vector<4x8x8xf32>
    %59 = math.exp %58 : vector<4x8x8xf32>
    %cst_22 = arith.constant dense<0.000000e+00> : vector<4x8xf32>
    %60 = vector.multi_reduction <add>, %59, %cst_22 [2] : vector<4x8x8xf32> to vector<4x8xf32>
    %61 = vector.shape_cast %60 : vector<4x8xf32> to vector<4x8x1xf32>
    %62 = tpu.reciprocal %61 {approx = true} : vector<4x8x1xf32> -> vector<4x8x1xf32>
    %63 = vector.broadcast %62 : vector<4x8x1xf32> to vector<4x8x8xf32>
    %64 = arith.mulf %59, %63 : vector<4x8x8xf32>
    %65 = arith.truncf %64 : vector<4x8x8xf32> to vector<4x8x8xbf16>
    "tpu.trace_start"() <{level = 10 : i32, message = "bls,bsd->bld"}> : () -> ()
    %cst_23 = arith.constant dense<0.000000e+00> : vector<4x8x8xf32>
    %66 = tpu.matmul %65, %53, %cst_23 {dimension_numbers = #tpu.dot_dimension_numbers<[2], [1], [1], [2], [0, 0, 0, 1, 1, 2], [0], [0]>} : vector<4x8x8xbf16>, vector<4x8x8xbf16>, vector<4x8x8xf32> -> vector<4x8x8xf32>
    "tpu.trace_stop"() : () -> ()
    %67 = vector.extract_strided_slice %66 {offsets = [0, 0, 0], sizes = [1, 8, 8], strides = [1, 1, 1]} : vector<4x8x8xf32> to vector<1x8x8xf32>
    %68 = vector.shape_cast %67 : vector<1x8x8xf32> to vector<8x8xf32>
    %69 = arith.truncf %68 : vector<8x8xf32> to vector<8x8xbf16>
    %c0_24 = arith.constant 0 : index
    %c0_25 = arith.constant 0 : index
    %70 = vector.load %arg20[%c0_24, %c0_25] : memref<8x32xbf16, #tpu.memory_space<vmem>>, vector<8x8xbf16>
    tpu.vector_store %arg20[%c0_24, %c0_25], %69 {strides = array<i32>} : memref<8x32xbf16, #tpu.memory_space<vmem>>, vector<8x8xbf16>,
    %71 = vector.extract_strided_slice %66 {offsets = [1, 0, 0], sizes = [1, 8, 8], strides = [1, 1, 1]} : vector<4x8x8xf32> to vector<1x8x8xf32>
    %72 = vector.shape_cast %71 : vector<1x8x8xf32> to vector<8x8xf32>
    %73 = arith.truncf %72 : vector<8x8xf32> to vector<8x8xbf16>
    %c0_26 = arith.constant 0 : index
    %c8 = arith.constant 8 : index
    %74 = vector.load %arg20[%c0_26, %c8] : memref<8x32xbf16, #tpu.memory_space<vmem>>, vector<8x8xbf16>
    tpu.vector_store %arg20[%c0_26, %c8], %73 {strides = array<i32>} : memref<8x32xbf16, #tpu.memory_space<vmem>>, vector<8x8xbf16>,
    %75 = vector.extract_strided_slice %66 {offsets = [2, 0, 0], sizes = [1, 8, 8], strides = [1, 1, 1]} : vector<4x8x8xf32> to vector<1x8x8xf32>
    %76 = vector.shape_cast %75 : vector<1x8x8xf32> to vector<8x8xf32>
    %77 = arith.truncf %76 : vector<8x8xf32> to vector<8x8xbf16>
    %c0_27 = arith.constant 0 : index
    %c16 = arith.constant 16 : index
    %78 = vector.load %arg20[%c0_27, %c16] : memref<8x32xbf16, #tpu.memory_space<vmem>>, vector<8x8xbf16>
    tpu.vector_store %arg20[%c0_27, %c16], %77 {strides = array<i32>} : memref<8x32xbf16, #tpu.memory_space<vmem>>, vector<8x8xbf16>,
    %79 = vector.extract_strided_slice %66 {offsets = [3, 0, 0], sizes = [1, 8, 8], strides = [1, 1, 1]} : vector<4x8x8xf32> to vector<1x8x8xf32>
    %80 = vector.shape_cast %79 : vector<1x8x8xf32> to vector<8x8xf32>
    %81 = arith.truncf %80 : vector<8x8xf32> to vector<8x8xbf16>
    %c0_28 = arith.constant 0 : index
    %c24 = arith.constant 24 : index
    %82 = vector.load %arg20[%c0_28, %c24] : memref<8x32xbf16, #tpu.memory_space<vmem>>, vector<8x8xbf16>
    tpu.vector_store %arg20[%c0_28, %c24], %81 {strides = array<i32>} : memref<8x32xbf16, #tpu.memory_space<vmem>>, vector<8x8xbf16>,
    %c0_29 = arith.constant 0 : index
    %c0_30 = arith.constant 0 : index
    %83 = vector.load %arg20[%c0_29, %c0_30] : memref<8x32xbf16, #tpu.memory_space<vmem>>, vector<8x32xbf16>
    %c0_31 = arith.constant 0 : index
    %c0_32 = arith.constant 0 : index
    %84 = vector.load %arg12[%c0_31, %c0_32] : memref<32x32xbf16, #tpu.memory_space<vmem>>, vector<32x32xbf16>
    %cst_33 = arith.constant dense<0.000000e+00> : vector<8x32xf32>
    %85 = tpu.matmul %83, %84, %cst_33 {dimension_numbers = #tpu.dot_dimension_numbers<[1], [0], [0], [1], [0, 0, 1, 1], [], []>} : vector<8x32xbf16>, vector<32x32xbf16>, vector<8x32xf32> -> vector<8x32xf32>
    %86 = vector.broadcast %23 : vector<1x32xf32> to vector<8x32xf32>
    %87 = arith.addf %85, %86 : vector<8x32xf32>
    %88 = arith.addf %4, %87 : vector<8x32xf32>
    %cst_34 = arith.constant dense<0.000000e+00> : vector<8xf32>
    %89 = vector.multi_reduction <add>, %88, %cst_34 [1] : vector<8x32xf32> to vector<8xf32>
    %90 = vector.shape_cast %89 : vector<8xf32> to vector<8x1xf32>
    %cst_35 = arith.constant 3.200000e+01 : f32
    %91 = vector.broadcast %cst_35 : f32 to vector<8x1xf32>
    %92 = arith.divf %90, %91 : vector<8x1xf32>
    %93 = vector.broadcast %92 : vector<8x1xf32> to vector<8x32xf32>
    %94 = arith.subf %88, %93 : vector<8x32xf32>
    %95 = arith.mulf %94, %94 : vector<8x32xf32>
    %cst_36 = arith.constant dense<0.000000e+00> : vector<8xf32>
    %96 = vector.multi_reduction <add>, %95, %cst_36 [1] : vector<8x32xf32> to vector<8xf32>
    %97 = vector.shape_cast %96 : vector<8xf32> to vector<8x1xf32>
    %cst_37 = arith.constant 3.200000e+01 : f32
    %98 = vector.broadcast %cst_37 : f32 to vector<8x1xf32>
    %99 = arith.divf %97, %98 : vector<8x1xf32>
    %cst_38 = arith.constant 9.99999974E-6 : f32
    %100 = vector.broadcast %cst_38 : f32 to vector<8x1xf32>
    %101 = arith.addf %99, %100 : vector<8x1xf32>
    %102 = math.rsqrt %101 : vector<8x1xf32>
    %103 = vector.broadcast %102 : vector<8x1xf32> to vector<8x32xf32>
    %104 = arith.mulf %94, %103 : vector<8x32xf32>
    %105 = vector.extract_strided_slice %5 {offsets = [3, 0], sizes = [1, 32], strides = [1, 1]} : vector<9x32xf32> to vector<1x32xf32>
    %106 = vector.broadcast %105 : vector<1x32xf32> to vector<8x32xf32>
    %107 = arith.mulf %104, %106 : vector<8x32xf32>
    %108 = vector.extract_strided_slice %5 {offsets = [4, 0], sizes = [1, 32], strides = [1, 1]} : vector<9x32xf32> to vector<1x32xf32>
    %109 = vector.broadcast %108 : vector<1x32xf32> to vector<8x32xf32>
    %110 = arith.addf %107, %109 : vector<8x32xf32>
    %c0_39 = arith.constant 0 : index
    %c0_40 = arith.constant 0 : index
    %c0_41 = arith.constant 0 : index
    %111 = vector.load %arg3[%c0_39, %c0_40, %c0_41] : memref<1x16x32xbf16, #tpu.memory_space<vmem>>, vector<1x16x32xbf16>
    %c0_42 = arith.constant 0 : index
    %c0_43 = arith.constant 0 : index
    %c0_44 = arith.constant 0 : index
    %112 = vector.load %arg4[%c0_42, %c0_43, %c0_44] : memref<1x16x32xbf16, #tpu.memory_space<vmem>>, vector<1x16x32xbf16>
    %113 = arith.addf %111, %112 : vector<1x16x32xbf16>
    %114 = vector.shape_cast %113 : vector<1x16x32xbf16> to vector<16x32xbf16>
    %115 = arith.truncf %110 : vector<8x32xf32> to vector<8x32xbf16>
    %c0_45 = arith.constant 0 : index
    %c0_46 = arith.constant 0 : index
    %116 = vector.load %arg8[%c0_45, %c0_46] : memref<32x32xbf16, #tpu.memory_space<vmem>>, vector<32x32xbf16>
    %cst_47 = arith.constant dense<0.000000e+00> : vector<8x32xf32>
    %117 = tpu.matmul %115, %116, %cst_47 {dimension_numbers = #tpu.dot_dimension_numbers<[1], [0], [0], [1], [0, 0, 1, 1], [], []>} : vector<8x32xbf16>, vector<32x32xbf16>, vector<8x32xf32> -> vector<8x32xf32>
    %118 = vector.extract_strided_slice %6 {offsets = [1, 0], sizes = [1, 32], strides = [1, 1]} : vector<2x96xf32> to vector<1x32xf32>
    %119 = vector.broadcast %118 : vector<1x32xf32> to vector<8x32xf32>
    %120 = arith.addf %117, %119 : vector<8x32xf32>
    %c0_48 = arith.constant 0 : index
    %c0_49 = arith.constant 0 : index
    %121 = vector.load %arg9[%c0_48, %c0_49] : memref<32x32xbf16, #tpu.memory_space<vmem>>, vector<32x32xbf16>
    %cst_50 = arith.constant dense<0.000000e+00> : vector<16x32xf32>
    %122 = tpu.matmul %114, %121, %cst_50 {dimension_numbers = #tpu.dot_dimension_numbers<[1], [0], [0], [1], [0, 0, 1, 1], [], []>} : vector<16x32xbf16>, vector<32x32xbf16>, vector<16x32xf32> -> vector<16x32xf32>
    %123 = vector.extract_strided_slice %6 {offsets = [1, 32], sizes = [1, 32], strides = [1, 1]} : vector<2x96xf32> to vector<1x32xf32>
    %124 = vector.broadcast %123 : vector<1x32xf32> to vector<16x32xf32>
    %125 = arith.addf %122, %124 : vector<16x32xf32>
    %c0_51 = arith.constant 0 : index
    %c0_52 = arith.constant 0 : index
    %126 = vector.load %arg10[%c0_51, %c0_52] : memref<32x32xbf16, #tpu.memory_space<vmem>>, vector<32x32xbf16>
    %cst_53 = arith.constant dense<0.000000e+00> : vector<16x32xf32>
    %127 = tpu.matmul %3, %126, %cst_53 {dimension_numbers = #tpu.dot_dimension_numbers<[1], [0], [0], [1], [0, 0, 1, 1], [], []>} : vector<16x32xbf16>, vector<32x32xbf16>, vector<16x32xf32> -> vector<16x32xf32>
    %128 = vector.extract_strided_slice %6 {offsets = [1, 64], sizes = [1, 32], strides = [1, 1]} : vector<2x96xf32> to vector<1x32xf32>
    %129 = vector.broadcast %128 : vector<1x32xf32> to vector<16x32xf32>
    %130 = arith.addf %127, %129 : vector<16x32xf32>
    %131 = vector.extract_strided_slice %5 {offsets = [1, 0], sizes = [1, 32], strides = [1, 1]} : vector<9x32xf32> to vector<1x32xf32>
    %132 = arith.truncf %120 : vector<8x32xf32> to vector<8x32xbf16>
    %133 = arith.truncf %125 : vector<16x32xf32> to vector<16x32xbf16>
    %134 = arith.truncf %130 : vector<16x32xf32> to vector<16x32xbf16>
    %135 = vector.extract_strided_slice %132 {offsets = [0, 0], sizes = [8, 8], strides = [1, 1]} : vector<8x32xbf16> to vector<8x8xbf16>
    %136 = vector.shape_cast %135 : vector<8x8xbf16> to vector<1x8x8xbf16>
    %137 = vector.extract_strided_slice %132 {offsets = [0, 8], sizes = [8, 8], strides = [1, 1]} : vector<8x32xbf16> to vector<8x8xbf16>
    %138 = vector.shape_cast %137 : vector<8x8xbf16> to vector<1x8x8xbf16>
    %139 = vector.extract_strided_slice %132 {offsets = [0, 16], sizes = [8, 8], strides = [1, 1]} : vector<8x32xbf16> to vector<8x8xbf16>
    %140 = vector.shape_cast %139 : vector<8x8xbf16> to vector<1x8x8xbf16>
    %141 = vector.extract_strided_slice %132 {offsets = [0, 24], sizes = [8, 8], strides = [1, 1]} : vector<8x32xbf16> to vector<8x8xbf16>
    %142 = vector.shape_cast %141 : vector<8x8xbf16> to vector<1x8x8xbf16>
    %143 = tpu.concatenate %136, %138, %140, %142 in 0 : vector<1x8x8xbf16>, vector<1x8x8xbf16>, vector<1x8x8xbf16>, vector<1x8x8xbf16> -> vector<4x8x8xbf16>
    %144 = vector.extract_strided_slice %133 {offsets = [0, 0], sizes = [16, 8], strides = [1, 1]} : vector<16x32xbf16> to vector<16x8xbf16>
    %145 = vector.shape_cast %144 : vector<16x8xbf16> to vector<1x16x8xbf16>
    %146 = vector.extract_strided_slice %133 {offsets = [0, 8], sizes = [16, 8], strides = [1, 1]} : vector<16x32xbf16> to vector<16x8xbf16>
    %147 = vector.shape_cast %146 : vector<16x8xbf16> to vector<1x16x8xbf16>
    %148 = vector.extract_strided_slice %133 {offsets = [0, 16], sizes = [16, 8], strides = [1, 1]} : vector<16x32xbf16> to vector<16x8xbf16>
    %149 = vector.shape_cast %148 : vector<16x8xbf16> to vector<1x16x8xbf16>
    %150 = vector.extract_strided_slice %133 {offsets = [0, 24], sizes = [16, 8], strides = [1, 1]} : vector<16x32xbf16> to vector<16x8xbf16>
    %151 = vector.shape_cast %150 : vector<16x8xbf16> to vector<1x16x8xbf16>
    %152 = tpu.concatenate %145, %147, %149, %151 in 0 : vector<1x16x8xbf16>, vector<1x16x8xbf16>, vector<1x16x8xbf16>, vector<1x16x8xbf16> -> vector<4x16x8xbf16>
    %153 = vector.extract_strided_slice %134 {offsets = [0, 0], sizes = [16, 8], strides = [1, 1]} : vector<16x32xbf16> to vector<16x8xbf16>
    %154 = vector.shape_cast %153 : vector<16x8xbf16> to vector<1x16x8xbf16>
    %155 = vector.extract_strided_slice %134 {offsets = [0, 8], sizes = [16, 8], strides = [1, 1]} : vector<16x32xbf16> to vector<16x8xbf16>
    %156 = vector.shape_cast %155 : vector<16x8xbf16> to vector<1x16x8xbf16>
    %157 = vector.extract_strided_slice %134 {offsets = [0, 16], sizes = [16, 8], strides = [1, 1]} : vector<16x32xbf16> to vector<16x8xbf16>
    %158 = vector.shape_cast %157 : vector<16x8xbf16> to vector<1x16x8xbf16>
    %159 = vector.extract_strided_slice %134 {offsets = [0, 24], sizes = [16, 8], strides = [1, 1]} : vector<16x32xbf16> to vector<16x8xbf16>
    %160 = vector.shape_cast %159 : vector<16x8xbf16> to vector<1x16x8xbf16>
    %161 = tpu.concatenate %154, %156, %158, %160 in 0 : vector<1x16x8xbf16>, vector<1x16x8xbf16>, vector<1x16x8xbf16>, vector<1x16x8xbf16> -> vector<4x16x8xbf16>
    "tpu.trace_start"() <{level = 10 : i32, message = "bld,bsd->bls"}> : () -> ()
    %cst_54 = arith.constant dense<0.000000e+00> : vector<4x8x16xf32>
    %162 = tpu.matmul %143, %152, %cst_54 {dimension_numbers = #tpu.dot_dimension_numbers<[2], [2], [1], [1], [0, 0, 0, 1, 1, 1], [0], [0]>} : vector<4x8x8xbf16>, vector<4x16x8xbf16>, vector<4x8x16xf32> -> vector<4x8x16xf32>
    "tpu.trace_stop"() : () -> ()
    %cst_55 = arith.constant dense<0xFF800000> : vector<4x8xf32>
    %163 = vector.multi_reduction <maximumf>, %162, %cst_55 [2] : vector<4x8x16xf32> to vector<4x8xf32>
    %164 = vector.shape_cast %163 : vector<4x8xf32> to vector<4x8x1xf32>
    %165 = vector.broadcast %164 : vector<4x8x1xf32> to vector<4x8x16xf32>
    %166 = arith.subf %162, %165 : vector<4x8x16xf32>
    %167 = math.exp %166 : vector<4x8x16xf32>
    %cst_56 = arith.constant dense<0.000000e+00> : vector<4x8xf32>
    %168 = vector.multi_reduction <add>, %167, %cst_56 [2] : vector<4x8x16xf32> to vector<4x8xf32>
    %169 = vector.shape_cast %168 : vector<4x8xf32> to vector<4x8x1xf32>
    %170 = tpu.reciprocal %169 {approx = true} : vector<4x8x1xf32> -> vector<4x8x1xf32>
    %171 = vector.broadcast %170 : vector<4x8x1xf32> to vector<4x8x16xf32>
    %172 = arith.mulf %167, %171 : vector<4x8x16xf32>
    %173 = arith.truncf %172 : vector<4x8x16xf32> to vector<4x8x16xbf16>
    "tpu.trace_start"() <{level = 10 : i32, message = "bls,bsd->bld"}> : () -> ()
    %cst_57 = arith.constant dense<0.000000e+00> : vector<4x8x8xf32>
    %174 = tpu.matmul %173, %161, %cst_57 {dimension_numbers = #tpu.dot_dimension_numbers<[2], [1], [1], [2], [0, 0, 0, 1, 1, 2], [0], [0]>} : vector<4x8x16xbf16>, vector<4x16x8xbf16>, vector<4x8x8xf32> -> vector<4x8x8xf32>
    "tpu.trace_stop"() : () -> ()
    %175 = vector.extract_strided_slice %174 {offsets = [0, 0, 0], sizes = [1, 8, 8], strides = [1, 1, 1]} : vector<4x8x8xf32> to vector<1x8x8xf32>
    %176 = vector.shape_cast %175 : vector<1x8x8xf32> to vector<8x8xf32>
    %177 = arith.truncf %176 : vector<8x8xf32> to vector<8x8xbf16>
    %c0_58 = arith.constant 0 : index
    %c0_59 = arith.constant 0 : index
    %178 = vector.load %arg20[%c0_58, %c0_59] : memref<8x32xbf16, #tpu.memory_space<vmem>>, vector<8x8xbf16>
    tpu.vector_store %arg20[%c0_58, %c0_59], %177 {strides = array<i32>} : memref<8x32xbf16, #tpu.memory_space<vmem>>, vector<8x8xbf16>,
    %179 = vector.extract_strided_slice %174 {offsets = [1, 0, 0], sizes = [1, 8, 8], strides = [1, 1, 1]} : vector<4x8x8xf32> to vector<1x8x8xf32>
    %180 = vector.shape_cast %179 : vector<1x8x8xf32> to vector<8x8xf32>
    %181 = arith.truncf %180 : vector<8x8xf32> to vector<8x8xbf16>
    %c0_60 = arith.constant 0 : index
    %c8_61 = arith.constant 8 : index
    %182 = vector.load %arg20[%c0_60, %c8_61] : memref<8x32xbf16, #tpu.memory_space<vmem>>, vector<8x8xbf16>
    tpu.vector_store %arg20[%c0_60, %c8_61], %181 {strides = array<i32>} : memref<8x32xbf16, #tpu.memory_space<vmem>>, vector<8x8xbf16>,
    %183 = vector.extract_strided_slice %174 {offsets = [2, 0, 0], sizes = [1, 8, 8], strides = [1, 1, 1]} : vector<4x8x8xf32> to vector<1x8x8xf32>
    %184 = vector.shape_cast %183 : vector<1x8x8xf32> to vector<8x8xf32>
    %185 = arith.truncf %184 : vector<8x8xf32> to vector<8x8xbf16>
    %c0_62 = arith.constant 0 : index
    %c16_63 = arith.constant 16 : index
    %186 = vector.load %arg20[%c0_62, %c16_63] : memref<8x32xbf16, #tpu.memory_space<vmem>>, vector<8x8xbf16>
    tpu.vector_store %arg20[%c0_62, %c16_63], %185 {strides = array<i32>} : memref<8x32xbf16, #tpu.memory_space<vmem>>, vector<8x8xbf16>,
    %187 = vector.extract_strided_slice %174 {offsets = [3, 0, 0], sizes = [1, 8, 8], strides = [1, 1, 1]} : vector<4x8x8xf32> to vector<1x8x8xf32>
    %188 = vector.shape_cast %187 : vector<1x8x8xf32> to vector<8x8xf32>
    %189 = arith.truncf %188 : vector<8x8xf32> to vector<8x8xbf16>
    %c0_64 = arith.constant 0 : index
    %c24_65 = arith.constant 24 : index
    %190 = vector.load %arg20[%c0_64, %c24_65] : memref<8x32xbf16, #tpu.memory_space<vmem>>, vector<8x8xbf16>
    tpu.vector_store %arg20[%c0_64, %c24_65], %189 {strides = array<i32>} : memref<8x32xbf16, #tpu.memory_space<vmem>>, vector<8x8xbf16>,
    %c0_66 = arith.constant 0 : index
    %c0_67 = arith.constant 0 : index
    %191 = vector.load %arg20[%c0_66, %c0_67] : memref<8x32xbf16, #tpu.memory_space<vmem>>, vector<8x32xbf16>
    %c0_68 = arith.constant 0 : index
    %c0_69 = arith.constant 0 : index
    %192 = vector.load %arg13[%c0_68, %c0_69] : memref<32x32xbf16, #tpu.memory_space<vmem>>, vector<32x32xbf16>
    %cst_70 = arith.constant dense<0.000000e+00> : vector<8x32xf32>
    %193 = tpu.matmul %191, %192, %cst_70 {dimension_numbers = #tpu.dot_dimension_numbers<[1], [0], [0], [1], [0, 0, 1, 1], [], []>} : vector<8x32xbf16>, vector<32x32xbf16>, vector<8x32xf32> -> vector<8x32xf32>
    %194 = vector.broadcast %131 : vector<1x32xf32> to vector<8x32xf32>
    %195 = arith.addf %193, %194 : vector<8x32xf32>
    %196 = vector.shape_cast %172 : vector<4x8x16xf32> to vector<4x1x8x16xf32>
    %197 = vector.extract_strided_slice %196 {offsets = [0, 0, 0, 0], sizes = [1, 1, 8, 16], strides = [1, 1, 1, 1]} : vector<4x1x8x16xf32> to vector<1x1x8x16xf32>
    %198 = vector.shape_cast %197 : vector<1x1x8x16xf32> to vector<1x8x16xf32>
    %199 = vector.extract_strided_slice %196 {offsets = [1, 0, 0, 0], sizes = [1, 1, 8, 16], strides = [1, 1, 1, 1]} : vector<4x1x8x16xf32> to vector<1x1x8x16xf32>
    %200 = vector.shape_cast %199 : vector<1x1x8x16xf32> to vector<1x8x16xf32>
    %201 = arith.addf %198, %200 : vector<1x8x16xf32>
    %202 = vector.extract_strided_slice %196 {offsets = [2, 0, 0, 0], sizes = [1, 1, 8, 16], strides = [1, 1, 1, 1]} : vector<4x1x8x16xf32> to vector<1x1x8x16xf32>
    %203 = vector.shape_cast %202 : vector<1x1x8x16xf32> to vector<1x8x16xf32>
    %204 = arith.addf %201, %203 : vector<1x8x16xf32>
    %205 = vector.extract_strided_slice %196 {offsets = [3, 0, 0, 0], sizes = [1, 1, 8, 16], strides = [1, 1, 1, 1]} : vector<4x1x8x16xf32> to vector<1x1x8x16xf32>
    %206 = vector.shape_cast %205 : vector<1x1x8x16xf32> to vector<1x8x16xf32>
    %207 = arith.addf %204, %206 : vector<1x8x16xf32>
    %cst_71 = arith.constant 2.500000e-01 : f32
    %208 = vector.broadcast %cst_71 : f32 to vector<1x8x16xf32>
    %209 = arith.mulf %207, %208 : vector<1x8x16xf32>
    %210 = arith.addf %110, %195 : vector<8x32xf32>
    %cst_72 = arith.constant dense<0.000000e+00> : vector<8xf32>
    %211 = vector.multi_reduction <add>, %210, %cst_72 [1] : vector<8x32xf32> to vector<8xf32>
    %212 = vector.shape_cast %211 : vector<8xf32> to vector<8x1xf32>
    %cst_73 = arith.constant 3.200000e+01 : f32
    %213 = vector.broadcast %cst_73 : f32 to vector<8x1xf32>
    %214 = arith.divf %212, %213 : vector<8x1xf32>
    %215 = vector.broadcast %214 : vector<8x1xf32> to vector<8x32xf32>
    %216 = arith.subf %210, %215 : vector<8x32xf32>
    %217 = arith.mulf %216, %216 : vector<8x32xf32>
    %cst_74 = arith.constant dense<0.000000e+00> : vector<8xf32>
    %218 = vector.multi_reduction <add>, %217, %cst_74 [1] : vector<8x32xf32> to vector<8xf32>
    %219 = vector.shape_cast %218 : vector<8xf32> to vector<8x1xf32>
    %cst_75 = arith.constant 3.200000e+01 : f32
    %220 = vector.broadcast %cst_75 : f32 to vector<8x1xf32>
    %221 = arith.divf %219, %220 : vector<8x1xf32>
    %cst_76 = arith.constant 9.99999974E-6 : f32
    %222 = vector.broadcast %cst_76 : f32 to vector<8x1xf32>
    %223 = arith.addf %221, %222 : vector<8x1xf32>
    %224 = math.rsqrt %223 : vector<8x1xf32>
    %225 = vector.broadcast %224 : vector<8x1xf32> to vector<8x32xf32>
    %226 = arith.mulf %216, %225 : vector<8x32xf32>
    %227 = vector.extract_strided_slice %5 {offsets = [5, 0], sizes = [1, 32], strides = [1, 1]} : vector<9x32xf32> to vector<1x32xf32>
    %228 = vector.broadcast %227 : vector<1x32xf32> to vector<8x32xf32>
    %229 = arith.mulf %226, %228 : vector<8x32xf32>
    %230 = vector.extract_strided_slice %5 {offsets = [6, 0], sizes = [1, 32], strides = [1, 1]} : vector<9x32xf32> to vector<1x32xf32>
    %231 = vector.broadcast %230 : vector<1x32xf32> to vector<8x32xf32>
    %232 = arith.addf %229, %231 : vector<8x32xf32>
    %233 = arith.truncf %232 : vector<8x32xf32> to vector<8x32xbf16>
    %c0_77 = arith.constant 0 : index
    %c0_78 = arith.constant 0 : index
    %234 = vector.load %arg11[%c0_77, %c0_78] : memref<32x192xbf16, #tpu.memory_space<vmem>>, vector<32x192xbf16>
    %cst_79 = arith.constant dense<0.000000e+00> : vector<8x192xf32>
    %235 = tpu.matmul %233, %234, %cst_79 {dimension_numbers = #tpu.dot_dimension_numbers<[1], [0], [0], [1], [0, 0, 1, 1], [], []>} : vector<8x32xbf16>, vector<32x192xbf16>, vector<8x192xf32> -> vector<8x192xf32>
    %c0_80 = arith.constant 0 : index
    %c0_81 = arith.constant 0 : index
    %236 = vector.load %arg16[%c0_80, %c0_81] : memref<1x192xf32, #tpu.memory_space<vmem>>, vector<1x192xf32>
    %237 = vector.broadcast %236 : vector<1x192xf32> to vector<8x192xf32>
    %238 = arith.addf %235, %237 : vector<8x192xf32>
    %239 = vector.extract_strided_slice %238 {offsets = [0, 0], sizes = [8, 64], strides = [1, 1]} : vector<8x192xf32> to vector<8x64xf32>
    %240 = vector.extract_strided_slice %238 {offsets = [0, 64], sizes = [8, 64], strides = [1, 1]} : vector<8x192xf32> to vector<8x64xf32>
    %241 = vector.extract_strided_slice %238 {offsets = [0, 128], sizes = [8, 64], strides = [1, 1]} : vector<8x192xf32> to vector<8x64xf32>
    %242 = vector.extract_strided_slice %5 {offsets = [2, 0], sizes = [1, 32], strides = [1, 1]} : vector<9x32xf32> to vector<1x32xf32>
    %c0_82 = arith.constant 0 : index
    %c0_83 = arith.constant 0 : index
    %c0_84 = arith.constant 0 : index
    %243 = vector.load %arg5[%c0_82, %c0_83, %c0_84] : memref<1x8x8xbf16, #tpu.memory_space<vmem>>, vector<1x8x8xbf16>
    %244 = arith.extf %243 : vector<1x8x8xbf16> to vector<1x8x8xf32>
    %245 = arith.truncf %239 : vector<8x64xf32> to vector<8x64xbf16>
    %246 = arith.truncf %240 : vector<8x64xf32> to vector<8x64xbf16>
    %247 = arith.truncf %241 : vector<8x64xf32> to vector<8x64xbf16>
    %248 = vector.extract_strided_slice %245 {offsets = [0, 0], sizes = [8, 16], strides = [1, 1]} : vector<8x64xbf16> to vector<8x16xbf16>
    %249 = vector.shape_cast %248 : vector<8x16xbf16> to vector<1x8x16xbf16>
    %250 = vector.extract_strided_slice %245 {offsets = [0, 16], sizes = [8, 16], strides = [1, 1]} : vector<8x64xbf16> to vector<8x16xbf16>
    %251 = vector.shape_cast %250 : vector<8x16xbf16> to vector<1x8x16xbf16>
    %252 = vector.extract_strided_slice %245 {offsets = [0, 32], sizes = [8, 16], strides = [1, 1]} : vector<8x64xbf16> to vector<8x16xbf16>
    %253 = vector.shape_cast %252 : vector<8x16xbf16> to vector<1x8x16xbf16>
    %254 = vector.extract_strided_slice %245 {offsets = [0, 48], sizes = [8, 16], strides = [1, 1]} : vector<8x64xbf16> to vector<8x16xbf16>
    %255 = vector.shape_cast %254 : vector<8x16xbf16> to vector<1x8x16xbf16>
    %256 = tpu.concatenate %249, %251, %253, %255 in 0 : vector<1x8x16xbf16>, vector<1x8x16xbf16>, vector<1x8x16xbf16>, vector<1x8x16xbf16> -> vector<4x8x16xbf16>
    %257 = vector.extract_strided_slice %246 {offsets = [0, 0], sizes = [8, 16], strides = [1, 1]} : vector<8x64xbf16> to vector<8x16xbf16>
    %258 = vector.shape_cast %257 : vector<8x16xbf16> to vector<1x8x16xbf16>
    %259 = vector.extract_strided_slice %246 {offsets = [0, 16], sizes = [8, 16], strides = [1, 1]} : vector<8x64xbf16> to vector<8x16xbf16>
    %260 = vector.shape_cast %259 : vector<8x16xbf16> to vector<1x8x16xbf16>
    %261 = vector.extract_strided_slice %246 {offsets = [0, 32], sizes = [8, 16], strides = [1, 1]} : vector<8x64xbf16> to vector<8x16xbf16>
    %262 = vector.shape_cast %261 : vector<8x16xbf16> to vector<1x8x16xbf16>
    %263 = vector.extract_strided_slice %246 {offsets = [0, 48], sizes = [8, 16], strides = [1, 1]} : vector<8x64xbf16> to vector<8x16xbf16>
    %264 = vector.shape_cast %263 : vector<8x16xbf16> to vector<1x8x16xbf16>
    %265 = tpu.concatenate %258, %260, %262, %264 in 0 : vector<1x8x16xbf16>, vector<1x8x16xbf16>, vector<1x8x16xbf16>, vector<1x8x16xbf16> -> vector<4x8x16xbf16>
    %266 = vector.extract_strided_slice %247 {offsets = [0, 0], sizes = [8, 16], strides = [1, 1]} : vector<8x64xbf16> to vector<8x16xbf16>
    %267 = vector.shape_cast %266 : vector<8x16xbf16> to vector<1x8x16xbf16>
    %268 = vector.extract_strided_slice %247 {offsets = [0, 16], sizes = [8, 16], strides = [1, 1]} : vector<8x64xbf16> to vector<8x16xbf16>
    %269 = vector.shape_cast %268 : vector<8x16xbf16> to vector<1x8x16xbf16>
    %270 = vector.extract_strided_slice %247 {offsets = [0, 32], sizes = [8, 16], strides = [1, 1]} : vector<8x64xbf16> to vector<8x16xbf16>
    %271 = vector.shape_cast %270 : vector<8x16xbf16> to vector<1x8x16xbf16>
    %272 = vector.extract_strided_slice %247 {offsets = [0, 48], sizes = [8, 16], strides = [1, 1]} : vector<8x64xbf16> to vector<8x16xbf16>
    %273 = vector.shape_cast %272 : vector<8x16xbf16> to vector<1x8x16xbf16>
    %274 = tpu.concatenate %267, %269, %271, %273 in 0 : vector<1x8x16xbf16>, vector<1x8x16xbf16>, vector<1x8x16xbf16>, vector<1x8x16xbf16> -> vector<4x8x16xbf16>
    "tpu.trace_start"() <{level = 10 : i32, message = "bld,bsd->bls"}> : () -> ()
    %cst_85 = arith.constant dense<0.000000e+00> : vector<4x8x8xf32>
    %275 = tpu.matmul %256, %265, %cst_85 {dimension_numbers = #tpu.dot_dimension_numbers<[2], [2], [1], [1], [0, 0, 0, 1, 1, 1], [0], [0]>} : vector<4x8x16xbf16>, vector<4x8x16xbf16>, vector<4x8x8xf32> -> vector<4x8x8xf32>
    "tpu.trace_stop"() : () -> ()
    %276 = vector.shape_cast %275 : vector<4x8x8xf32> to vector<4x1x8x8xf32>
    %277 = vector.shape_cast %244 : vector<1x8x8xf32> to vector<1x1x8x8xf32>
    %278 = vector.broadcast %277 : vector<1x1x8x8xf32> to vector<4x1x8x8xf32>
    %279 = arith.addf %276, %278 : vector<4x1x8x8xf32>
    %280 = vector.shape_cast %279 : vector<4x1x8x8xf32> to vector<4x8x8xf32>
    %cst_86 = arith.constant dense<0xFF800000> : vector<4x8xf32>
    %281 = vector.multi_reduction <maximumf>, %280, %cst_86 [2] : vector<4x8x8xf32> to vector<4x8xf32>
    %282 = vector.shape_cast %281 : vector<4x8xf32> to vector<4x8x1xf32>
    %283 = vector.broadcast %282 : vector<4x8x1xf32> to vector<4x8x8xf32>
    %284 = arith.subf %280, %283 : vector<4x8x8xf32>
    %285 = math.exp %284 : vector<4x8x8xf32>
    %cst_87 = arith.constant dense<0.000000e+00> : vector<4x8xf32>
    %286 = vector.multi_reduction <add>, %285, %cst_87 [2] : vector<4x8x8xf32> to vector<4x8xf32>
    %287 = vector.shape_cast %286 : vector<4x8xf32> to vector<4x8x1xf32>
    %288 = tpu.reciprocal %287 {approx = true} : vector<4x8x1xf32> -> vector<4x8x1xf32>
    %289 = vector.broadcast %288 : vector<4x8x1xf32> to vector<4x8x8xf32>
    %290 = arith.mulf %285, %289 : vector<4x8x8xf32>
    %291 = arith.truncf %290 : vector<4x8x8xf32> to vector<4x8x8xbf16>
    "tpu.trace_start"() <{level = 10 : i32, message = "bls,bsd->bld"}> : () -> ()
    %cst_88 = arith.constant dense<0.000000e+00> : vector<4x8x16xf32>
    %292 = tpu.matmul %291, %274, %cst_88 {dimension_numbers = #tpu.dot_dimension_numbers<[2], [1], [1], [2], [0, 0, 0, 1, 1, 2], [0], [0]>} : vector<4x8x8xbf16>, vector<4x8x16xbf16>, vector<4x8x16xf32> -> vector<4x8x16xf32>
    "tpu.trace_stop"() : () -> ()
    %293 = vector.extract_strided_slice %292 {offsets = [0, 0, 0], sizes = [1, 8, 16], strides = [1, 1, 1]} : vector<4x8x16xf32> to vector<1x8x16xf32>
    %294 = vector.shape_cast %293 : vector<1x8x16xf32> to vector<8x16xf32>
    %295 = arith.truncf %294 : vector<8x16xf32> to vector<8x16xbf16>
    %c0_89 = arith.constant 0 : index
    %c0_90 = arith.constant 0 : index
    %296 = vector.load %arg21[%c0_89, %c0_90] : memref<8x64xbf16, #tpu.memory_space<vmem>>, vector<8x16xbf16>
    tpu.vector_store %arg21[%c0_89, %c0_90], %295 {strides = array<i32>} : memref<8x64xbf16, #tpu.memory_space<vmem>>, vector<8x16xbf16>,
    %297 = vector.extract_strided_slice %292 {offsets = [1, 0, 0], sizes = [1, 8, 16], strides = [1, 1, 1]} : vector<4x8x16xf32> to vector<1x8x16xf32>
    %298 = vector.shape_cast %297 : vector<1x8x16xf32> to vector<8x16xf32>
    %299 = arith.truncf %298 : vector<8x16xf32> to vector<8x16xbf16>
    %c0_91 = arith.constant 0 : index
    %c16_92 = arith.constant 16 : index
    %300 = vector.load %arg21[%c0_91, %c16_92] : memref<8x64xbf16, #tpu.memory_space<vmem>>, vector<8x16xbf16>
    tpu.vector_store %arg21[%c0_91, %c16_92], %299 {strides = array<i32>} : memref<8x64xbf16, #tpu.memory_space<vmem>>, vector<8x16xbf16>,
    %301 = vector.extract_strided_slice %292 {offsets = [2, 0, 0], sizes = [1, 8, 16], strides = [1, 1, 1]} : vector<4x8x16xf32> to vector<1x8x16xf32>
    %302 = vector.shape_cast %301 : vector<1x8x16xf32> to vector<8x16xf32>
    %303 = arith.truncf %302 : vector<8x16xf32> to vector<8x16xbf16>
    %c0_93 = arith.constant 0 : index
    %c32 = arith.constant 32 : index
    %304 = vector.load %arg21[%c0_93, %c32] : memref<8x64xbf16, #tpu.memory_space<vmem>>, vector<8x16xbf16>
    tpu.vector_store %arg21[%c0_93, %c32], %303 {strides = array<i32>} : memref<8x64xbf16, #tpu.memory_space<vmem>>, vector<8x16xbf16>,
    %305 = vector.extract_strided_slice %292 {offsets = [3, 0, 0], sizes = [1, 8, 16], strides = [1, 1, 1]} : vector<4x8x16xf32> to vector<1x8x16xf32>
    %306 = vector.shape_cast %305 : vector<1x8x16xf32> to vector<8x16xf32>
    %307 = arith.truncf %306 : vector<8x16xf32> to vector<8x16xbf16>
    %c0_94 = arith.constant 0 : index
    %c48 = arith.constant 48 : index
    %308 = vector.load %arg21[%c0_94, %c48] : memref<8x64xbf16, #tpu.memory_space<vmem>>, vector<8x16xbf16>
    tpu.vector_store %arg21[%c0_94, %c48], %307 {strides = array<i32>} : memref<8x64xbf16, #tpu.memory_space<vmem>>, vector<8x16xbf16>,
    %c0_95 = arith.constant 0 : index
    %c0_96 = arith.constant 0 : index
    %309 = vector.load %arg21[%c0_95, %c0_96] : memref<8x64xbf16, #tpu.memory_space<vmem>>, vector<8x64xbf16>
    %c0_97 = arith.constant 0 : index
    %c0_98 = arith.constant 0 : index
    %310 = vector.load %arg14[%c0_97, %c0_98] : memref<64x32xbf16, #tpu.memory_space<vmem>>, vector<64x32xbf16>
    %cst_99 = arith.constant dense<0.000000e+00> : vector<8x32xf32>
    %311 = tpu.matmul %309, %310, %cst_99 {dimension_numbers = #tpu.dot_dimension_numbers<[1], [0], [0], [1], [0, 0, 1, 1], [], []>} : vector<8x64xbf16>, vector<64x32xbf16>, vector<8x32xf32> -> vector<8x32xf32>
    %312 = vector.broadcast %242 : vector<1x32xf32> to vector<8x32xf32>
    %313 = arith.addf %311, %312 : vector<8x32xf32>
    %314 = arith.addf %232, %313 : vector<8x32xf32>
    %cst_100 = arith.constant dense<0.000000e+00> : vector<8xf32>
    %315 = vector.multi_reduction <add>, %314, %cst_100 [1] : vector<8x32xf32> to vector<8xf32>
    %316 = vector.shape_cast %315 : vector<8xf32> to vector<8x1xf32>
    %cst_101 = arith.constant 3.200000e+01 : f32
    %317 = vector.broadcast %cst_101 : f32 to vector<8x1xf32>
    %318 = arith.divf %316, %317 : vector<8x1xf32>
    %319 = vector.broadcast %318 : vector<8x1xf32> to vector<8x32xf32>
    %320 = arith.subf %314, %319 : vector<8x32xf32>
    %321 = arith.mulf %320, %320 : vector<8x32xf32>
    %cst_102 = arith.constant dense<0.000000e+00> : vector<8xf32>
    %322 = vector.multi_reduction <add>, %321, %cst_102 [1] : vector<8x32xf32> to vector<8xf32>
    %323 = vector.shape_cast %322 : vector<8xf32> to vector<8x1xf32>
    %cst_103 = arith.constant 3.200000e+01 : f32
    %324 = vector.broadcast %cst_103 : f32 to vector<8x1xf32>
    %325 = arith.divf %323, %324 : vector<8x1xf32>
    %cst_104 = arith.constant 9.99999974E-6 : f32
    %326 = vector.broadcast %cst_104 : f32 to vector<8x1xf32>
    %327 = arith.addf %325, %326 : vector<8x1xf32>
    %328 = math.rsqrt %327 : vector<8x1xf32>
    %329 = vector.broadcast %328 : vector<8x1xf32> to vector<8x32xf32>
    %330 = arith.mulf %320, %329 : vector<8x32xf32>
    %331 = vector.extract_strided_slice %5 {offsets = [7, 0], sizes = [1, 32], strides = [1, 1]} : vector<9x32xf32> to vector<1x32xf32>
    %332 = vector.broadcast %331 : vector<1x32xf32> to vector<8x32xf32>
    %333 = arith.mulf %330, %332 : vector<8x32xf32>
    %334 = vector.extract_strided_slice %5 {offsets = [8, 0], sizes = [1, 32], strides = [1, 1]} : vector<9x32xf32> to vector<1x32xf32>
    %335 = vector.broadcast %334 : vector<1x32xf32> to vector<8x32xf32>
    %336 = arith.addf %333, %335 : vector<8x32xf32>
    %337 = vector.shape_cast %336 : vector<8x32xf32> to vector<1x8x32xf32>
    %c0_105 = arith.constant 0 : index
    %c0_106 = arith.constant 0 : index
    %c0_107 = arith.constant 0 : index
    %338 = vector.load %arg18[%c0_105, %c0_106, %c0_107] : memref<1x8x32xf32, #tpu.memory_space<vmem>>, vector<1x8x32xf32>
    tpu.vector_store %arg18[%c0_105, %c0_106, %c0_107], %337 {strides = array<i32>} : memref<1x8x32xf32, #tpu.memory_space<vmem>>, vector<1x8x32xf32>,
    %c0_108 = arith.constant 0 : index
    %c0_109 = arith.constant 0 : index
    %c0_110 = arith.constant 0 : index
    %339 = vector.load %arg19[%c0_108, %c0_109, %c0_110] : memref<1x8x16xf32, #tpu.memory_space<vmem>>, vector<1x8x16xf32>
    tpu.vector_store %arg19[%c0_108, %c0_109, %c0_110], %209 {strides = array<i32>} : memref<1x8x16xf32, #tpu.memory_space<vmem>>, vector<1x8x16xf32>,
    return
  }
  func.func @transform_0(%arg0: i32) -> (i32, i32, i32) {
    %c0_i32 = arith.constant 0 : i32
    %c0_i32_0 = arith.constant 0 : i32
    %c0_i32_1 = arith.constant 0 : i32
    return %arg0, %c0_i32, %c0_i32_0 : i32, i32, i32
  }
  func.func @transform_1(%arg0: i32) -> (i32, i32, i32) {
    %c0_i32 = arith.constant 0 : i32
    %c0_i32_0 = arith.constant 0 : i32
    %c0_i32_1 = arith.constant 0 : i32
    return %arg0, %c0_i32, %c0_i32_0 : i32, i32, i32
  }
  func.func @transform_2(%arg0: i32) -> (i32, i32, i32) {
    %c0_i32 = arith.constant 0 : i32
    %c0_i32_0 = arith.constant 0 : i32
    %c0_i32_1 = arith.constant 0 : i32
    return %arg0, %c0_i32, %c0_i32_0 : i32, i32, i32
  }
  func.func @transform_3(%arg0: i32) -> (i32, i32, i32) {
    %c0_i32 = arith.constant 0 : i32
    %c0_i32_0 = arith.constant 0 : i32
    %c0_i32_1 = arith.constant 0 : i32
    return %arg0, %c0_i32, %c0_i32_0 : i32, i32, i32
  }
  func.func @transform_4(%arg0: i32) -> (i32, i32, i32) {
    %c0_i32 = arith.constant 0 : i32
    %c0_i32_0 = arith.constant 0 : i32
    %c0_i32_1 = arith.constant 0 : i32
    return %arg0, %c0_i32, %c0_i32_0 : i32, i32, i32
  }
  func.func @transform_5(%arg0: i32) -> (i32, i32) {
    %c0_i32 = arith.constant 0 : i32
    %c0_i32_0 = arith.constant 0 : i32
    %c0_i32_1 = arith.constant 0 : i32
    return %c0_i32, %c0_i32_0 : i32, i32
  }
  func.func @transform_6(%arg0: i32) -> (i32, i32) {
    %c0_i32 = arith.constant 0 : i32
    %c0_i32_0 = arith.constant 0 : i32
    %c0_i32_1 = arith.constant 0 : i32
    return %c0_i32, %c0_i32_0 : i32, i32
  }
  func.func @transform_7(%arg0: i32) -> (i32, i32) {
    %c0_i32 = arith.constant 0 : i32
    %c0_i32_0 = arith.constant 0 : i32
    %c0_i32_1 = arith.constant 0 : i32
    return %c0_i32, %c0_i32_0 : i32, i32
  }
  func.func @transform_8(%arg0: i32) -> (i32, i32) {
    %c0_i32 = arith.constant 0 : i32
    %c0_i32_0 = arith.constant 0 : i32
    %c0_i32_1 = arith.constant 0 : i32
    return %c0_i32, %c0_i32_0 : i32, i32
  }
  func.func @transform_9(%arg0: i32) -> (i32, i32) {
    %c0_i32 = arith.constant 0 : i32
    %c0_i32_0 = arith.constant 0 : i32
    %c0_i32_1 = arith.constant 0 : i32
    return %c0_i32, %c0_i32_0 : i32, i32
  }
  func.func @transform_10(%arg0: i32) -> (i32, i32) {
    %c0_i32 = arith.constant 0 : i32
    %c0_i32_0 = arith.constant 0 : i32
    %c0_i32_1 = arith.constant 0 : i32
    return %c0_i32, %c0_i32_0 : i32, i32
  }
  func.func @transform_11(%arg0: i32) -> (i32, i32) {
    %c0_i32 = arith.constant 0 : i32
    %c0_i32_0 = arith.constant 0 : i32
    %c0_i32_1 = arith.constant 0 : i32
    return %c0_i32, %c0_i32_0 : i32, i32
  }
  func.func @transform_12(%arg0: i32) -> (i32, i32) {
    %c0_i32 = arith.constant 0 : i32
    %c0_i32_0 = arith.constant 0 : i32
    %c0_i32_1 = arith.constant 0 : i32
    return %c0_i32, %c0_i32_0 : i32, i32
  }
  func.func @transform_13(%arg0: i32) -> (i32, i32) {
    %c0_i32 = arith.constant 0 : i32
    %c0_i32_0 = arith.constant 0 : i32
    %c0_i32_1 = arith.constant 0 : i32
    return %c0_i32, %c0_i32_0 : i32, i32
  }
  func.func @transform_14(%arg0: i32) -> (i32, i32) {
    %c0_i32 = arith.constant 0 : i32
    %c0_i32_0 = arith.constant 0 : i32
    %c0_i32_1 = arith.constant 0 : i32
    return %c0_i32, %c0_i32_0 : i32, i32
  }
  func.func @transform_15(%arg0: i32) -> (i32, i32) {
    %c0_i32 = arith.constant 0 : i32
    %c0_i32_0 = arith.constant 0 : i32
    %c0_i32_1 = arith.constant 0 : i32
    return %c0_i32, %c0_i32_0 : i32, i32
  }
  func.func @transform_16(%arg0: i32) -> (i32, i32) {
    %c0_i32 = arith.constant 0 : i32
    %c0_i32_0 = arith.constant 0 : i32
    %c0_i32_1 = arith.constant 0 : i32
    return %c0_i32, %c0_i32_0 : i32, i32
  }
  func.func @transform_17(%arg0: i32) -> (i32, i32, i32) {
    %c0_i32 = arith.constant 0 : i32
    %c0_i32_0 = arith.constant 0 : i32
    %c0_i32_1 = arith.constant 0 : i32
    return %arg0, %c0_i32, %c0_i32_0 : i32, i32, i32
  }
  func.func @transform_18(%arg0: i32) -> (i32, i32, i32) {
    %c0_i32 = arith.constant 0 : i32
    %c0_i32_0 = arith.constant 0 : i32
    %c0_i32_1 = arith.constant 0 : i32
    return %arg0, %c0_i32, %c0_i32_0 : i32, i32, i32
  }
}

</mosaic_0001>

<llo_original>
// kernel: tpu_custom_call.1
$region0: #{tpu_custom_call.1}
  #allocation0 [shape = 'u32[]', space=smem, size = 0x4, offset = 0x4, fixed_abs, tag = 'smem constant byte address 0x4 - core index']
  #allocation1 [shape = 'u32[144,128]{1,0:T(1,128)}', space=vmem, size = 0x12000, scoped, tag = 'internal scratch']
  #allocation2 [shape = 'bf16[8,32]{1,0:T(8,128)(2,1)}', space=vmem, size = 0x800, scoped, tag = 'scratch operand']
  #allocation3 [shape = 'bf16[8,64]{1,0:T(8,128)(2,1)}', space=vmem, size = 0x800, scoped, tag = 'scratch operand']
  %s0 = inlined_call_operand.hbm [shape: bf16[2,8,32], index: 0, kind: input, shape index: {}]
  %s1 = inlined_call_operand.hbm [shape: bf16[2,8,32], index: 1, kind: input, shape index: {}]
  %s2 = inlined_call_operand.vmem [shape: bf16[2,16,32], index: 2, kind: input, shape index: {}]
  %s3 = inlined_call_operand.hbm [shape: bf16[2,16,32], index: 3, kind: input, shape index: {}]
  %s4 = inlined_call_operand.hbm [shape: bf16[2,8,8], index: 4, kind: input, shape index: {}]
  %s5 = inlined_call_operand.hbm [shape: bf16[32,64], index: 5, kind: input, shape index: {}]
  %s6 = inlined_call_operand.hbm [shape: bf16[32,32], index: 6, kind: input, shape index: {}]
  %s7 = inlined_call_operand.hbm [shape: bf16[32,32], index: 7, kind: input, shape index: {}]
  %s8 = inlined_call_operand.hbm [shape: bf16[32,32], index: 8, kind: input, shape index: {}]
  %s9 = inlined_call_operand.vmem [shape: bf16[32,32], index: 9, kind: input, shape index: {}]
  %s10 = inlined_call_operand.vmem [shape: bf16[32,192], index: 10, kind: input, shape index: {}]
  %s11 = inlined_call_operand.hbm [shape: bf16[32,32], index: 11, kind: input, shape index: {}]
  %s12 = inlined_call_operand.hbm [shape: bf16[32,32], index: 12, kind: input, shape index: {}]
  %s13 = inlined_call_operand.vmem [shape: bf16[64,32], index: 13, kind: input, shape index: {}]
  %s14 = inlined_call_operand.vmem [shape: f32[2,96], index: 14, kind: input, shape index: {}]
  %s15 = inlined_call_operand.vmem [shape: f32[1,192], index: 15, kind: input, shape index: {}]
  %s16 = inlined_call_operand.vmem [shape: f32[9,32], index: 16, kind: input, shape index: {}]
  %s17 = inlined_call_operand.hbm [shape: f32[2,8,32], index: 17, kind: output, shape index: {0}]
  %s18 = inlined_call_operand.hbm [shape: f32[2,8,16], index: 18, kind: output, shape index: {1}]
  %19 = xla_tuple %s17, %s18
  %s20 = sld [smem:[#allocation0]]
  $region149: #{tpu_custom_call.1} parent=0
    _
  %s22 = ssub.s32 1, %s20
  %s23 = scalar_select 0, %s22, %s20
  $region1: #{tpu_custom_call.1} parent=0
    #allocation4 [shape = 'u8[4096]{0}', space=vmem, size = 0x1000, scoped, tag = 'input window, operand 0']
    #allocation5 [shape = 's32[2]{0}', space=sflag, size = 0x8, scoped, tag = 'scoped memory for tpu_custom_call.1']
    #allocation6 [shape = 's32[2]{0}', space=sflag, size = 0x8, scoped, tag = 'scoped memory for tpu_custom_call.1']
    #allocation7 [shape = 'u8[4096]{0}', space=vmem, size = 0x1000, scoped, tag = 'input window, operand 1']
    #allocation8 [shape = 's32[2]{0}', space=sflag, size = 0x8, scoped, tag = 'scoped memory for tpu_custom_call.1']
    #allocation9 [shape = 'u8[8192]{0}', space=vmem, size = 0x2000, scoped, tag = 'input window, operand 3']
    #allocation10 [shape = 'u8[4096]{0}', space=vmem, size = 0x1000, scoped, tag = 'input window, operand 4']
    #allocation11 [shape = 's32[2]{0}', space=sflag, size = 0x8, scoped, tag = 'scoped memory for tpu_custom_call.1']
    #allocation12 [shape = 'u8[8192]{0}', space=vmem, size = 0x2000, scoped, tag = 'input window, operand 5, single buffered']
    #allocation13 [shape = 'u8[8192]{0}', space=vmem, size = 0x2000, scoped, tag = 'input window, operand 6, single buffered']
    #allocation14 [shape = 's32[1]{0}', space=sflag, size = 0x4, scoped, tag = 'scoped memory for tpu_custom_call.1']
    #allocation15 [shape = 'u8[8192]{0}', space=vmem, size = 0x2000, scoped, tag = 'input window, operand 7, single buffered']
    #allocation16 [shape = 'u8[8192]{0}', space=vmem, size = 0x2000, scoped, tag = 'input window, operand 8, single buffered']
    #allocation17 [shape = 's32[1]{0}', space=sflag, size = 0x4, scoped, tag = 'scoped memory for tpu_custom_call.1']
    #allocation18 [shape = 'u8[8192]{0}', space=vmem, size = 0x2000, scoped, tag = 'input window, operand 11, single buffered']
    #allocation19 [shape = 'u8[8192]{0}', space=vmem, size = 0x2000, scoped, tag = 'input window, operand 12, single buffered']
    #allocation20 [shape = 's32[1]{0}', space=sflag, size = 0x4, scoped, tag = 'scoped memory for tpu_custom_call.1']
    #allocation21 [shape = 'u8[8192]{0}', space=vmem, size = 0x2000, scoped, tag = 'output window, operand 0']
    #allocation22 [shape = 'u8[8192]{0}', space=vmem, size = 0x2000, scoped, tag = 'output window, operand 1']
    #allocation23 [shape = 's32[2]{0}', space=sflag, size = 0x8, scoped, tag = 'scoped memory for tpu_custom_call.1']
    %24 = vsyncpa [#allocation5], 0
    %s25 = scalar_lea.sflag [#allocation5], 1
    %26 = vsyncpa %s25, 0
    %27 = vsyncpa [#allocation8], 0
    %s28 = scalar_lea.sflag [#allocation8], 1
    %29 = vsyncpa %s28, 0
    %30 = vsyncpa [#allocation11], 0
    %s31 = scalar_lea.sflag [#allocation11], 1
    %32 = vsyncpa %s31, 0
    %33 = vsyncpa [#allocation14], 0
    %34 = vsyncpa [#allocation17], 0
    %35 = vsyncpa [#allocation20], 0
    %36 = vsyncpa [#allocation6], 0
    %s37 = scalar_lea.sflag [#allocation6], 1
    %38 = vsyncpa %s37, 0
    %39 = vsyncpa [#allocation23], 0
    %s40 = scalar_lea.sflag [#allocation23], 1
    %41 = vsyncpa %s40, 0
    loop: start=0, step=1, limit=4
    $region2: #{tpu_custom_call.1} parent=1 // loop_pre_header
      _
    $region3: #{tpu_custom_call.1} parent=1 // loop_header
      %s43 = sphi 0, %s47
      %p44 = scmp.ge.s32.totalorder %s43, 4
      %s53 = sphi 0, %s55
      %s56 = sphi 0, %s53
      %s57 = sphi 0, %s56
      %s73 = sphi 0, %s57
      %s79 = sphi 0, %s81
      %s82 = sphi 0, %s79
      %s83 = sphi 0, %s82
      %s99 = sphi 0, %s83
      %s105 = sphi 0, %s107
      %s108 = sphi 0, %s105
      %s109 = sphi 0, %s108
      %s125 = sphi 0, %s109
      %s131 = sphi 0, %s133
      %s134 = sphi 0, %s131
      %s135 = sphi 0, %s134
      %s151 = sphi 0, %s135
      %s157 = sphi 0, %s159
      %s160 = sphi 0, %s157
      %s161 = sphi 0, %s160
      %s177 = sphi 0, %s161
      %s181 = sphi 0, %s181
      %s183 = sphi 0, %s181
      %s184 = sphi 0, %s183
      %s198 = sphi 0, %s184
      %s202 = sphi 0, %s202
      %s204 = sphi 0, %s202
      %s205 = sphi 0, %s204
      %s219 = sphi 0, %s205
      %s223 = sphi 0, %s223
      %s225 = sphi 0, %s223
      %s226 = sphi 0, %s225
      %s240 = sphi 0, %s226
      %s244 = sphi 0, %s244
      %s246 = sphi 0, %s244
      %s247 = sphi 0, %s246
      %s261 = sphi 0, %s247
      %s265 = sphi 0, %s265
      %s267 = sphi 0, %s265
      %s268 = sphi 0, %s267
      %s282 = sphi 0, %s268
      %s286 = sphi 0, %s286
      %s288 = sphi 0, %s286
      %s289 = sphi 0, %s288
      %s303 = sphi 0, %s289
      %s307 = sphi 0, %s307
      %s309 = sphi 0, %s307
      %s310 = sphi 0, %s309
      %s324 = sphi 0, %s310
      %s328 = sphi 0, %s328
      %s330 = sphi 0, %s328
      %s331 = sphi 0, %s330
      %s345 = sphi 0, %s331
      %s349 = sphi 0, %s349
      %s351 = sphi 0, %s349
      %s352 = sphi 0, %s351
      %s366 = sphi 0, %s352
      %s370 = sphi 0, %s370
      %s372 = sphi 0, %s370
      %s373 = sphi 0, %s372
      %s387 = sphi 0, %s373
      %s391 = sphi 0, %s391
      %s393 = sphi 0, %s391
      %s394 = sphi 0, %s393
      %s408 = sphi 0, %s394
      %s412 = sphi 0, %s412
      %s414 = sphi 0, %s412
      %s415 = sphi 0, %s414
      %s429 = sphi 0, %s415
      %s435 = sphi 0, %s437
      %s438 = sphi 0, %s435
      %s439 = sphi 0, %s438
      %s455 = sphi 0, %s439
      %s461 = sphi 0, %s463
      %s464 = sphi 0, %s461
      %s465 = sphi 0, %s464
      %s481 = sphi 0, %s465
    $region4: #{tpu_custom_call.1} parent=1 // loop_header_branch
      %46 = sbr.rel (%p44) target = $region8
    $region5: #{tpu_custom_call.1} parent=1 // loop_body
      %s48 = ssub.s32 %s43, 1
      %s49 = ssub.s32 %s43, 2
      %s50 = sadd.s32 %s43, 1
      %s51 = ssub.s32 %s43, %s50
      %p52 = scmp.eq.s32.totalorder %s51, 0
      %s54 = sadd.s32 %s53, 1
      %s55 = scalar_select %p52, %s53, %s54
      %p58 = pneg %p52
      %p59 = scmp.eq.s32.totalorder %s43, 1
      %p60 = por %p58, %p59
      %p61 = scmp.ne.s32.totalorder %s53, %s56
      %p62 = scmp.eq.s32.totalorder %s43, 0
      %p63 = por %p61, %p62
      %p64 = scmp.ne.s32.totalorder %s53, %s56
      %p65 = scmp.eq.s32.totalorder %s48, 1
      %p66 = por %p64, %p65
      %p67 = scmp.ne.s32.totalorder %s56, %s57
      %p68 = scmp.eq.s32.totalorder %s48, 0
      %p69 = por %p67, %p68
      %p70 = scmp.ne.s32.totalorder %s56, %s57
      %p71 = scmp.eq.s32.totalorder %s49, 1
      %p72 = por %p70, %p71
      %p74 = scmp.ne.s32.totalorder %s57, %s73
      %p75 = scmp.eq.s32.totalorder %s49, 0
      %p76 = por %p74, %p75
      %s77 = ssub.s32 %s43, %s50
      %p78 = scmp.eq.s32.totalorder %s77, 0
      %s80 = sadd.s32 %s79, 1
      %s81 = scalar_select %p78, %s79, %s80
      %p84 = pneg %p78
      %p85 = scmp.eq.s32.totalorder %s43, 1
      %p86 = por %p84, %p85
      %p87 = scmp.ne.s32.totalorder %s79, %s82
      %p88 = scmp.eq.s32.totalorder %s43, 0
      %p89 = por %p87, %p88
      %p90 = scmp.ne.s32.totalorder %s79, %s82
      %p91 = scmp.eq.s32.totalorder %s48, 1
      %p92 = por %p90, %p91
      %p93 = scmp.ne.s32.totalorder %s82, %s83
      %p94 = scmp.eq.s32.totalorder %s48, 0
      %p95 = por %p93, %p94
      %p96 = scmp.ne.s32.totalorder %s82, %s83
      %p97 = scmp.eq.s32.totalorder %s49, 1
      %p98 = por %p96, %p97
      %p100 = scmp.ne.s32.totalorder %s83, %s99
      %p101 = scmp.eq.s32.totalorder %s49, 0
      %p102 = por %p100, %p101
      %s103 = ssub.s32 %s43, %s50
      %p104 = scmp.eq.s32.totalorder %s103, 0
      %s106 = sadd.s32 %s105, 1
      %s107 = scalar_select %p104, %s105, %s106
      %p110 = pneg %p104
      %p111 = scmp.eq.s32.totalorder %s43, 1
      %p112 = por %p110, %p111
      %p113 = scmp.ne.s32.totalorder %s105, %s108
      %p114 = scmp.eq.s32.totalorder %s43, 0
      %p115 = por %p113, %p114
      %p116 = scmp.ne.s32.totalorder %s105, %s108
      %p117 = scmp.eq.s32.totalorder %s48, 1
      %p118 = por %p116, %p117
      %p119 = scmp.ne.s32.totalorder %s108, %s109
      %p120 = scmp.eq.s32.totalorder %s48, 0
      %p121 = por %p119, %p120
      %p122 = scmp.ne.s32.totalorder %s108, %s109
      %p123 = scmp.eq.s32.totalorder %s49, 1
      %p124 = por %p122, %p123
      %p126 = scmp.ne.s32.totalorder %s109, %s125
      %p127 = scmp.eq.s32.totalorder %s49, 0
      %p128 = por %p126, %p127
      %s129 = ssub.s32 %s43, %s50
      %p130 = scmp.eq.s32.totalorder %s129, 0
      %s132 = sadd.s32 %s131, 1
      %s133 = scalar_select %p130, %s131, %s132
      %p136 = pneg %p130
      %p137 = scmp.eq.s32.totalorder %s43, 1
      %p138 = por %p136, %p137
      %p139 = scmp.ne.s32.totalorder %s131, %s134
      %p140 = scmp.eq.s32.totalorder %s43, 0
      %p141 = por %p139, %p140
      %p142 = scmp.ne.s32.totalorder %s131, %s134
      %p143 = scmp.eq.s32.totalorder %s48, 1
      %p144 = por %p142, %p143
      %p145 = scmp.ne.s32.totalorder %s134, %s135
      %p146 = scmp.eq.s32.totalorder %s48, 0
      %p147 = por %p145, %p146
      %p148 = scmp.ne.s32.totalorder %s134, %s135
      %p149 = scmp.eq.s32.totalorder %s49, 1
      %p150 = por %p148, %p149
      %p152 = scmp.ne.s32.totalorder %s135, %s151
      %p153 = scmp.eq.s32.totalorder %s49, 0
      %p154 = por %p152, %p153
      %s155 = ssub.s32 %s43, %s50
      %p156 = scmp.eq.s32.totalorder %s155, 0
      %s158 = sadd.s32 %s157, 1
      %s159 = scalar_select %p156, %s157, %s158
      %p162 = pneg %p156
      %p163 = scmp.eq.s32.totalorder %s43, 1
      %p164 = por %p162, %p163
      %p165 = scmp.ne.s32.totalorder %s157, %s160
      %p166 = scmp.eq.s32.totalorder %s43, 0
      %p167 = por %p165, %p166
      %p168 = scmp.ne.s32.totalorder %s157, %s160
      %p169 = scmp.eq.s32.totalorder %s48, 1
      %p170 = por %p168, %p169
      %p171 = scmp.ne.s32.totalorder %s160, %s161
      %p172 = scmp.eq.s32.totalorder %s48, 0
      %p173 = por %p171, %p172
      %p174 = scmp.ne.s32.totalorder %s160, %s161
      %p175 = scmp.eq.s32.totalorder %s49, 1
      %p176 = por %p174, %p175
      %p178 = scmp.ne.s32.totalorder %s161, %s177
      %p179 = scmp.eq.s32.totalorder %s49, 0
      %p180 = por %p178, %p179
      %s182 = sadd.s32 %s181, 1
      %p185 = scmp.eq.s32.totalorder %s43, 1
      %p186 = scmp.ne.s32.totalorder %s181, %s183
      %p187 = scmp.eq.s32.totalorder %s43, 0
      %p188 = por %p186, %p187
      %p189 = scmp.ne.s32.totalorder %s181, %s183
      %p190 = scmp.eq.s32.totalorder %s48, 1
      %p191 = por %p189, %p190
      %p192 = scmp.ne.s32.totalorder %s183, %s184
      %p193 = scmp.eq.s32.totalorder %s48, 0
      %p194 = por %p192, %p193
      %p195 = scmp.ne.s32.totalorder %s183, %s184
      %p196 = scmp.eq.s32.totalorder %s49, 1
      %p197 = por %p195, %p196
      %p199 = scmp.ne.s32.totalorder %s184, %s198
      %p200 = scmp.eq.s32.totalorder %s49, 0
      %p201 = por %p199, %p200
      %s203 = sadd.s32 %s202, 1
      %p206 = scmp.eq.s32.totalorder %s43, 1
      %p207 = scmp.ne.s32.totalorder %s202, %s204
      %p208 = scmp.eq.s32.totalorder %s43, 0
      %p209 = por %p207, %p208
      %p210 = scmp.ne.s32.totalorder %s202, %s204
      %p211 = scmp.eq.s32.totalorder %s48, 1
      %p212 = por %p210, %p211
      %p213 = scmp.ne.s32.totalorder %s204, %s205
      %p214 = scmp.eq.s32.totalorder %s48, 0
      %p215 = por %p213, %p214
      %p216 = scmp.ne.s32.totalorder %s204, %s205
      %p217 = scmp.eq.s32.totalorder %s49, 1
      %p218 = por %p216, %p217
      %p220 = scmp.ne.s32.totalorder %s205, %s219
      %p221 = scmp.eq.s32.totalorder %s49, 0
      %p222 = por %p220, %p221
      %s224 = sadd.s32 %s223, 1
      %p227 = scmp.eq.s32.totalorder %s43, 1
      %p228 = scmp.ne.s32.totalorder %s223, %s225
      %p229 = scmp.eq.s32.totalorder %s43, 0
      %p230 = por %p228, %p229
      %p231 = scmp.ne.s32.totalorder %s223, %s225
      %p232 = scmp.eq.s32.totalorder %s48, 1
      %p233 = por %p231, %p232
      %p234 = scmp.ne.s32.totalorder %s225, %s226
      %p235 = scmp.eq.s32.totalorder %s48, 0
      %p236 = por %p234, %p235
      %p237 = scmp.ne.s32.totalorder %s225, %s226
      %p238 = scmp.eq.s32.totalorder %s49, 1
      %p239 = por %p237, %p238
      %p241 = scmp.ne.s32.totalorder %s226, %s240
      %p242 = scmp.eq.s32.totalorder %s49, 0
      %p243 = por %p241, %p242
      %s245 = sadd.s32 %s244, 1
      %p248 = scmp.eq.s32.totalorder %s43, 1
      %p249 = scmp.ne.s32.totalorder %s244, %s246
      %p250 = scmp.eq.s32.totalorder %s43, 0
      %p251 = por %p249, %p250
      %p252 = scmp.ne.s32.totalorder %s244, %s246
      %p253 = scmp.eq.s32.totalorder %s48, 1
      %p254 = por %p252, %p253
      %p255 = scmp.ne.s32.totalorder %s246, %s247
      %p256 = scmp.eq.s32.totalorder %s48, 0
      %p257 = por %p255, %p256
      %p258 = scmp.ne.s32.totalorder %s246, %s247
      %p259 = scmp.eq.s32.totalorder %s49, 1
      %p260 = por %p258, %p259
      %p262 = scmp.ne.s32.totalorder %s247, %s261
      %p263 = scmp.eq.s32.totalorder %s49, 0
      %p264 = por %p262, %p263
      %s266 = sadd.s32 %s265, 1
      %p269 = scmp.eq.s32.totalorder %s43, 1
      %p270 = scmp.ne.s32.totalorder %s265, %s267
      %p271 = scmp.eq.s32.totalorder %s43, 0
      %p272 = por %p270, %p271
      %p273 = scmp.ne.s32.totalorder %s265, %s267
      %p274 = scmp.eq.s32.totalorder %s48, 1
      %p275 = por %p273, %p274
      %p276 = scmp.ne.s32.totalorder %s267, %s268
      %p277 = scmp.eq.s32.totalorder %s48, 0
      %p278 = por %p276, %p277
      %p279 = scmp.ne.s32.totalorder %s267, %s268
      %p280 = scmp.eq.s32.totalorder %s49, 1
      %p281 = por %p279, %p280
      %p283 = scmp.ne.s32.totalorder %s268, %s282
      %p284 = scmp.eq.s32.totalorder %s49, 0
      %p285 = por %p283, %p284
      %s287 = sadd.s32 %s286, 1
      %p290 = scmp.eq.s32.totalorder %s43, 1
      %p291 = scmp.ne.s32.totalorder %s286, %s288
      %p292 = scmp.eq.s32.totalorder %s43, 0
      %p293 = por %p291, %p292
      %p294 = scmp.ne.s32.totalorder %s286, %s288
      %p295 = scmp.eq.s32.totalorder %s48, 1
      %p296 = por %p294, %p295
      %p297 = scmp.ne.s32.totalorder %s288, %s289
      %p298 = scmp.eq.s32.totalorder %s48, 0
      %p299 = por %p297, %p298
      %p300 = scmp.ne.s32.totalorder %s288, %s289
      %p301 = scmp.eq.s32.totalorder %s49, 1
      %p302 = por %p300, %p301
      %p304 = scmp.ne.s32.totalorder %s289, %s303
      %p305 = scmp.eq.s32.totalorder %s49, 0
      %p306 = por %p304, %p305
      %s308 = sadd.s32 %s307, 1
      %p311 = scmp.eq.s32.totalorder %s43, 1
      %p312 = scmp.ne.s32.totalorder %s307, %s309
      %p313 = scmp.eq.s32.totalorder %s43, 0
      %p314 = por %p312, %p313
      %p315 = scmp.ne.s32.totalorder %s307, %s309
      %p316 = scmp.eq.s32.totalorder %s48, 1
      %p317 = por %p315, %p316
      %p318 = scmp.ne.s32.totalorder %s309, %s310
      %p319 = scmp.eq.s32.totalorder %s48, 0
      %p320 = por %p318, %p319
      %p321 = scmp.ne.s32.totalorder %s309, %s310
      %p322 = scmp.eq.s32.totalorder %s49, 1
      %p323 = por %p321, %p322
      %p325 = scmp.ne.s32.totalorder %s310, %s324
      %p326 = scmp.eq.s32.totalorder %s49, 0
      %p327 = por %p325, %p326
      %s329 = sadd.s32 %s328, 1
      %p332 = scmp.eq.s32.totalorder %s43, 1
      %p333 = scmp.ne.s32.totalorder %s328, %s330
      %p334 = scmp.eq.s32.totalorder %s43, 0
      %p335 = por %p333, %p334
      %p336 = scmp.ne.s32.totalorder %s328, %s330
      %p337 = scmp.eq.s32.totalorder %s48, 1
      %p338 = por %p336, %p337
      %p339 = scmp.ne.s32.totalorder %s330, %s331
      %p340 = scmp.eq.s32.totalorder %s48, 0
      %p341 = por %p339, %p340
      %p342 = scmp.ne.s32.totalorder %s330, %s331
      %p343 = scmp.eq.s32.totalorder %s49, 1
      %p344 = por %p342, %p343
      %p346 = scmp.ne.s32.totalorder %s331, %s345
      %p347 = scmp.eq.s32.totalorder %s49, 0
      %p348 = por %p346, %p347
      %s350 = sadd.s32 %s349, 1
      %p353 = scmp.eq.s32.totalorder %s43, 1
      %p354 = scmp.ne.s32.totalorder %s349, %s351
      %p355 = scmp.eq.s32.totalorder %s43, 0
      %p356 = por %p354, %p355
      %p357 = scmp.ne.s32.totalorder %s349, %s351
      %p358 = scmp.eq.s32.totalorder %s48, 1
      %p359 = por %p357, %p358
      %p360 = scmp.ne.s32.totalorder %s351, %s352
      %p361 = scmp.eq.s32.totalorder %s48, 0
      %p362 = por %p360, %p361
      %p363 = scmp.ne.s32.totalorder %s351, %s352
      %p364 = scmp.eq.s32.totalorder %s49, 1
      %p365 = por %p363, %p364
      %p367 = scmp.ne.s32.totalorder %s352, %s366
      %p368 = scmp.eq.s32.totalorder %s49, 0
      %p369 = por %p367, %p368
      %s371 = sadd.s32 %s370, 1
      %p374 = scmp.eq.s32.totalorder %s43, 1
      %p375 = scmp.ne.s32.totalorder %s370, %s372
      %p376 = scmp.eq.s32.totalorder %s43, 0
      %p377 = por %p375, %p376
      %p378 = scmp.ne.s32.totalorder %s370, %s372
      %p379 = scmp.eq.s32.totalorder %s48, 1
      %p380 = por %p378, %p379
      %p381 = scmp.ne.s32.totalorder %s372, %s373
      %p382 = scmp.eq.s32.totalorder %s48, 0
      %p383 = por %p381, %p382
      %p384 = scmp.ne.s32.totalorder %s372, %s373
      %p385 = scmp.eq.s32.totalorder %s49, 1
      %p386 = por %p384, %p385
      %p388 = scmp.ne.s32.totalorder %s373, %s387
      %p389 = scmp.eq.s32.totalorder %s49, 0
      %p390 = por %p388, %p389
      %s392 = sadd.s32 %s391, 1
      %p395 = scmp.eq.s32.totalorder %s43, 1
      %p396 = scmp.ne.s32.totalorder %s391, %s393
      %p397 = scmp.eq.s32.totalorder %s43, 0
      %p398 = por %p396, %p397
      %p399 = scmp.ne.s32.totalorder %s391, %s393
      %p400 = scmp.eq.s32.totalorder %s48, 1
      %p401 = por %p399, %p400
      %p402 = scmp.ne.s32.totalorder %s393, %s394
      %p403 = scmp.eq.s32.totalorder %s48, 0
      %p404 = por %p402, %p403
      %p405 = scmp.ne.s32.totalorder %s393, %s394
      %p406 = scmp.eq.s32.totalorder %s49, 1
      %p407 = por %p405, %p406
      %p409 = scmp.ne.s32.totalorder %s394, %s408
      %p410 = scmp.eq.s32.totalorder %s49, 0
      %p411 = por %p409, %p410
      %s413 = sadd.s32 %s412, 1
      %p416 = scmp.eq.s32.totalorder %s43, 1
      %p417 = scmp.ne.s32.totalorder %s412, %s414
      %p418 = scmp.eq.s32.totalorder %s43, 0
      %p419 = por %p417, %p418
      %p420 = scmp.ne.s32.totalorder %s412, %s414
      %p421 = scmp.eq.s32.totalorder %s48, 1
      %p422 = por %p420, %p421
      %p423 = scmp.ne.s32.totalorder %s414, %s415
      %p424 = scmp.eq.s32.totalorder %s48, 0
      %p425 = por %p423, %p424
      %p426 = scmp.ne.s32.totalorder %s414, %s415
      %p427 = scmp.eq.s32.totalorder %s49, 1
      %p428 = por %p426, %p427
      %p430 = scmp.ne.s32.totalorder %s415, %s429
      %p431 = scmp.eq.s32.totalorder %s49, 0
      %p432 = por %p430, %p431
      %s433 = ssub.s32 %s43, %s50
      %p434 = scmp.eq.s32.totalorder %s433, 0
      %s436 = sadd.s32 %s435, 1
      %s437 = scalar_select %p434, %s435, %s436
      %p440 = pneg %p434
      %p441 = scmp.eq.s32.totalorder %s43, 1
      %p442 = por %p440, %p441
      %p443 = scmp.ne.s32.totalorder %s435, %s438
      %p444 = scmp.eq.s32.totalorder %s43, 0
      %p445 = por %p443, %p444
      %p446 = scmp.ne.s32.totalorder %s435, %s438
      %p447 = scmp.eq.s32.totalorder %s48, 1
      %p448 = por %p446, %p447
      %p449 = scmp.ne.s32.totalorder %s438, %s439
      %p450 = scmp.eq.s32.totalorder %s48, 0
      %p451 = por %p449, %p450
      %p452 = scmp.ne.s32.totalorder %s438, %s439
      %p453 = scmp.eq.s32.totalorder %s49, 1
      %p454 = por %p452, %p453
      %p456 = scmp.ne.s32.totalorder %s439, %s455
      %p457 = scmp.eq.s32.totalorder %s49, 0
      %p458 = por %p456, %p457
      %s459 = ssub.s32 %s43, %s50
      %p460 = scmp.eq.s32.totalorder %s459, 0
      %s462 = sadd.s32 %s461, 1
      %s463 = scalar_select %p460, %s461, %s462
      %p466 = pneg %p460
      %p467 = scmp.eq.s32.totalorder %s43, 1
      %p468 = por %p466, %p467
      %p469 = scmp.ne.s32.totalorder %s461, %s464
      %p470 = scmp.eq.s32.totalorder %s43, 0
      %p471 = por %p469, %p470
      %p472 = scmp.ne.s32.totalorder %s461, %s464
      %p473 = scmp.eq.s32.totalorder %s48, 1
      %p474 = por %p472, %p473
      %p475 = scmp.ne.s32.totalorder %s464, %s465
      %p476 = scmp.eq.s32.totalorder %s48, 0
      %p477 = por %p475, %p476
      %p478 = scmp.ne.s32.totalorder %s464, %s465
      %p479 = scmp.eq.s32.totalorder %s49, 1
      %p480 = por %p478, %p479
      %p482 = scmp.ne.s32.totalorder %s465, %s481
      %p483 = scmp.eq.s32.totalorder %s49, 0
      %p484 = por %p482, %p483
      %p485 = scmp.le.s32.totalorder 1, %s43
      %p486 = scmp.lt.s32.totalorder %s43, 3
      %p487 = pnand %p485, %p486
      %p488 = pneg %p487
      // Predicated region
      $region9: #{tpu_custom_call.1} parent=5 // pred_check
        _
      $region10: #{tpu_custom_call.1} parent=5 // pred_check_branch
        %490 = sbr.rel (%p487) target = $region12
      $region11: #{tpu_custom_call.1} parent=5 // pred_region
        %s491 = ssub.s32 %s43, 1
        // Predicated region
        $region13: #{tpu_custom_call.1} parent=11 // pred_check
          %p492 = pneg %p194
        $region14: #{tpu_custom_call.1} parent=11 // pred_check_branch
          %494 = sbr.rel (%p492) target = $region16
        $region15: #{tpu_custom_call.1} parent=11 // pred_region
          %s496 = ssub.s32 256, 256
          %497 = vsyncadd [#allocation11], %s496
          %s498 = sshll.u32 [#allocation12], 4
          %s499 = int_to_ptr.vmem [resolvable:$true] %s498
          %504 = dma.hbm_to_vmem [thread:$0]  %s5, 256, %s499, [#allocation11], 64, 64, 4
        $region16: #{tpu_custom_call.1} parent=11 // pred_fallthru
          _
        // Predicated region
        $region17: #{tpu_custom_call.1} parent=11 // pred_check
          %p505 = pneg %p215
        $region18: #{tpu_custom_call.1} parent=11 // pred_check_branch
          %507 = sbr.rel (%p505) target = $region20
        $region19: #{tpu_custom_call.1} parent=11 // pred_region
          %s509 = ssub.s32 256, 256
          %510 = vsyncadd [#allocation14], %s509
          %s511 = sshll.u32 [#allocation13], 4
          %s512 = int_to_ptr.vmem [resolvable:$true] %s511
          %517 = dma.hbm_to_vmem [thread:$0]  %s6, 256, %s512, [#allocation14], 64, 64, 4
        $region20: #{tpu_custom_call.1} parent=11 // pred_fallthru
          _
        // Predicated region
        $region21: #{tpu_custom_call.1} parent=11 // pred_check
          %p518 = pneg %p236
        $region22: #{tpu_custom_call.1} parent=11 // pred_check_branch
          %520 = sbr.rel (%p518) target = $region24
        $region23: #{tpu_custom_call.1} parent=11 // pred_region
          %s522 = ssub.s32 256, 256
          %523 = vsyncadd [#allocation14], %s522
          %s524 = sshll.u32 [#allocation15], 4
          %s525 = int_to_ptr.vmem [resolvable:$true] %s524
          %530 = dma.hbm_to_vmem [thread:$0]  %s7, 256, %s525, [#allocation14], 64, 64, 4
        $region24: #{tpu_custom_call.1} parent=11 // pred_fallthru
          _
        // Predicated region
        $region25: #{tpu_custom_call.1} parent=11 // pred_check
          %p531 = pneg %p257
        $region26: #{tpu_custom_call.1} parent=11 // pred_check_branch
          %533 = sbr.rel (%p531) target = $region28
        $region27: #{tpu_custom_call.1} parent=11 // pred_region
          %s535 = ssub.s32 256, 256
          %536 = vsyncadd [#allocation17], %s535
          %s537 = sshll.u32 [#allocation16], 4
          %s538 = int_to_ptr.vmem [resolvable:$true] %s537
          %543 = dma.hbm_to_vmem [thread:$0]  %s8, 256, %s538, [#allocation17], 64, 64, 4
        $region28: #{tpu_custom_call.1} parent=11 // pred_fallthru
          _
        // Predicated region
        $region29: #{tpu_custom_call.1} parent=11 // pred_check
          %p544 = pneg %p278
        $region30: #{tpu_custom_call.1} parent=11 // pred_check_branch
          %546 = sbr.rel (%p544) target = $region32
        $region31: #{tpu_custom_call.1} parent=11 // pred_region
          _
        $region32: #{tpu_custom_call.1} parent=11 // pred_fallthru
          _
        // Predicated region
        $region33: #{tpu_custom_call.1} parent=11 // pred_check
          %p547 = pneg %p299
        $region34: #{tpu_custom_call.1} parent=11 // pred_check_branch
          %549 = sbr.rel (%p547) target = $region36
        $region35: #{tpu_custom_call.1} parent=11 // pred_region
          _
        $region36: #{tpu_custom_call.1} parent=11 // pred_fallthru
          _
        // Predicated region
        $region37: #{tpu_custom_call.1} parent=11 // pred_check
          %p550 = pneg %p320
        $region38: #{tpu_custom_call.1} parent=11 // pred_check_branch
          %552 = sbr.rel (%p550) target = $region40
        $region39: #{tpu_custom_call.1} parent=11 // pred_region
          %s554 = ssub.s32 256, 256
          %555 = vsyncadd [#allocation17], %s554
          %s556 = sshll.u32 [#allocation18], 4
          %s557 = int_to_ptr.vmem [resolvable:$true] %s556
          %562 = dma.hbm_to_vmem [thread:$0]  %s11, 256, %s557, [#allocation17], 64, 64, 4
        $region40: #{tpu_custom_call.1} parent=11 // pred_fallthru
          _
        // Predicated region
        $region41: #{tpu_custom_call.1} parent=11 // pred_check
          %p563 = pneg %p341
        $region42: #{tpu_custom_call.1} parent=11 // pred_check_branch
          %565 = sbr.rel (%p563) target = $region44
        $region43: #{tpu_custom_call.1} parent=11 // pred_region
          %s567 = ssub.s32 256, 256
          %568 = vsyncadd [#allocation20], %s567
          %s569 = sshll.u32 [#allocation19], 4
          %s570 = int_to_ptr.vmem [resolvable:$true] %s569
          %575 = dma.hbm_to_vmem [thread:$0]  %s12, 256, %s570, [#allocation20], 64, 64, 4
        $region44: #{tpu_custom_call.1} parent=11 // pred_fallthru
          _
        // Predicated region
        $region45: #{tpu_custom_call.1} parent=11 // pred_check
          %p576 = pneg %p362
        $region46: #{tpu_custom_call.1} parent=11 // pred_check_branch
          %578 = sbr.rel (%p576) target = $region48
        $region47: #{tpu_custom_call.1} parent=11 // pred_region
          _
        $region48: #{tpu_custom_call.1} parent=11 // pred_fallthru
          _
        // Predicated region
        $region49: #{tpu_custom_call.1} parent=11 // pred_check
          %p579 = pneg %p383
        $region50: #{tpu_custom_call.1} parent=11 // pred_check_branch
          %581 = sbr.rel (%p579) target = $region52
        $region51: #{tpu_custom_call.1} parent=11 // pred_region
          _
        $region52: #{tpu_custom_call.1} parent=11 // pred_fallthru
          _
        // Predicated region
        $region53: #{tpu_custom_call.1} parent=11 // pred_check
          %p582 = pneg %p404
        $region54: #{tpu_custom_call.1} parent=11 // pred_check_branch
          %584 = sbr.rel (%p582) target = $region56
        $region55: #{tpu_custom_call.1} parent=11 // pred_region
          _
        $region56: #{tpu_custom_call.1} parent=11 // pred_fallthru
          _
        // Predicated region
        $region57: #{tpu_custom_call.1} parent=11 // pred_check
          %p585 = pneg %p425
        $region58: #{tpu_custom_call.1} parent=11 // pred_check_branch
          %587 = sbr.rel (%p585) target = $region60
        $region59: #{tpu_custom_call.1} parent=11 // pred_region
          _
        $region60: #{tpu_custom_call.1} parent=11 // pred_fallthru
          _
      $region12: #{tpu_custom_call.1} parent=5 // pred_fallthru
        _
      %p588 = scmp.lt.s32.totalorder %s43, 2
      // Predicated region
      $region61: #{tpu_custom_call.1} parent=5 // pred_check
        %p589 = pneg %p588
      $region62: #{tpu_custom_call.1} parent=5 // pred_check_branch
        %591 = sbr.rel (%p589) target = $region64
      $region63: #{tpu_custom_call.1} parent=5 // pred_region
        // Predicated region
        $region65: #{tpu_custom_call.1} parent=63 // pred_check
          %p592 = pneg %p63
        $region66: #{tpu_custom_call.1} parent=63 // pred_check_branch
          %594 = sbr.rel (%p592) target = $region68
        $region67: #{tpu_custom_call.1} parent=63 // pred_region
          %s595 = sand.u32 %s53, 1
          %s596 = scalar_lea.sflag [#allocation5], %s595
          %s597 = sand.u32 %s53, 1
          %s598 = smul.addr %s597, 4
          %s599 = scalar_lea.vmem [#allocation4], %s598
          %s601 = ssub.s32 64, 64
          %602 = vsyncadd %s596, %s601
          %s603 = smul.addr %s43, 64
          %s604 = scalar_lea.hbm %s0, %s603
          %s606 = sshll.u32 %s599, 4
          %s607 = int_to_ptr.vmem [resolvable:$true] %s606
          %609 = dma.hbm_to_vmem [thread:$0]  %s604, 64, %s607, %s596
        $region68: #{tpu_custom_call.1} parent=63 // pred_fallthru
          _
        // Predicated region
        $region69: #{tpu_custom_call.1} parent=63 // pred_check
          %p610 = pneg %p89
        $region70: #{tpu_custom_call.1} parent=63 // pred_check_branch
          %612 = sbr.rel (%p610) target = $region72
        $region71: #{tpu_custom_call.1} parent=63 // pred_region
          %s613 = sand.u32 %s43, 1
          %s614 = scalar_lea.sflag [#allocation8], %s613
          %s615 = sand.u32 %s79, 1
          %s616 = smul.addr %s615, 4
          %s617 = scalar_lea.vmem [#allocation7], %s616
          %s619 = ssub.s32 64, 64
          %620 = vsyncadd %s614, %s619
          %s621 = smul.addr %s43, 64
          %s622 = scalar_lea.hbm %s1, %s621
          %s624 = sshll.u32 %s617, 4
          %s625 = int_to_ptr.vmem [resolvable:$true] %s624
          %627 = dma.hbm_to_vmem [thread:$0]  %s622, 64, %s625, %s614
        $region72: #{tpu_custom_call.1} parent=63 // pred_fallthru
          _
        // Predicated region
        $region73: #{tpu_custom_call.1} parent=63 // pred_check
          %p628 = pneg %p115
        $region74: #{tpu_custom_call.1} parent=63 // pred_check_branch
          %630 = sbr.rel (%p628) target = $region76
        $region75: #{tpu_custom_call.1} parent=63 // pred_region
          %p631 = scmp.lt.s32.totalorder %s43, 1
          %s632 = scalar_select %p631, %s43, 1
          %s633 = smul.addr %s632, 2
          %s634 = smul.addr %s633, 4
          %s635 = scalar_lea.vmem %s2, %s634
        $region76: #{tpu_custom_call.1} parent=63 // pred_fallthru
          _
        // Predicated region
        $region77: #{tpu_custom_call.1} parent=63 // pred_check
          %p636 = pneg %p141
        $region78: #{tpu_custom_call.1} parent=63 // pred_check_branch
          %638 = sbr.rel (%p636) target = $region80
        $region79: #{tpu_custom_call.1} parent=63 // pred_region
          %s639 = sand.u32 %s43, 1
          %s640 = scalar_lea.sflag [#allocation8], %s639
          %s641 = sand.u32 %s131, 1
          %s642 = smul.addr %s641, 8
          %s643 = scalar_lea.vmem [#allocation9], %s642
          %s645 = ssub.s32 128, 128
          %646 = vsyncadd %s640, %s645
          %s647 = smul.addr %s43, 2
          %s648 = smul.addr %s647, 64
          %s649 = scalar_lea.hbm %s3, %s648
          %s650 = sshll.u32 %s643, 4
          %s651 = int_to_ptr.vmem [resolvable:$true] %s650
          %656 = dma.hbm_to_vmem [thread:$0]  %s649, 128, %s651, %s640, 64, 64, 4
        $region80: #{tpu_custom_call.1} parent=63 // pred_fallthru
          _
        // Predicated region
        $region81: #{tpu_custom_call.1} parent=63 // pred_check
          %p657 = pneg %p167
        $region82: #{tpu_custom_call.1} parent=63 // pred_check_branch
          %659 = sbr.rel (%p657) target = $region84
        $region83: #{tpu_custom_call.1} parent=63 // pred_region
          %s660 = sand.u32 %s43, 1
          %s661 = scalar_lea.sflag [#allocation11], %s660
          %s662 = sand.u32 %s157, 1
          %s663 = smul.addr %s662, 4
          %s664 = scalar_lea.vmem [#allocation10], %s663
          %s666 = ssub.s32 64, 64
          %667 = vsyncadd %s661, %s666
          %s668 = smul.addr %s43, 64
          %s669 = scalar_lea.hbm %s4, %s668
          %s671 = sshll.u32 %s664, 4
          %s672 = int_to_ptr.vmem [resolvable:$true] %s671
          %674 = dma.hbm_to_vmem [thread:$0]  %s669, 64, %s672, %s661
        $region84: #{tpu_custom_call.1} parent=63 // pred_fallthru
          _
      $region64: #{tpu_custom_call.1} parent=5 // pred_fallthru
        _
      %p675 = scmp.le.s32.totalorder 1, %s43
      %p676 = scmp.lt.s32.totalorder %s43, 3
      %p677 = pnand %p675, %p676
      %p678 = pneg %p677
      // Predicated region
      $region85: #{tpu_custom_call.1} parent=5 // pred_check
        _
      $region86: #{tpu_custom_call.1} parent=5 // pred_check_branch
        %680 = sbr.rel (%p677) target = $region88
      $region87: #{tpu_custom_call.1} parent=5 // pred_region
        %s681 = ssub.s32 %s43, 1
        %s682 = sand.u32 %s56, 1
        %s683 = scalar_lea.sflag [#allocation5], %s682
        %s684 = sand.u32 %s56, 1
        %s685 = smul.addr %s684, 4
        %s686 = scalar_lea.vmem [#allocation4], %s685
        // Predicated region
        $region89: #{tpu_custom_call.1} parent=87 // pred_check
          %p687 = pneg %p69
        $region90: #{tpu_custom_call.1} parent=87 // pred_check_branch
          %689 = sbr.rel (%p687) target = $region92
        $region91: #{tpu_custom_call.1} parent=87 // pred_region
          %690 = dma.done %s683, 64
        $region92: #{tpu_custom_call.1} parent=87 // pred_fallthru
          _
        %s691 = sand.u32 %s48, 1
        %s692 = scalar_lea.sflag [#allocation8], %s691
        %s693 = sand.u32 %s82, 1
        %s694 = smul.addr %s693, 4
        %s695 = scalar_lea.vmem [#allocation7], %s694
        // Predicated region
        $region93: #{tpu_custom_call.1} parent=87 // pred_check
          %p696 = pneg %p95
        $region94: #{tpu_custom_call.1} parent=87 // pred_check_branch
          %698 = sbr.rel (%p696) target = $region96
        $region95: #{tpu_custom_call.1} parent=87 // pred_region
          %699 = dma.done %s692, 64
        $region96: #{tpu_custom_call.1} parent=87 // pred_fallthru
          _
        %s700 = sand.u32 %s48, 1
        %s701 = scalar_lea.sflag [#allocation8], %s700
        %s702 = sand.u32 %s134, 1
        %s703 = smul.addr %s702, 8
        %s704 = scalar_lea.vmem [#allocation9], %s703
        // Predicated region
        $region97: #{tpu_custom_call.1} parent=87 // pred_check
          %p705 = pneg %p147
        $region98: #{tpu_custom_call.1} parent=87 // pred_check_branch
          %707 = sbr.rel (%p705) target = $region100
        $region99: #{tpu_custom_call.1} parent=87 // pred_region
          %708 = dma.done %s701, 128
        $region100: #{tpu_custom_call.1} parent=87 // pred_fallthru
          _
        %s709 = sand.u32 %s48, 1
        %s710 = scalar_lea.sflag [#allocation11], %s709
        %s711 = sand.u32 %s160, 1
        %s712 = smul.addr %s711, 4
        %s713 = scalar_lea.vmem [#allocation10], %s712
        // Predicated region
        $region101: #{tpu_custom_call.1} parent=87 // pred_check
          %p714 = pneg %p173
        $region102: #{tpu_custom_call.1} parent=87 // pred_check_branch
          %716 = sbr.rel (%p714) target = $region104
        $region103: #{tpu_custom_call.1} parent=87 // pred_region
          %717 = dma.done %s710, 64
        $region104: #{tpu_custom_call.1} parent=87 // pred_fallthru
          _
        // Predicated region
        $region105: #{tpu_custom_call.1} parent=87 // pred_check
          %p718 = pneg %p194
        $region106: #{tpu_custom_call.1} parent=87 // pred_check_branch
          %720 = sbr.rel (%p718) target = $region108
        $region107: #{tpu_custom_call.1} parent=87 // pred_region
          %721 = dma.done [#allocation11], 256
        $region108: #{tpu_custom_call.1} parent=87 // pred_fallthru
          _
        // Predicated region
        $region109: #{tpu_custom_call.1} parent=87 // pred_check
          %p722 = pneg %p215
        $region110: #{tpu_custom_call.1} parent=87 // pred_check_branch
          %724 = sbr.rel (%p722) target = $region112
        $region111: #{tpu_custom_call.1} parent=87 // pred_region
          %725 = dma.done [#allocation14], 256
        $region112: #{tpu_custom_call.1} parent=87 // pred_fallthru
          _
        // Predicated region
        $region113: #{tpu_custom_call.1} parent=87 // pred_check
          %p726 = pneg %p236
        $region114: #{tpu_custom_call.1} parent=87 // pred_check_branch
          %728 = sbr.rel (%p726) target = $region116
        $region115: #{tpu_custom_call.1} parent=87 // pred_region
          %729 = dma.done [#allocation14], 256
        $region116: #{tpu_custom_call.1} parent=87 // pred_fallthru
          _
        // Predicated region
        $region117: #{tpu_custom_call.1} parent=87 // pred_check
          %p730 = pneg %p257
        $region118: #{tpu_custom_call.1} parent=87 // pred_check_branch
          %732 = sbr.rel (%p730) target = $region120
        $region119: #{tpu_custom_call.1} parent=87 // pred_region
          %733 = dma.done [#allocation17], 256
        $region120: #{tpu_custom_call.1} parent=87 // pred_fallthru
          _
        // Predicated region
        $region121: #{tpu_custom_call.1} parent=87 // pred_check
          %p734 = pneg %p320
        $region122: #{tpu_custom_call.1} parent=87 // pred_check_branch
          %736 = sbr.rel (%p734) target = $region124
        $region123: #{tpu_custom_call.1} parent=87 // pred_region
          %737 = dma.done [#allocation17], 256
        $region124: #{tpu_custom_call.1} parent=87 // pred_fallthru
          _
        // Predicated region
        $region125: #{tpu_custom_call.1} parent=87 // pred_check
          %p738 = pneg %p341
        $region126: #{tpu_custom_call.1} parent=87 // pred_check_branch
          %740 = sbr.rel (%p738) target = $region128
        $region127: #{tpu_custom_call.1} parent=87 // pred_region
          %741 = dma.done [#allocation20], 256
        $region128: #{tpu_custom_call.1} parent=87 // pred_fallthru
          _
        %s742 = sand.u32 %s56, 1
        %s743 = scalar_lea.sflag [#allocation5], %s742
        %s744 = sand.u32 %s56, 1
        %s745 = smul.addr %s744, 4
        %s746 = scalar_lea.vmem [#allocation4], %s745
        %p747 = pneg %p69
        %p748 = pneg %p66
        %s749 = sand.u32 %s48, 1
        %s750 = scalar_lea.sflag [#allocation8], %s749
        %s751 = sand.u32 %s82, 1
        %s752 = smul.addr %s751, 4
        %s753 = scalar_lea.vmem [#allocation7], %s752
        %p754 = pneg %p95
        %p755 = pneg %p92
        %p756 = scmp.lt.s32.totalorder %s48, 1
        %s757 = scalar_select %p756, %s48, 1
        %s758 = smul.addr %s757, 2
        %s759 = smul.addr %s758, 4
        %s760 = scalar_lea.vmem %s2, %s759
        %p761 = pneg %p121
        %p762 = pneg %p118
        %s763 = sand.u32 %s48, 1
        %s764 = scalar_lea.sflag [#allocation8], %s763
        %s765 = sand.u32 %s134, 1
        %s766 = smul.addr %s765, 8
        %s767 = scalar_lea.vmem [#allocation9], %s766
        %p768 = pneg %p147
        %p769 = pneg %p144
        %s770 = sand.u32 %s48, 1
        %s771 = scalar_lea.sflag [#allocation11], %s770
        %s772 = sand.u32 %s160, 1
        %s773 = smul.addr %s772, 4
        %s774 = scalar_lea.vmem [#allocation10], %s773
        %p775 = pneg %p173
        %p776 = pneg %p170
        %p777 = pneg %p194
        %p778 = pneg %p191
        %p779 = pneg %p215
        %p780 = pneg %p212
        %p781 = pneg %p236
        %p782 = pneg %p233
        %p783 = pneg %p257
        %p784 = pneg %p254
        %p785 = pneg %p278
        %p786 = pneg %p275
        %p787 = pneg %p299
        %p788 = pneg %p296
        %p789 = pneg %p320
        %p790 = pneg %p317
        %p791 = pneg %p341
        %p792 = pneg %p338
        %p793 = pneg %p362
        %p794 = pneg %p359
        %p795 = pneg %p383
        %p796 = pneg %p380
        %p797 = pneg %p404
        %p798 = pneg %p401
        %p799 = pneg %p425
        %p800 = pneg %p422
        %p801 = pneg %p451
        %p802 = pneg %p448
        %s803 = sand.u32 %s438, 1
        %s804 = scalar_lea.sflag [#allocation6], %s803
        %s805 = sand.u32 %s438, 1
        %s806 = smul.addr %s805, 8
        %s807 = scalar_lea.vmem [#allocation21], %s806
        %p808 = pneg %p477
        %p809 = pneg %p474
        %s810 = sand.u32 %s464, 1
        %s811 = scalar_lea.sflag [#allocation23], %s810
        %s812 = sand.u32 %s464, 1
        %s813 = smul.addr %s812, 8
        %s814 = scalar_lea.vmem [#allocation22], %s813
        %p815 = scmp.lt.s32.totalorder %s48, 1
        %s816 = scalar_select %p815, %s48, 1
        %s817 = smul.addr %s816, 2
        %s818 = smul.addr %s817, 4
        %s819 = scalar_lea.vmem %s2, %s818
        %v821 = vld [vmem:[%s686] sm:$0xf]
        %v822 = vld [vmem:[%s819] sm:$0xf]
        %v823 = vld [vmem:[%s819 + $0x4] sm:$0xf]
        %v824 = vunpack.c.l.bf16 %v821
        %v825 = vld [vmem:[%s16] sm:$0xff]
        %v826 = vld [vmem:[%s16 + $0x8] sm:$0x1]
        %v827 = vld [vmem:[%s14] sm:$0x3]
        %v828 = vld [vmem:[%s695] sm:$0xf]
        %v829 = vadd.bf16 %v821, %v828
        %v830 = vld [vmem:[#allocation12] sm:$0xf]
        %v831 = vld [vmem:[#allocation12 + $0x4] sm:$0xf]
        %v832 = vld [vmem:[#allocation12 + $0x8] sm:$0xf]
        %v833 = vld [vmem:[#allocation12 + $0xc] sm:$0xf]
        %v834 = vlaneseq
        %v835 = vshrl.u32 %v834, 7
        %v836 = vsub.s32 0, %v835
        %v837 = vrot.slane %v827, %v836
        %v842 = vunpack.c.l.b16 %v830
        %v843 = vunpack.c.l.b16 %v831
        %v844 = vunpack.c.l.b16 %v832
        %v845 = vunpack.c.l.b16 %v833
        %v846 = vpack.c.b16 %v843, %v842
        %v847 = vpack.c.b16 %v845, %v844
        %vm850 = vcmask 261120
        %v852 = vsel %vm850, %v829, 0
        %854 = vmatprep.subr.bf16.mxu0 0
        %855 = vmatpush1.bf16.msra.mxu0 %v846
        %856 = vmatprep.subr.bf16.mxu0 0
        %857 = vmatpush1.bf16.msra.mxu0 %v847
        %858 = vmatprep.subr.bf16.mxu0 0
        %859 = vmatpush1.bf16.msra.mxu0 0
        %860 = vmatprep.subr.bf16.mxu0 0
        %861 = vmatpush1.bf16.msra.mxu0 0
        %862 = vmatprep.subr.bf16.mxu0 0
        %863 = vmatpush1.bf16.msra.mxu0 0
        %864 = vmatprep.subr.bf16.mxu0 0
        %865 = vmatpush1.bf16.msra.mxu0 0
        %866 = vmatprep.subr.bf16.mxu0 0
        %867 = vmatpush1.bf16.msra.mxu0 0
        %868 = vmatprep.subr.bf16.mxu0 0
        %869 = vmatpush1.bf16.msra.mxu0 0
        %870 = vmatprep.subr.bf16.mxu0 0
        %871 = vmatpush1.bf16.msra.mxu0 0
        %872 = vmatprep.subr.bf16.mxu0 0
        %873 = vmatpush1.bf16.msra.mxu0 0
        %874 = vmatprep.subr.bf16.mxu0 0
        %875 = vmatpush1.bf16.msra.mxu0 0
        %876 = vmatprep.subr.bf16.mxu0 0
        %877 = vmatpush1.bf16.msra.mxu0 0
        %878 = vmatprep.subr.bf16.mxu0 0
        %879 = vmatpush1.bf16.msra.mxu0 0
        %880 = vmatprep.subr.bf16.mxu0 0
        %881 = vmatpush1.bf16.msra.mxu0 0
        %882 = vmatprep.subr.bf16.mxu0 0
        %883 = vmatpush1.bf16.msra.mxu0 0
        %884 = vmatprep.subr.bf16.mxu0 0
        %885 = vmatpush1.bf16.msra.mxu0 0
        %886 = vmatprep.mubr.bf16.mxu0 0
        %887 = vmatmul.mubr.bf16.gmra.mrb[0].mxu0 %v852
        %v888 = vpop.f32.mrb[0].mxu0
        %v889 = vadd.f32 %v837, %v888
        %v890 = vpop.f32.mrb[0].mxu0
        %v891 = vpop.f32.mrb[0].mxu0
        %v892 = vpop.f32.mrb[0].mxu0
        %893 = vdwg.mxu0
        %v894 = vld [vmem:[#allocation13] sm:$0xf]
        %v895 = vld [vmem:[#allocation13 + $0x4] sm:$0xf]
        %v896 = vld [vmem:[#allocation13 + $0x8] sm:$0xf]
        %v897 = vld [vmem:[#allocation13 + $0xc] sm:$0xf]
        %v902 = vunpack.c.l.b16 %v894
        %v903 = vunpack.c.l.b16 %v895
        %v904 = vunpack.c.l.b16 %v896
        %v905 = vunpack.c.l.b16 %v897
        %v906 = vpack.c.b16 %v903, %v902
        %v907 = vpack.c.b16 %v905, %v904
        %911 = vrot.lane.b32.xlu0 %v837, 64
        %v912 = vpop.permute.xlu0 %911
        %v915 = vsel %vm850, %v821, 0
        %917 = vmatprep.subr.bf16.mxu0 0
        %918 = vmatpush1.bf16.msra.mxu0 %v906
        %919 = vmatprep.subr.bf16.mxu0 0
        %920 = vmatpush1.bf16.msra.mxu0 %v907
        %921 = vmatprep.subr.bf16.mxu0 0
        %922 = vmatpush1.bf16.msra.mxu0 0
        %923 = vmatprep.subr.bf16.mxu0 0
        %924 = vmatpush1.bf16.msra.mxu0 0
        %925 = vmatprep.subr.bf16.mxu0 0
        %926 = vmatpush1.bf16.msra.mxu0 0
        %927 = vmatprep.subr.bf16.mxu0 0
        %928 = vmatpush1.bf16.msra.mxu0 0
        %929 = vmatprep.subr.bf16.mxu0 0
        %930 = vmatpush1.bf16.msra.mxu0 0
        %931 = vmatprep.subr.bf16.mxu0 0
        %932 = vmatpush1.bf16.msra.mxu0 0
        %933 = vmatprep.subr.bf16.mxu0 0
        %934 = vmatpush1.bf16.msra.mxu0 0
        %935 = vmatprep.subr.bf16.mxu0 0
        %936 = vmatpush1.bf16.msra.mxu0 0
        %937 = vmatprep.subr.bf16.mxu0 0
        %938 = vmatpush1.bf16.msra.mxu0 0
        %939 = vmatprep.subr.bf16.mxu0 0
        %940 = vmatpush1.bf16.msra.mxu0 0
        %941 = vmatprep.subr.bf16.mxu0 0
        %942 = vmatpush1.bf16.msra.mxu0 0
        %943 = vmatprep.subr.bf16.mxu0 0
        %944 = vmatpush1.bf16.msra.mxu0 0
        %945 = vmatprep.subr.bf16.mxu0 0
        %946 = vmatpush1.bf16.msra.mxu0 0
        %947 = vmatprep.subr.bf16.mxu0 0
        %948 = vmatpush1.bf16.msra.mxu0 0
        %949 = vmatprep.mubr.bf16.mxu0 0
        %950 = vmatmul.mubr.bf16.gmra.mrb[0].mxu0 %v915
        %v951 = vpop.f32.mrb[0].mxu0
        %v952 = vadd.f32 %v912, %v951
        %v953 = vpop.f32.mrb[0].mxu0
        %v954 = vpop.f32.mrb[0].mxu0
        %v955 = vpop.f32.mrb[0].mxu0
        %956 = vdwg.mxu0
        %v957 = vpack.c.bf16 %v889, %v889
        %v958 = vpack.c.bf16 %v952, %v952
        %960 = vrot.lane.b32.xlu0 %v957, 120
        %v961 = vpop.permute.xlu0 %960
        %962 = vrot.lane.b32.xlu0 %v957, 112
        %v963 = vpop.permute.xlu0 %962
        %964 = vrot.lane.b32.xlu0 %v957, 104
        %v965 = vpop.permute.xlu0 %964
        %967 = vrot.lane.b32.xlu0 %v958, 120
        %v968 = vpop.permute.xlu0 %967
        %969 = vrot.lane.b32.xlu0 %v958, 112
        %v970 = vpop.permute.xlu0 %969
        %971 = vrot.lane.b32.xlu0 %v958, 104
        %v972 = vpop.permute.xlu0 %971
        %973 = vrot.lane.b32.xlu0 %v957, 96
        %v974 = vpop.permute.xlu0 %973
        %vm975 = vcmask 64512
        %v977 = vsel %vm975, %v957, 0
        %v980 = vsel %vm975, %v974, 0
        %982 = vmatprep.subr.bf16.mxu0 0
        %983 = vmatpush1.bf16.xpose.msra.mxu0 %v980
        %984 = vmatprep.subr.bf16.mxu0 0
        %985 = vmatpush1.bf16.xpose.msra.mxu0 0
        %986 = vmatprep.subr.bf16.mxu0 0
        %987 = vmatpush1.bf16.xpose.msra.mxu0 0
        %988 = vmatprep.subr.bf16.mxu0 0
        %989 = vmatpush1.bf16.xpose.msra.mxu0 0
        %990 = vmatprep.subr.bf16.mxu0 0
        %991 = vmatpush1.bf16.xpose.msra.mxu0 0
        %992 = vmatprep.subr.bf16.mxu0 0
        %993 = vmatpush1.bf16.xpose.msra.mxu0 0
        %994 = vmatprep.subr.bf16.mxu0 0
        %995 = vmatpush1.bf16.xpose.msra.mxu0 0
        %996 = vmatprep.subr.bf16.mxu0 0
        %997 = vmatpush1.bf16.xpose.msra.mxu0 0
        %998 = vmatprep.subr.bf16.mxu0 0
        %999 = vmatpush1.bf16.xpose.msra.mxu0 0
        %1000 = vmatprep.subr.bf16.mxu0 0
        %1001 = vmatpush1.bf16.xpose.msra.mxu0 0
        %1002 = vmatprep.subr.bf16.mxu0 0
        %1003 = vmatpush1.bf16.xpose.msra.mxu0 0
        %1004 = vmatprep.subr.bf16.mxu0 0
        %1005 = vmatpush1.bf16.xpose.msra.mxu0 0
        %1006 = vmatprep.subr.bf16.mxu0 0
        %1007 = vmatpush1.bf16.xpose.msra.mxu0 0
        %1008 = vmatprep.subr.bf16.mxu0 0
        %1009 = vmatpush1.bf16.xpose.msra.mxu0 0
        %1010 = vmatprep.subr.bf16.mxu0 0
        %1011 = vmatpush1.bf16.xpose.msra.mxu0 0
        %1012 = vmatprep.subr.bf16.mxu0 0
        %1013 = vmatpush1.bf16.xpose.msra.mxu0 0
        %1014 = vmatprep.mubr.bf16.mxu0 0
        %1015 = vmatmul.mubr.bf16.gmra.mrb[0].mxu0 %v977
        %v1016 = vpop.f32.mrb[0].mxu0
        %v1017 = vadd.f32 0.0, %v1016
        %v1018 = vpop.f32.mrb[0].mxu0
        %v1019 = vpop.f32.mrb[0].mxu0
        %v1020 = vpop.f32.mrb[0].mxu0
        %1021 = vdwg.mxu0
        %1022 = vrot.lane.b32.xlu0 %v961, 96
        %v1023 = vpop.permute.xlu0 %1022
        %v1025 = vsel %vm975, %v961, 0
        %v1028 = vsel %vm975, %v1023, 0
        %1030 = vmatprep.subr.bf16.mxu0 0
        %1031 = vmatpush1.bf16.xpose.msra.mxu0 %v1028
        %1032 = vmatprep.subr.bf16.mxu0 0
        %1033 = vmatpush1.bf16.xpose.msra.mxu0 0
        %1034 = vmatprep.subr.bf16.mxu0 0
        %1035 = vmatpush1.bf16.xpose.msra.mxu0 0
        %1036 = vmatprep.subr.bf16.mxu0 0
        %1037 = vmatpush1.bf16.xpose.msra.mxu0 0
        %1038 = vmatprep.subr.bf16.mxu0 0
        %1039 = vmatpush1.bf16.xpose.msra.mxu0 0
        %1040 = vmatprep.subr.bf16.mxu0 0
        %1041 = vmatpush1.bf16.xpose.msra.mxu0 0
        %1042 = vmatprep.subr.bf16.mxu0 0
        %1043 = vmatpush1.bf16.xpose.msra.mxu0 0
        %1044 = vmatprep.subr.bf16.mxu0 0
        %1045 = vmatpush1.bf16.xpose.msra.mxu0 0
        %1046 = vmatprep.subr.bf16.mxu0 0
        %1047 = vmatpush1.bf16.xpose.msra.mxu0 0
        %1048 = vmatprep.subr.bf16.mxu0 0
        %1049 = vmatpush1.bf16.xpose.msra.mxu0 0
        %1050 = vmatprep.subr.bf16.mxu0 0
        %1051 = vmatpush1.bf16.xpose.msra.mxu0 0
        %1052 = vmatprep.subr.bf16.mxu0 0
        %1053 = vmatpush1.bf16.xpose.msra.mxu0 0
        %1054 = vmatprep.subr.bf16.mxu0 0
        %1055 = vmatpush1.bf16.xpose.msra.mxu0 0
        %1056 = vmatprep.subr.bf16.mxu0 0
        %1057 = vmatpush1.bf16.xpose.msra.mxu0 0
        %1058 = vmatprep.subr.bf16.mxu0 0
        %1059 = vmatpush1.bf16.xpose.msra.mxu0 0
        %1060 = vmatprep.subr.bf16.mxu0 0
        %1061 = vmatpush1.bf16.xpose.msra.mxu0 0
        %1062 = vmatprep.mubr.bf16.mxu0 0
        %1063 = vmatmul.mubr.bf16.gmra.mrb[0].mxu0 %v1025
        %v1064 = vpop.f32.mrb[0].mxu0
        %v1065 = vadd.f32 0.0, %v1064
        %v1066 = vpop.f32.mrb[0].mxu0
        %v1067 = vpop.f32.mrb[0].mxu0
        %v1068 = vpop.f32.mrb[0].mxu0
        %1069 = vdwg.mxu0
        %1070 = vrot.lane.b32.xlu0 %v963, 96
        %v1071 = vpop.permute.xlu0 %1070
        %v1073 = vsel %vm975, %v963, 0
        %v1076 = vsel %vm975, %v1071, 0
        %1078 = vmatprep.subr.bf16.mxu0 0
        %1079 = vmatpush1.bf16.xpose.msra.mxu0 %v1076
        %1080 = vmatprep.subr.bf16.mxu0 0
        %1081 = vmatpush1.bf16.xpose.msra.mxu0 0
        %1082 = vmatprep.subr.bf16.mxu0 0
        %1083 = vmatpush1.bf16.xpose.msra.mxu0 0
        %1084 = vmatprep.subr.bf16.mxu0 0
        %1085 = vmatpush1.bf16.xpose.msra.mxu0 0
        %1086 = vmatprep.subr.bf16.mxu0 0
        %1087 = vmatpush1.bf16.xpose.msra.mxu0 0
        %1088 = vmatprep.subr.bf16.mxu0 0
        %1089 = vmatpush1.bf16.xpose.msra.mxu0 0
        %1090 = vmatprep.subr.bf16.mxu0 0
        %1091 = vmatpush1.bf16.xpose.msra.mxu0 0
        %1092 = vmatprep.subr.bf16.mxu0 0
        %1093 = vmatpush1.bf16.xpose.msra.mxu0 0
        %1094 = vmatprep.subr.bf16.mxu0 0
        %1095 = vmatpush1.bf16.xpose.msra.mxu0 0
        %1096 = vmatprep.subr.bf16.mxu0 0
        %1097 = vmatpush1.bf16.xpose.msra.mxu0 0
        %1098 = vmatprep.subr.bf16.mxu0 0
        %1099 = vmatpush1.bf16.xpose.msra.mxu0 0
        %1100 = vmatprep.subr.bf16.mxu0 0
        %1101 = vmatpush1.bf16.xpose.msra.mxu0 0
        %1102 = vmatprep.subr.bf16.mxu0 0
        %1103 = vmatpush1.bf16.xpose.msra.mxu0 0
        %1104 = vmatprep.subr.bf16.mxu0 0
        %1105 = vmatpush1.bf16.xpose.msra.mxu0 0
        %1106 = vmatprep.subr.bf16.mxu0 0
        %1107 = vmatpush1.bf16.xpose.msra.mxu0 0
        %1108 = vmatprep.subr.bf16.mxu0 0
        %1109 = vmatpush1.bf16.xpose.msra.mxu0 0
        %1110 = vmatprep.mubr.bf16.mxu0 0
        %1111 = vmatmul.mubr.bf16.gmra.mrb[0].mxu0 %v1073
        %v1112 = vpop.f32.mrb[0].mxu0
        %v1113 = vadd.f32 0.0, %v1112
        %v1114 = vpop.f32.mrb[0].mxu0
        %v1115 = vpop.f32.mrb[0].mxu0
        %v1116 = vpop.f32.mrb[0].mxu0
        %1117 = vdwg.mxu0
        %1118 = vrot.lane.b32.xlu0 %v965, 96
        %v1119 = vpop.permute.xlu0 %1118
        %v1121 = vsel %vm975, %v965, 0
        %v1124 = vsel %vm975, %v1119, 0
        %1126 = vmatprep.subr.bf16.mxu0 0
        %1127 = vmatpush1.bf16.xpose.msra.mxu0 %v1124
        %1128 = vmatprep.subr.bf16.mxu0 0
        %1129 = vmatpush1.bf16.xpose.msra.mxu0 0
        %1130 = vmatprep.subr.bf16.mxu0 0
        %1131 = vmatpush1.bf16.xpose.msra.mxu0 0
        %1132 = vmatprep.subr.bf16.mxu0 0
        %1133 = vmatpush1.bf16.xpose.msra.mxu0 0
        %1134 = vmatprep.subr.bf16.mxu0 0
        %1135 = vmatpush1.bf16.xpose.msra.mxu0 0
        %1136 = vmatprep.subr.bf16.mxu0 0
        %1137 = vmatpush1.bf16.xpose.msra.mxu0 0
        %1138 = vmatprep.subr.bf16.mxu0 0
        %1139 = vmatpush1.bf16.xpose.msra.mxu0 0
        %1140 = vmatprep.subr.bf16.mxu0 0
        %1141 = vmatpush1.bf16.xpose.msra.mxu0 0
        %1142 = vmatprep.subr.bf16.mxu0 0
        %1143 = vmatpush1.bf16.xpose.msra.mxu0 0
        %1144 = vmatprep.subr.bf16.mxu0 0
        %1145 = vmatpush1.bf16.xpose.msra.mxu0 0
        %1146 = vmatprep.subr.bf16.mxu0 0
        %1147 = vmatpush1.bf16.xpose.msra.mxu0 0
        %1148 = vmatprep.subr.bf16.mxu0 0
        %1149 = vmatpush1.bf16.xpose.msra.mxu0 0
        %1150 = vmatprep.subr.bf16.mxu0 0
        %1151 = vmatpush1.bf16.xpose.msra.mxu0 0
        %1152 = vmatprep.subr.bf16.mxu0 0
        %1153 = vmatpush1.bf16.xpose.msra.mxu0 0
        %1154 = vmatprep.subr.bf16.mxu0 0
        %1155 = vmatpush1.bf16.xpose.msra.mxu0 0
        %1156 = vmatprep.subr.bf16.mxu0 0
        %1157 = vmatpush1.bf16.xpose.msra.mxu0 0
        %1158 = vmatprep.mubr.bf16.mxu0 0
        %1159 = vmatmul.mubr.bf16.gmra.mrb[0].mxu0 %v1121
        %v1160 = vpop.f32.mrb[0].mxu0
        %v1161 = vadd.f32 0.0, %v1160
        %v1162 = vpop.f32.mrb[0].mxu0
        %v1163 = vpop.f32.mrb[0].mxu0
        %v1164 = vpop.f32.mrb[0].mxu0
        %1165 = vdwg.mxu0
        %v1166 = vsel %vm975, %v1017, -inf
        %1167 = vmax.xlane.f32.xlu0 %v1166
        %v1168 = vpop.xlane.xlu0 %1167
        %v1169 = vsel %vm975, %v1065, -inf
        %1170 = vmax.xlane.f32.xlu0 %v1169
        %v1171 = vpop.xlane.xlu0 %1170
        %v1172 = vsel %vm975, %v1113, -inf
        %1173 = vmax.xlane.f32.xlu0 %v1172
        %v1174 = vpop.xlane.xlu0 %1173
        %v1175 = vsel %vm975, %v1161, -inf
        %1176 = vmax.xlane.f32.xlu0 %v1175
        %v1177 = vpop.xlane.xlu0 %1176
        %v1178 = vsub.f32 %v1017, %v1168
        %v1179 = vsub.f32 %v1065, %v1171
        %v1180 = vsub.f32 %v1113, %v1174
        %v1181 = vsub.f32 %v1161, %v1177
        %v1182 = vmul.f32 %v1178, 1.442695
        %v1183 = vpow.pop %v1182
        %v1184 = vmul.f32 %v1179, 1.442695
        %v1185 = vpow.pop %v1184
        %v1186 = vmul.f32 %v1180, 1.442695
        %v1187 = vpow.pop %v1186
        %v1188 = vmul.f32 %v1181, 1.442695
        %v1189 = vpow.pop %v1188
        %v1190 = vsel %vm975, %v1183, 0.0
        %1191 = vadd.xlane.f32.xlu0 %v1190
        %v1192 = vpop.xlane.xlu0 %1191
        %v1193 = vsel %vm975, %v1185, 0.0
        %1194 = vadd.xlane.f32.xlu0 %v1193
        %v1195 = vpop.xlane.xlu0 %1194
        %v1196 = vsel %vm975, %v1187, 0.0
        %1197 = vadd.xlane.f32.xlu0 %v1196
        %v1198 = vpop.xlane.xlu0 %1197
        %v1199 = vsel %vm975, %v1189, 0.0
        %1200 = vadd.xlane.f32.xlu0 %v1199
        %v1201 = vpop.xlane.xlu0 %1200
        %v1202 = vrcp.pop %v1192
        %v1203 = vrcp.pop %v1195
        %v1204 = vrcp.pop %v1198
        %v1205 = vrcp.pop %v1201
        %v1206 = vmul.f32 %v1183, %v1202
        %v1207 = vmul.f32 %v1185, %v1203
        %v1208 = vmul.f32 %v1187, %v1204
        %v1209 = vmul.f32 %v1189, %v1205
        %v1210 = vpack.c.bf16 %v1206, %v1206
        %v1211 = vpack.c.bf16 %v1207, %v1207
        %v1212 = vpack.c.bf16 %v1208, %v1208
        %v1213 = vpack.c.bf16 %v1209, %v1209
        %v1215 = vsel %vm975, %v1210, 0
        %vm1217 = vcmask 1043456
        %v1219 = vsel %vm1217, %v958, 0
        %1221 = vmatprep.subr.bf16.mxu0 0
        %1222 = vmatpush1.bf16.msra.mxu0 %v1219
        %1223 = vmatprep.subr.bf16.mxu0 0
        %1224 = vmatpush1.bf16.msra.mxu0 0
        %1225 = vmatprep.subr.bf16.mxu0 0
        %1226 = vmatpush1.bf16.msra.mxu0 0
        %1227 = vmatprep.subr.bf16.mxu0 0
        %1228 = vmatpush1.bf16.msra.mxu0 0
        %1229 = vmatprep.subr.bf16.mxu0 0
        %1230 = vmatpush1.bf16.msra.mxu0 0
        %1231 = vmatprep.subr.bf16.mxu0 0
        %1232 = vmatpush1.bf16.msra.mxu0 0
        %1233 = vmatprep.subr.bf16.mxu0 0
        %1234 = vmatpush1.bf16.msra.mxu0 0
        %1235 = vmatprep.subr.bf16.mxu0 0
        %1236 = vmatpush1.bf16.msra.mxu0 0
        %1237 = vmatprep.subr.bf16.mxu0 0
        %1238 = vmatpush1.bf16.msra.mxu0 0
        %1239 = vmatprep.subr.bf16.mxu0 0
        %1240 = vmatpush1.bf16.msra.mxu0 0
        %1241 = vmatprep.subr.bf16.mxu0 0
        %1242 = vmatpush1.bf16.msra.mxu0 0
        %1243 = vmatprep.subr.bf16.mxu0 0
        %1244 = vmatpush1.bf16.msra.mxu0 0
        %1245 = vmatprep.subr.bf16.mxu0 0
        %1246 = vmatpush1.bf16.msra.mxu0 0
        %1247 = vmatprep.subr.bf16.mxu0 0
        %1248 = vmatpush1.bf16.msra.mxu0 0
        %1249 = vmatprep.subr.bf16.mxu0 0
        %1250 = vmatpush1.bf16.msra.mxu0 0
        %1251 = vmatprep.subr.bf16.mxu0 0
        %1252 = vmatpush1.bf16.msra.mxu0 0
        %1253 = vmatprep.mubr.bf16.mxu0 0
        %1254 = vmatmul.mubr.bf16.gmra.mrb[0].mxu0 %v1215
        %v1255 = vpop.f32.mrb[0].mxu0
        %v1256 = vadd.f32 0.0, %v1255
        %v1257 = vpop.f32.mrb[0].mxu0
        %v1258 = vpop.f32.mrb[0].mxu0
        %v1259 = vpop.f32.mrb[0].mxu0
        %1260 = vdwg.mxu0
        %v1262 = vsel %vm975, %v1211, 0
        %v1265 = vsel %vm1217, %v968, 0
        %1267 = vmatprep.subr.bf16.mxu0 0
        %1268 = vmatpush1.bf16.msra.mxu0 %v1265
        %1269 = vmatprep.subr.bf16.mxu0 0
        %1270 = vmatpush1.bf16.msra.mxu0 0
        %1271 = vmatprep.subr.bf16.mxu0 0
        %1272 = vmatpush1.bf16.msra.mxu0 0
        %1273 = vmatprep.subr.bf16.mxu0 0
        %1274 = vmatpush1.bf16.msra.mxu0 0
        %1275 = vmatprep.subr.bf16.mxu0 0
        %1276 = vmatpush1.bf16.msra.mxu0 0
        %1277 = vmatprep.subr.bf16.mxu0 0
        %1278 = vmatpush1.bf16.msra.mxu0 0
        %1279 = vmatprep.subr.bf16.mxu0 0
        %1280 = vmatpush1.bf16.msra.mxu0 0
        %1281 = vmatprep.subr.bf16.mxu0 0
        %1282 = vmatpush1.bf16.msra.mxu0 0
        %1283 = vmatprep.subr.bf16.mxu0 0
        %1284 = vmatpush1.bf16.msra.mxu0 0
        %1285 = vmatprep.subr.bf16.mxu0 0
        %1286 = vmatpush1.bf16.msra.mxu0 0
        %1287 = vmatprep.subr.bf16.mxu0 0
        %1288 = vmatpush1.bf16.msra.mxu0 0
        %1289 = vmatprep.subr.bf16.mxu0 0
        %1290 = vmatpush1.bf16.msra.mxu0 0
        %1291 = vmatprep.subr.bf16.mxu0 0
        %1292 = vmatpush1.bf16.msra.mxu0 0
        %1293 = vmatprep.subr.bf16.mxu0 0
        %1294 = vmatpush1.bf16.msra.mxu0 0
        %1295 = vmatprep.subr.bf16.mxu0 0
        %1296 = vmatpush1.bf16.msra.mxu0 0
        %1297 = vmatprep.subr.bf16.mxu0 0
        %1298 = vmatpush1.bf16.msra.mxu0 0
        %1299 = vmatprep.mubr.bf16.mxu0 0
        %1300 = vmatmul.mubr.bf16.gmra.mrb[0].mxu0 %v1262
        %v1301 = vpop.f32.mrb[0].mxu0
        %v1302 = vadd.f32 0.0, %v1301
        %v1303 = vpop.f32.mrb[0].mxu0
        %v1304 = vpop.f32.mrb[0].mxu0
        %v1305 = vpop.f32.mrb[0].mxu0
        %1306 = vdwg.mxu0
        %v1308 = vsel %vm975, %v1212, 0
        %v1311 = vsel %vm1217, %v970, 0
        %1313 = vmatprep.subr.bf16.mxu0 0
        %1314 = vmatpush1.bf16.msra.mxu0 %v1311
        %1315 = vmatprep.subr.bf16.mxu0 0
        %1316 = vmatpush1.bf16.msra.mxu0 0
        %1317 = vmatprep.subr.bf16.mxu0 0
        %1318 = vmatpush1.bf16.msra.mxu0 0
        %1319 = vmatprep.subr.bf16.mxu0 0
        %1320 = vmatpush1.bf16.msra.mxu0 0
        %1321 = vmatprep.subr.bf16.mxu0 0
        %1322 = vmatpush1.bf16.msra.mxu0 0
        %1323 = vmatprep.subr.bf16.mxu0 0
        %1324 = vmatpush1.bf16.msra.mxu0 0
        %1325 = vmatprep.subr.bf16.mxu0 0
        %1326 = vmatpush1.bf16.msra.mxu0 0
        %1327 = vmatprep.subr.bf16.mxu0 0
        %1328 = vmatpush1.bf16.msra.mxu0 0
        %1329 = vmatprep.subr.bf16.mxu0 0
        %1330 = vmatpush1.bf16.msra.mxu0 0
        %1331 = vmatprep.subr.bf16.mxu0 0
        %1332 = vmatpush1.bf16.msra.mxu0 0
        %1333 = vmatprep.subr.bf16.mxu0 0
        %1334 = vmatpush1.bf16.msra.mxu0 0
        %1335 = vmatprep.subr.bf16.mxu0 0
        %1336 = vmatpush1.bf16.msra.mxu0 0
        %1337 = vmatprep.subr.bf16.mxu0 0
        %1338 = vmatpush1.bf16.msra.mxu0 0
        %1339 = vmatprep.subr.bf16.mxu0 0
        %1340 = vmatpush1.bf16.msra.mxu0 0
        %1341 = vmatprep.subr.bf16.mxu0 0
        %1342 = vmatpush1.bf16.msra.mxu0 0
        %1343 = vmatprep.subr.bf16.mxu0 0
        %1344 = vmatpush1.bf16.msra.mxu0 0
        %1345 = vmatprep.mubr.bf16.mxu0 0
        %1346 = vmatmul.mubr.bf16.gmra.mrb[0].mxu0 %v1308
        %v1347 = vpop.f32.mrb[0].mxu0
        %v1348 = vadd.f32 0.0, %v1347
        %v1349 = vpop.f32.mrb[0].mxu0
        %v1350 = vpop.f32.mrb[0].mxu0
        %v1351 = vpop.f32.mrb[0].mxu0
        %1352 = vdwg.mxu0
        %v1354 = vsel %vm975, %v1213, 0
        %v1357 = vsel %vm1217, %v972, 0
        %1359 = vmatprep.subr.bf16.mxu0 0
        %1360 = vmatpush1.bf16.msra.mxu0 %v1357
        %1361 = vmatprep.subr.bf16.mxu0 0
        %1362 = vmatpush1.bf16.msra.mxu0 0
        %1363 = vmatprep.subr.bf16.mxu0 0
        %1364 = vmatpush1.bf16.msra.mxu0 0
        %1365 = vmatprep.subr.bf16.mxu0 0
        %1366 = vmatpush1.bf16.msra.mxu0 0
        %1367 = vmatprep.subr.bf16.mxu0 0
        %1368 = vmatpush1.bf16.msra.mxu0 0
        %1369 = vmatprep.subr.bf16.mxu0 0
        %1370 = vmatpush1.bf16.msra.mxu0 0
        %1371 = vmatprep.subr.bf16.mxu0 0
        %1372 = vmatpush1.bf16.msra.mxu0 0
        %1373 = vmatprep.subr.bf16.mxu0 0
        %1374 = vmatpush1.bf16.msra.mxu0 0
        %1375 = vmatprep.subr.bf16.mxu0 0
        %1376 = vmatpush1.bf16.msra.mxu0 0
        %1377 = vmatprep.subr.bf16.mxu0 0
        %1378 = vmatpush1.bf16.msra.mxu0 0
        %1379 = vmatprep.subr.bf16.mxu0 0
        %1380 = vmatpush1.bf16.msra.mxu0 0
        %1381 = vmatprep.subr.bf16.mxu0 0
        %1382 = vmatpush1.bf16.msra.mxu0 0
        %1383 = vmatprep.subr.bf16.mxu0 0
        %1384 = vmatpush1.bf16.msra.mxu0 0
        %1385 = vmatprep.subr.bf16.mxu0 0
        %1386 = vmatpush1.bf16.msra.mxu0 0
        %1387 = vmatprep.subr.bf16.mxu0 0
        %1388 = vmatpush1.bf16.msra.mxu0 0
        %1389 = vmatprep.subr.bf16.mxu0 0
        %1390 = vmatpush1.bf16.msra.mxu0 0
        %1391 = vmatprep.mubr.bf16.mxu0 0
        %1392 = vmatmul.mubr.bf16.gmra.mrb[0].mxu0 %v1354
        %v1393 = vpop.f32.mrb[0].mxu0
        %v1394 = vadd.f32 0.0, %v1393
        %v1395 = vpop.f32.mrb[0].mxu0
        %v1396 = vpop.f32.mrb[0].mxu0
        %v1397 = vpop.f32.mrb[0].mxu0
        %1398 = vdwg.mxu0
        %v1399 = vpack.c.bf16 %v1256, %v1256
        %vm1400 = vcmask 60416
        %1401 = vst.msk [vmem:[#allocation2] sm:$0xf] %vm1400, %v1399
        %v1402 = vpack.c.bf16 %v1302, %v1302
        %v1404 = vunpack.c.l.b16 %v1402
        %v1405 = vpack.c.b16 %v1404, %v1404
        %1406 = vrot.lane.b32.xlu0 %v1405, 8
        %v1407 = vpop.permute.xlu0 %1406
        %vm1409 = vcmask 126016
        %1410 = vst.msk [vmem:[#allocation2] sm:$0xf] %vm1409, %v1407
        %v1411 = vpack.c.bf16 %v1348, %v1348
        %v1413 = vunpack.c.l.b16 %v1411
        %v1414 = vpack.c.b16 %v1413, %v1413
        %1415 = vrot.lane.b32.xlu0 %v1414, 16
        %v1416 = vpop.permute.xlu0 %1415
        %vm1418 = vcmask 191616
        %1419 = vst.msk [vmem:[#allocation2] sm:$0xf] %vm1418, %v1416
        %v1420 = vpack.c.bf16 %v1394, %v1394
        %v1422 = vunpack.c.l.b16 %v1420
        %v1423 = vpack.c.b16 %v1422, %v1422
        %1424 = vrot.lane.b32.xlu0 %v1423, 24
        %v1425 = vpop.permute.xlu0 %1424
        %vm1427 = vcmask 257216
        %1428 = vst.msk [vmem:[#allocation2] sm:$0xf] %vm1427, %v1425
        %v1429 = vld [vmem:[#allocation2] sm:$0xf]
        %v1430 = vld [vmem:[#allocation18] sm:$0xf]
        %v1431 = vld [vmem:[#allocation18 + $0x4] sm:$0xf]
        %v1432 = vld [vmem:[#allocation18 + $0x8] sm:$0xf]
        %v1433 = vld [vmem:[#allocation18 + $0xc] sm:$0xf]
        %v1434 = vlaneseq
        %v1435 = vshrl.u32 %v1434, 7
        %v1436 = vsub.s32 0, %v1435
        %v1437 = vrot.slane %v825, %v1436
        %v1442 = vunpack.c.l.b16 %v1430
        %v1443 = vunpack.c.l.b16 %v1431
        %v1444 = vunpack.c.l.b16 %v1432
        %v1445 = vunpack.c.l.b16 %v1433
        %v1446 = vpack.c.b16 %v1443, %v1442
        %v1447 = vpack.c.b16 %v1445, %v1444
        %v1451 = vsel %vm850, %v1429, 0
        %1453 = vmatprep.subr.bf16.mxu0 0
        %1454 = vmatpush1.bf16.msra.mxu0 %v1446
        %1455 = vmatprep.subr.bf16.mxu0 0
        %1456 = vmatpush1.bf16.msra.mxu0 %v1447
        %1457 = vmatprep.subr.bf16.mxu0 0
        %1458 = vmatpush1.bf16.msra.mxu0 0
        %1459 = vmatprep.subr.bf16.mxu0 0
        %1460 = vmatpush1.bf16.msra.mxu0 0
        %1461 = vmatprep.subr.bf16.mxu0 0
        %1462 = vmatpush1.bf16.msra.mxu0 0
        %1463 = vmatprep.subr.bf16.mxu0 0
        %1464 = vmatpush1.bf16.msra.mxu0 0
        %1465 = vmatprep.subr.bf16.mxu0 0
        %1466 = vmatpush1.bf16.msra.mxu0 0
        %1467 = vmatprep.subr.bf16.mxu0 0
        %1468 = vmatpush1.bf16.msra.mxu0 0
        %1469 = vmatprep.subr.bf16.mxu0 0
        %1470 = vmatpush1.bf16.msra.mxu0 0
        %1471 = vmatprep.subr.bf16.mxu0 0
        %1472 = vmatpush1.bf16.msra.mxu0 0
        %1473 = vmatprep.subr.bf16.mxu0 0
        %1474 = vmatpush1.bf16.msra.mxu0 0
        %1475 = vmatprep.subr.bf16.mxu0 0
        %1476 = vmatpush1.bf16.msra.mxu0 0
        %1477 = vmatprep.subr.bf16.mxu0 0
        %1478 = vmatpush1.bf16.msra.mxu0 0
        %1479 = vmatprep.subr.bf16.mxu0 0
        %1480 = vmatpush1.bf16.msra.mxu0 0
        %1481 = vmatprep.subr.bf16.mxu0 0
        %1482 = vmatpush1.bf16.msra.mxu0 0
        %1483 = vmatprep.subr.bf16.mxu0 0
        %1484 = vmatpush1.bf16.msra.mxu0 0
        %1485 = vmatprep.mubr.bf16.mxu0 0
        %1486 = vmatmul.mubr.bf16.gmra.mrb[0].mxu0 %v1451
        %v1487 = vpop.f32.mrb[0].mxu0
        %v1488 = vadd.f32 %v1437, %v1487
        %v1489 = vpop.f32.mrb[0].mxu0
        %v1490 = vpop.f32.mrb[0].mxu0
        %v1491 = vpop.f32.mrb[0].mxu0
        %1492 = vdwg.mxu0
        %v1493 = vadd.f32 %v824, %v1488
        %v1494 = vsel %vm850, %v1493, 0.0
        %1495 = vadd.xlane.f32.xlu0 %v1494
        %v1496 = vpop.xlane.xlu0 %1495
        %v1497 = vrcp.pop 32.0
        %v1498 = vmul.f32 %v1496, %v1497
        %v1499 = vsub.f32 %v1493, %v1498
        %v1500 = vmul.f32 %v1499, %v1499
        %v1501 = vsel %vm850, %v1500, 0.0
        %1502 = vadd.xlane.f32.xlu0 %v1501
        %v1503 = vpop.xlane.xlu0 %1502
        %v1504 = vmul.f32 %v1503, %v1497
        %v1505 = vadd.f32 %v1504, 1e-05
        %v1506 = vrsqrt.pop %v1505
        %v1507 = vmul.f32 %v1499, %v1506
        %v1508 = vlaneseq
        %v1509 = vshrl.u32 %v1508, 7
        %v1510 = vsub.s32 3, %v1509
        %v1511 = vrot.slane %v825, %v1510
        %v1512 = vmul.f32 %v1507, %v1511
        %v1513 = vlaneseq
        %v1514 = vshrl.u32 %v1513, 7
        %v1515 = vsub.s32 4, %v1514
        %v1516 = vrot.slane %v825, %v1515
        %v1517 = vadd.f32 %v1512, %v1516
        %v1518 = vld [vmem:[%s819] sm:$0xf]
        %v1519 = vld [vmem:[%s819 + $0x4] sm:$0xf]
        %v1520 = vld [vmem:[%s704] sm:$0xf]
        %v1521 = vld [vmem:[%s704 + $0x4] sm:$0xf]
        %v1522 = vadd.bf16 %v1518, %v1520
        %v1523 = vadd.bf16 %v1519, %v1521
        %v1524 = vpack.c.bf16 %v1517, %v1517
        %v1525 = vld [vmem:[#allocation15] sm:$0xf]
        %v1526 = vld [vmem:[#allocation15 + $0x4] sm:$0xf]
        %v1527 = vld [vmem:[#allocation15 + $0x8] sm:$0xf]
        %v1528 = vld [vmem:[#allocation15 + $0xc] sm:$0xf]
        %v1529 = vlaneseq
        %v1530 = vshrl.u32 %v1529, 7
        %v1531 = vsub.s32 1, %v1530
        %v1532 = vrot.slane %v827, %v1531
        %v1537 = vunpack.c.l.b16 %v1525
        %v1538 = vunpack.c.l.b16 %v1526
        %v1539 = vunpack.c.l.b16 %v1527
        %v1540 = vunpack.c.l.b16 %v1528
        %v1541 = vpack.c.b16 %v1538, %v1537
        %v1542 = vpack.c.b16 %v1540, %v1539
        %v1546 = vsel %vm850, %v1524, 0
        %1548 = vmatprep.subr.bf16.mxu0 0
        %1549 = vmatpush1.bf16.msra.mxu0 %v1541
        %1550 = vmatprep.subr.bf16.mxu0 0
        %1551 = vmatpush1.bf16.msra.mxu0 %v1542
        %1552 = vmatprep.subr.bf16.mxu0 0
        %1553 = vmatpush1.bf16.msra.mxu0 0
        %1554 = vmatprep.subr.bf16.mxu0 0
        %1555 = vmatpush1.bf16.msra.mxu0 0
        %1556 = vmatprep.subr.bf16.mxu0 0
        %1557 = vmatpush1.bf16.msra.mxu0 0
        %1558 = vmatprep.subr.bf16.mxu0 0
        %1559 = vmatpush1.bf16.msra.mxu0 0
        %1560 = vmatprep.subr.bf16.mxu0 0
        %1561 = vmatpush1.bf16.msra.mxu0 0
        %1562 = vmatprep.subr.bf16.mxu0 0
        %1563 = vmatpush1.bf16.msra.mxu0 0
        %1564 = vmatprep.subr.bf16.mxu0 0
        %1565 = vmatpush1.bf16.msra.mxu0 0
        %1566 = vmatprep.subr.bf16.mxu0 0
        %1567 = vmatpush1.bf16.msra.mxu0 0
        %1568 = vmatprep.subr.bf16.mxu0 0
        %1569 = vmatpush1.bf16.msra.mxu0 0
        %1570 = vmatprep.subr.bf16.mxu0 0
        %1571 = vmatpush1.bf16.msra.mxu0 0
        %1572 = vmatprep.subr.bf16.mxu0 0
        %1573 = vmatpush1.bf16.msra.mxu0 0
        %1574 = vmatprep.subr.bf16.mxu0 0
        %1575 = vmatpush1.bf16.msra.mxu0 0
        %1576 = vmatprep.subr.bf16.mxu0 0
        %1577 = vmatpush1.bf16.msra.mxu0 0
        %1578 = vmatprep.subr.bf16.mxu0 0
        %1579 = vmatpush1.bf16.msra.mxu0 0
        %1580 = vmatprep.mubr.bf16.mxu0 0
        %1581 = vmatmul.mubr.bf16.gmra.mrb[0].mxu0 %v1546
        %v1582 = vpop.f32.mrb[0].mxu0
        %v1583 = vadd.f32 %v1532, %v1582
        %v1584 = vpop.f32.mrb[0].mxu0
        %v1585 = vpop.f32.mrb[0].mxu0
        %v1586 = vpop.f32.mrb[0].mxu0
        %1587 = vdwg.mxu0
        %v1588 = vld [vmem:[#allocation16] sm:$0xf]
        %v1589 = vld [vmem:[#allocation16 + $0x4] sm:$0xf]
        %v1590 = vld [vmem:[#allocation16 + $0x8] sm:$0xf]
        %v1591 = vld [vmem:[#allocation16 + $0xc] sm:$0xf]
        %v1594 = vunpack.c.l.b16 %v1522
        %v1595 = vunpack.c.l.b16 %v1523
        %v1596 = vpack.c.b16 %v1595, %v1594
        %v1601 = vunpack.c.l.b16 %v1588
        %v1602 = vunpack.c.l.b16 %v1589
        %v1603 = vunpack.c.l.b16 %v1590
        %v1604 = vunpack.c.l.b16 %v1591
        %v1605 = vpack.c.b16 %v1602, %v1601
        %v1606 = vpack.c.b16 %v1604, %v1603
        %1610 = vrot.lane.b32.xlu0 %v1532, 96
        %v1611 = vpop.permute.xlu0 %1610
        %v1614 = vsel %vm850, %v1596, 0
        %1616 = vmatprep.subr.bf16.mxu0 0
        %1617 = vmatpush1.bf16.msra.mxu0 %v1605
        %1618 = vmatprep.subr.bf16.mxu0 0
        %1619 = vmatpush1.bf16.msra.mxu0 %v1606
        %1620 = vmatprep.subr.bf16.mxu0 0
        %1621 = vmatpush1.bf16.msra.mxu0 0
        %1622 = vmatprep.subr.bf16.mxu0 0
        %1623 = vmatpush1.bf16.msra.mxu0 0
        %1624 = vmatprep.subr.bf16.mxu0 0
        %1625 = vmatpush1.bf16.msra.mxu0 0
        %1626 = vmatprep.subr.bf16.mxu0 0
        %1627 = vmatpush1.bf16.msra.mxu0 0
        %1628 = vmatprep.subr.bf16.mxu0 0
        %1629 = vmatpush1.bf16.msra.mxu0 0
        %1630 = vmatprep.subr.bf16.mxu0 0
        %1631 = vmatpush1.bf16.msra.mxu0 0
        %1632 = vmatprep.subr.bf16.mxu0 0
        %1633 = vmatpush1.bf16.msra.mxu0 0
        %1634 = vmatprep.subr.bf16.mxu0 0
        %1635 = vmatpush1.bf16.msra.mxu0 0
        %1636 = vmatprep.subr.bf16.mxu0 0
        %1637 = vmatpush1.bf16.msra.mxu0 0
        %1638 = vmatprep.subr.bf16.mxu0 0
        %1639 = vmatpush1.bf16.msra.mxu0 0
        %1640 = vmatprep.subr.bf16.mxu0 0
        %1641 = vmatpush1.bf16.msra.mxu0 0
        %1642 = vmatprep.subr.bf16.mxu0 0
        %1643 = vmatpush1.bf16.msra.mxu0 0
        %1644 = vmatprep.subr.bf16.mxu0 0
        %1645 = vmatpush1.bf16.msra.mxu0 0
        %1646 = vmatprep.subr.bf16.mxu0 0
        %1647 = vmatpush1.bf16.msra.mxu0 0
        %1648 = vmatprep.mubr.bf16.mxu0 0
        %1649 = vmatmul.mubr.bf16.gmra.mrb[0].mxu0 %v1614
        %v1650 = vpop.f32.mrb[0].mxu0
        %v1651 = vadd.f32 %v1611, %v1650
        %v1652 = vpop.f32.mrb[0].mxu0
        %v1653 = vpop.f32.mrb[0].mxu0
        %v1654 = vadd.f32 %v1611, %v1653
        %v1655 = vpop.f32.mrb[0].mxu0
        %1656 = vdwg.mxu0
        %v1657 = vld [vmem:[%s9] sm:$0xf]
        %v1658 = vld [vmem:[%s9 + $0x4] sm:$0xf]
        %v1659 = vld [vmem:[%s9 + $0x8] sm:$0xf]
        %v1660 = vld [vmem:[%s9 + $0xc] sm:$0xf]
        %v1663 = vunpack.c.l.b16 %v822
        %v1664 = vunpack.c.l.b16 %v823
        %v1665 = vpack.c.b16 %v1664, %v1663
        %v1670 = vunpack.c.l.b16 %v1657
        %v1671 = vunpack.c.l.b16 %v1658
        %v1672 = vunpack.c.l.b16 %v1659
        %v1673 = vunpack.c.l.b16 %v1660
        %v1674 = vpack.c.b16 %v1671, %v1670
        %v1675 = vpack.c.b16 %v1673, %v1672
        %1678 = vrot.lane.b32.xlu0 %v1532, 64
        %v1679 = vpop.permute.xlu0 %1678
        %v1682 = vsel %vm850, %v1665, 0
        %1684 = vmatprep.subr.bf16.mxu0 0
        %1685 = vmatpush1.bf16.msra.mxu0 %v1674
        %1686 = vmatprep.subr.bf16.mxu0 0
        %1687 = vmatpush1.bf16.msra.mxu0 %v1675
        %1688 = vmatprep.subr.bf16.mxu0 0
        %1689 = vmatpush1.bf16.msra.mxu0 0
        %1690 = vmatprep.subr.bf16.mxu0 0
        %1691 = vmatpush1.bf16.msra.mxu0 0
        %1692 = vmatprep.subr.bf16.mxu0 0
        %1693 = vmatpush1.bf16.msra.mxu0 0
        %1694 = vmatprep.subr.bf16.mxu0 0
        %1695 = vmatpush1.bf16.msra.mxu0 0
        %1696 = vmatprep.subr.bf16.mxu0 0
        %1697 = vmatpush1.bf16.msra.mxu0 0
        %1698 = vmatprep.subr.bf16.mxu0 0
        %1699 = vmatpush1.bf16.msra.mxu0 0
        %1700 = vmatprep.subr.bf16.mxu0 0
        %1701 = vmatpush1.bf16.msra.mxu0 0
        %1702 = vmatprep.subr.bf16.mxu0 0
        %1703 = vmatpush1.bf16.msra.mxu0 0
        %1704 = vmatprep.subr.bf16.mxu0 0
        %1705 = vmatpush1.bf16.msra.mxu0 0
        %1706 = vmatprep.subr.bf16.mxu0 0
        %1707 = vmatpush1.bf16.msra.mxu0 0
        %1708 = vmatprep.subr.bf16.mxu0 0
        %1709 = vmatpush1.bf16.msra.mxu0 0
        %1710 = vmatprep.subr.bf16.mxu0 0
        %1711 = vmatpush1.bf16.msra.mxu0 0
        %1712 = vmatprep.subr.bf16.mxu0 0
        %1713 = vmatpush1.bf16.msra.mxu0 0
        %1714 = vmatprep.subr.bf16.mxu0 0
        %1715 = vmatpush1.bf16.msra.mxu0 0
        %1716 = vmatprep.mubr.bf16.mxu0 0
        %1717 = vmatmul.mubr.bf16.gmra.mrb[0].mxu0 %v1682
        %v1718 = vpop.f32.mrb[0].mxu0
        %v1719 = vadd.f32 %v1679, %v1718
        %v1720 = vpop.f32.mrb[0].mxu0
        %v1721 = vpop.f32.mrb[0].mxu0
        %v1722 = vadd.f32 %v1679, %v1721
        %v1723 = vpop.f32.mrb[0].mxu0
        %1724 = vdwg.mxu0
        %v1725 = vpack.c.bf16 %v1583, %v1583
        %v1726 = vpack.c.bf16 %v1654, %v1651
        %v1727 = vpack.c.bf16 %v1722, %v1719
        %1729 = vrot.lane.b32.xlu0 %v1725, 120
        %v1730 = vpop.permute.xlu0 %1729
        %1731 = vrot.lane.b32.xlu0 %v1725, 112
        %v1732 = vpop.permute.xlu0 %1731
        %1733 = vrot.lane.b32.xlu0 %v1725, 104
        %v1734 = vpop.permute.xlu0 %1733
        %1736 = vrot.lane.b32.xlu0 %v1726, 120
        %v1737 = vpop.permute.xlu0 %1736
        %1738 = vrot.lane.b32.xlu0 %v1726, 112
        %v1739 = vpop.permute.xlu0 %1738
        %1740 = vrot.lane.b32.xlu0 %v1726, 104
        %v1741 = vpop.permute.xlu0 %1740
        %1743 = vrot.lane.b32.xlu0 %v1727, 120
        %v1744 = vpop.permute.xlu0 %1743
        %1746 = vrot.lane.b32.xlu0 %v1727, 112
        %v1747 = vpop.permute.xlu0 %1746
        %1749 = vrot.lane.b32.xlu0 %v1727, 104
        %v1750 = vpop.permute.xlu0 %1749
        %v1753 = vsel %vm975, %v1725, 0
        %v1756 = vsel %vm975, %v1726, 0
        %1758 = vmatprep.subr.bf16.mxu0 0
        %1759 = vmatpush1.bf16.xpose.msra.mxu0 %v1756
        %1760 = vmatprep.subr.bf16.mxu0 0
        %1761 = vmatpush1.bf16.xpose.msra.mxu0 0
        %1762 = vmatprep.subr.bf16.mxu0 0
        %1763 = vmatpush1.bf16.xpose.msra.mxu0 0
        %1764 = vmatprep.subr.bf16.mxu0 0
        %1765 = vmatpush1.bf16.xpose.msra.mxu0 0
        %1766 = vmatprep.subr.bf16.mxu0 0
        %1767 = vmatpush1.bf16.xpose.msra.mxu0 0
        %1768 = vmatprep.subr.bf16.mxu0 0
        %1769 = vmatpush1.bf16.xpose.msra.mxu0 0
        %1770 = vmatprep.subr.bf16.mxu0 0
        %1771 = vmatpush1.bf16.xpose.msra.mxu0 0
        %1772 = vmatprep.subr.bf16.mxu0 0
        %1773 = vmatpush1.bf16.xpose.msra.mxu0 0
        %1774 = vmatprep.subr.bf16.mxu0 0
        %1775 = vmatpush1.bf16.xpose.msra.mxu0 0
        %1776 = vmatprep.subr.bf16.mxu0 0
        %1777 = vmatpush1.bf16.xpose.msra.mxu0 0
        %1778 = vmatprep.subr.bf16.mxu0 0
        %1779 = vmatpush1.bf16.xpose.msra.mxu0 0
        %1780 = vmatprep.subr.bf16.mxu0 0
        %1781 = vmatpush1.bf16.xpose.msra.mxu0 0
        %1782 = vmatprep.subr.bf16.mxu0 0
        %1783 = vmatpush1.bf16.xpose.msra.mxu0 0
        %1784 = vmatprep.subr.bf16.mxu0 0
        %1785 = vmatpush1.bf16.xpose.msra.mxu0 0
        %1786 = vmatprep.subr.bf16.mxu0 0
        %1787 = vmatpush1.bf16.xpose.msra.mxu0 0
        %1788 = vmatprep.subr.bf16.mxu0 0
        %1789 = vmatpush1.bf16.xpose.msra.mxu0 0
        %1790 = vmatprep.mubr.bf16.mxu0 0
        %1791 = vmatmul.mubr.bf16.gmra.mrb[0].mxu0 %v1753
        %v1792 = vpop.f32.mrb[0].mxu0
        %v1793 = vadd.f32 0.0, %v1792
        %v1794 = vpop.f32.mrb[0].mxu0
        %v1795 = vpop.f32.mrb[0].mxu0
        %v1796 = vpop.f32.mrb[0].mxu0
        %1797 = vdwg.mxu0
        %v1799 = vsel %vm975, %v1730, 0
        %v1802 = vsel %vm975, %v1737, 0
        %1804 = vmatprep.subr.bf16.mxu0 0
        %1805 = vmatpush1.bf16.xpose.msra.mxu0 %v1802
        %1806 = vmatprep.subr.bf16.mxu0 0
        %1807 = vmatpush1.bf16.xpose.msra.mxu0 0
        %1808 = vmatprep.subr.bf16.mxu0 0
        %1809 = vmatpush1.bf16.xpose.msra.mxu0 0
        %1810 = vmatprep.subr.bf16.mxu0 0
        %1811 = vmatpush1.bf16.xpose.msra.mxu0 0
        %1812 = vmatprep.subr.bf16.mxu0 0
        %1813 = vmatpush1.bf16.xpose.msra.mxu0 0
        %1814 = vmatprep.subr.bf16.mxu0 0
        %1815 = vmatpush1.bf16.xpose.msra.mxu0 0
        %1816 = vmatprep.subr.bf16.mxu0 0
        %1817 = vmatpush1.bf16.xpose.msra.mxu0 0
        %1818 = vmatprep.subr.bf16.mxu0 0
        %1819 = vmatpush1.bf16.xpose.msra.mxu0 0
        %1820 = vmatprep.subr.bf16.mxu0 0
        %1821 = vmatpush1.bf16.xpose.msra.mxu0 0
        %1822 = vmatprep.subr.bf16.mxu0 0
        %1823 = vmatpush1.bf16.xpose.msra.mxu0 0
        %1824 = vmatprep.subr.bf16.mxu0 0
        %1825 = vmatpush1.bf16.xpose.msra.mxu0 0
        %1826 = vmatprep.subr.bf16.mxu0 0
        %1827 = vmatpush1.bf16.xpose.msra.mxu0 0
        %1828 = vmatprep.subr.bf16.mxu0 0
        %1829 = vmatpush1.bf16.xpose.msra.mxu0 0
        %1830 = vmatprep.subr.bf16.mxu0 0
        %1831 = vmatpush1.bf16.xpose.msra.mxu0 0
        %1832 = vmatprep.subr.bf16.mxu0 0
        %1833 = vmatpush1.bf16.xpose.msra.mxu0 0
        %1834 = vmatprep.subr.bf16.mxu0 0
        %1835 = vmatpush1.bf16.xpose.msra.mxu0 0
        %1836 = vmatprep.mubr.bf16.mxu0 0
        %1837 = vmatmul.mubr.bf16.gmra.mrb[0].mxu0 %v1799
        %v1838 = vpop.f32.mrb[0].mxu0
        %v1839 = vadd.f32 0.0, %v1838
        %v1840 = vpop.f32.mrb[0].mxu0
        %v1841 = vpop.f32.mrb[0].mxu0
        %v1842 = vpop.f32.mrb[0].mxu0
        %1843 = vdwg.mxu0
        %v1845 = vsel %vm975, %v1732, 0
        %v1848 = vsel %vm975, %v1739, 0
        %1850 = vmatprep.subr.bf16.mxu0 0
        %1851 = vmatpush1.bf16.xpose.msra.mxu0 %v1848
        %1852 = vmatprep.subr.bf16.mxu0 0
        %1853 = vmatpush1.bf16.xpose.msra.mxu0 0
        %1854 = vmatprep.subr.bf16.mxu0 0
        %1855 = vmatpush1.bf16.xpose.msra.mxu0 0
        %1856 = vmatprep.subr.bf16.mxu0 0
        %1857 = vmatpush1.bf16.xpose.msra.mxu0 0
        %1858 = vmatprep.subr.bf16.mxu0 0
        %1859 = vmatpush1.bf16.xpose.msra.mxu0 0
        %1860 = vmatprep.subr.bf16.mxu0 0
        %1861 = vmatpush1.bf16.xpose.msra.mxu0 0
        %1862 = vmatprep.subr.bf16.mxu0 0
        %1863 = vmatpush1.bf16.xpose.msra.mxu0 0
        %1864 = vmatprep.subr.bf16.mxu0 0
        %1865 = vmatpush1.bf16.xpose.msra.mxu0 0
        %1866 = vmatprep.subr.bf16.mxu0 0
        %1867 = vmatpush1.bf16.xpose.msra.mxu0 0
        %1868 = vmatprep.subr.bf16.mxu0 0
        %1869 = vmatpush1.bf16.xpose.msra.mxu0 0
        %1870 = vmatprep.subr.bf16.mxu0 0
        %1871 = vmatpush1.bf16.xpose.msra.mxu0 0
        %1872 = vmatprep.subr.bf16.mxu0 0
        %1873 = vmatpush1.bf16.xpose.msra.mxu0 0
        %1874 = vmatprep.subr.bf16.mxu0 0
        %1875 = vmatpush1.bf16.xpose.msra.mxu0 0
        %1876 = vmatprep.subr.bf16.mxu0 0
        %1877 = vmatpush1.bf16.xpose.msra.mxu0 0
        %1878 = vmatprep.subr.bf16.mxu0 0
        %1879 = vmatpush1.bf16.xpose.msra.mxu0 0
        %1880 = vmatprep.subr.bf16.mxu0 0
        %1881 = vmatpush1.bf16.xpose.msra.mxu0 0
        %1882 = vmatprep.mubr.bf16.mxu0 0
        %1883 = vmatmul.mubr.bf16.gmra.mrb[0].mxu0 %v1845
        %v1884 = vpop.f32.mrb[0].mxu0
        %v1885 = vadd.f32 0.0, %v1884
        %v1886 = vpop.f32.mrb[0].mxu0
        %v1887 = vpop.f32.mrb[0].mxu0
        %v1888 = vpop.f32.mrb[0].mxu0
        %1889 = vdwg.mxu0
        %v1891 = vsel %vm975, %v1734, 0
        %v1894 = vsel %vm975, %v1741, 0
        %1896 = vmatprep.subr.bf16.mxu0 0
        %1897 = vmatpush1.bf16.xpose.msra.mxu0 %v1894
        %1898 = vmatprep.subr.bf16.mxu0 0
        %1899 = vmatpush1.bf16.xpose.msra.mxu0 0
        %1900 = vmatprep.subr.bf16.mxu0 0
        %1901 = vmatpush1.bf16.xpose.msra.mxu0 0
        %1902 = vmatprep.subr.bf16.mxu0 0
        %1903 = vmatpush1.bf16.xpose.msra.mxu0 0
        %1904 = vmatprep.subr.bf16.mxu0 0
        %1905 = vmatpush1.bf16.xpose.msra.mxu0 0
        %1906 = vmatprep.subr.bf16.mxu0 0
        %1907 = vmatpush1.bf16.xpose.msra.mxu0 0
        %1908 = vmatprep.subr.bf16.mxu0 0
        %1909 = vmatpush1.bf16.xpose.msra.mxu0 0
        %1910 = vmatprep.subr.bf16.mxu0 0
        %1911 = vmatpush1.bf16.xpose.msra.mxu0 0
        %1912 = vmatprep.subr.bf16.mxu0 0
        %1913 = vmatpush1.bf16.xpose.msra.mxu0 0
        %1914 = vmatprep.subr.bf16.mxu0 0
        %1915 = vmatpush1.bf16.xpose.msra.mxu0 0
        %1916 = vmatprep.subr.bf16.mxu0 0
        %1917 = vmatpush1.bf16.xpose.msra.mxu0 0
        %1918 = vmatprep.subr.bf16.mxu0 0
        %1919 = vmatpush1.bf16.xpose.msra.mxu0 0
        %1920 = vmatprep.subr.bf16.mxu0 0
        %1921 = vmatpush1.bf16.xpose.msra.mxu0 0
        %1922 = vmatprep.subr.bf16.mxu0 0
        %1923 = vmatpush1.bf16.xpose.msra.mxu0 0
        %1924 = vmatprep.subr.bf16.mxu0 0
        %1925 = vmatpush1.bf16.xpose.msra.mxu0 0
        %1926 = vmatprep.subr.bf16.mxu0 0
        %1927 = vmatpush1.bf16.xpose.msra.mxu0 0
        %1928 = vmatprep.mubr.bf16.mxu0 0
        %1929 = vmatmul.mubr.bf16.gmra.mrb[0].mxu0 %v1891
        %v1930 = vpop.f32.mrb[0].mxu0
        %v1931 = vadd.f32 0.0, %v1930
        %v1932 = vpop.f32.mrb[0].mxu0
        %v1933 = vpop.f32.mrb[0].mxu0
        %v1934 = vpop.f32.mrb[0].mxu0
        %1935 = vdwg.mxu0
        %vm1936 = vcmask 130048
        %v1937 = vsel %vm1936, %v1793, -inf
        %1938 = vmax.xlane.f32.xlu0 %v1937
        %v1939 = vpop.xlane.xlu0 %1938
        %v1940 = vsel %vm1936, %v1839, -inf
        %1941 = vmax.xlane.f32.xlu0 %v1940
        %v1942 = vpop.xlane.xlu0 %1941
        %v1943 = vsel %vm1936, %v1885, -inf
        %1944 = vmax.xlane.f32.xlu0 %v1943
        %v1945 = vpop.xlane.xlu0 %1944
        %v1946 = vsel %vm1936, %v1931, -inf
        %1947 = vmax.xlane.f32.xlu0 %v1946
        %v1948 = vpop.xlane.xlu0 %1947
        %v1949 = vsub.f32 %v1793, %v1939
        %v1950 = vsub.f32 %v1839, %v1942
        %v1951 = vsub.f32 %v1885, %v1945
        %v1952 = vsub.f32 %v1931, %v1948
        %v1953 = vmul.f32 %v1949, 1.442695
        %v1954 = vpow.pop %v1953
        %v1955 = vmul.f32 %v1950, 1.442695
        %v1956 = vpow.pop %v1955
        %v1957 = vmul.f32 %v1951, 1.442695
        %v1958 = vpow.pop %v1957
        %v1959 = vmul.f32 %v1952, 1.442695
        %v1960 = vpow.pop %v1959
        %v1961 = vsel %vm1936, %v1954, 0.0
        %1962 = vadd.xlane.f32.xlu0 %v1961
        %v1963 = vpop.xlane.xlu0 %1962
        %v1964 = vsel %vm1936, %v1956, 0.0
        %1965 = vadd.xlane.f32.xlu0 %v1964
        %v1966 = vpop.xlane.xlu0 %1965
        %v1967 = vsel %vm1936, %v1958, 0.0
        %1968 = vadd.xlane.f32.xlu0 %v1967
        %v1969 = vpop.xlane.xlu0 %1968
        %v1970 = vsel %vm1936, %v1960, 0.0
        %1971 = vadd.xlane.f32.xlu0 %v1970
        %v1972 = vpop.xlane.xlu0 %1971
        %v1973 = vrcp.pop %v1963
        %v1974 = vrcp.pop %v1966
        %v1975 = vrcp.pop %v1969
        %v1976 = vrcp.pop %v1972
        %v1977 = vmul.f32 %v1954, %v1973
        %v1978 = vmul.f32 %v1956, %v1974
        %v1979 = vmul.f32 %v1958, %v1975
        %v1980 = vmul.f32 %v1960, %v1976
        %v1981 = vpack.c.bf16 %v1977, %v1977
        %v1982 = vpack.c.bf16 %v1978, %v1978
        %v1983 = vpack.c.bf16 %v1979, %v1979
        %v1984 = vpack.c.bf16 %v1980, %v1980
        %v1986 = vsel %vm1936, %v1981, 0
        %1988 = vmatprep.subr.bf16.mxu0 0
        %1989 = vmatpush1.bf16.msra.mxu0 %v1727
        %1990 = vmatprep.subr.bf16.mxu0 0
        %1991 = vmatpush1.bf16.msra.mxu0 0
        %1992 = vmatprep.subr.bf16.mxu0 0
        %1993 = vmatpush1.bf16.msra.mxu0 0
        %1994 = vmatprep.subr.bf16.mxu0 0
        %1995 = vmatpush1.bf16.msra.mxu0 0
        %1996 = vmatprep.subr.bf16.mxu0 0
        %1997 = vmatpush1.bf16.msra.mxu0 0
        %1998 = vmatprep.subr.bf16.mxu0 0
        %1999 = vmatpush1.bf16.msra.mxu0 0
        %2000 = vmatprep.subr.bf16.mxu0 0
        %2001 = vmatpush1.bf16.msra.mxu0 0
        %2002 = vmatprep.subr.bf16.mxu0 0
        %2003 = vmatpush1.bf16.msra.mxu0 0
        %2004 = vmatprep.subr.bf16.mxu0 0
        %2005 = vmatpush1.bf16.msra.mxu0 0
        %2006 = vmatprep.subr.bf16.mxu0 0
        %2007 = vmatpush1.bf16.msra.mxu0 0
        %2008 = vmatprep.subr.bf16.mxu0 0
        %2009 = vmatpush1.bf16.msra.mxu0 0
        %2010 = vmatprep.subr.bf16.mxu0 0
        %2011 = vmatpush1.bf16.msra.mxu0 0
        %2012 = vmatprep.subr.bf16.mxu0 0
        %2013 = vmatpush1.bf16.msra.mxu0 0
        %2014 = vmatprep.subr.bf16.mxu0 0
        %2015 = vmatpush1.bf16.msra.mxu0 0
        %2016 = vmatprep.subr.bf16.mxu0 0
        %2017 = vmatpush1.bf16.msra.mxu0 0
        %2018 = vmatprep.subr.bf16.mxu0 0
        %2019 = vmatpush1.bf16.msra.mxu0 0
        %2020 = vmatprep.mubr.bf16.mxu0 0
        %2021 = vmatmul.mubr.bf16.gmra.mrb[0].mxu0 %v1986
        %v2022 = vpop.f32.mrb[0].mxu0
        %v2023 = vadd.f32 0.0, %v2022
        %v2024 = vpop.f32.mrb[0].mxu0
        %v2025 = vpop.f32.mrb[0].mxu0
        %v2026 = vpop.f32.mrb[0].mxu0
        %2027 = vdwg.mxu0
        %v2029 = vsel %vm1936, %v1982, 0
        %2031 = vmatprep.subr.bf16.mxu0 0
        %2032 = vmatpush1.bf16.msra.mxu0 %v1744
        %2033 = vmatprep.subr.bf16.mxu0 0
        %2034 = vmatpush1.bf16.msra.mxu0 0
        %2035 = vmatprep.subr.bf16.mxu0 0
        %2036 = vmatpush1.bf16.msra.mxu0 0
        %2037 = vmatprep.subr.bf16.mxu0 0
        %2038 = vmatpush1.bf16.msra.mxu0 0
        %2039 = vmatprep.subr.bf16.mxu0 0
        %2040 = vmatpush1.bf16.msra.mxu0 0
        %2041 = vmatprep.subr.bf16.mxu0 0
        %2042 = vmatpush1.bf16.msra.mxu0 0
        %2043 = vmatprep.subr.bf16.mxu0 0
        %2044 = vmatpush1.bf16.msra.mxu0 0
        %2045 = vmatprep.subr.bf16.mxu0 0
        %2046 = vmatpush1.bf16.msra.mxu0 0
        %2047 = vmatprep.subr.bf16.mxu0 0
        %2048 = vmatpush1.bf16.msra.mxu0 0
        %2049 = vmatprep.subr.bf16.mxu0 0
        %2050 = vmatpush1.bf16.msra.mxu0 0
        %2051 = vmatprep.subr.bf16.mxu0 0
        %2052 = vmatpush1.bf16.msra.mxu0 0
        %2053 = vmatprep.subr.bf16.mxu0 0
        %2054 = vmatpush1.bf16.msra.mxu0 0
        %2055 = vmatprep.subr.bf16.mxu0 0
        %2056 = vmatpush1.bf16.msra.mxu0 0
        %2057 = vmatprep.subr.bf16.mxu0 0
        %2058 = vmatpush1.bf16.msra.mxu0 0
        %2059 = vmatprep.subr.bf16.mxu0 0
        %2060 = vmatpush1.bf16.msra.mxu0 0
        %2061 = vmatprep.subr.bf16.mxu0 0
        %2062 = vmatpush1.bf16.msra.mxu0 0
        %2063 = vmatprep.mubr.bf16.mxu0 0
        %2064 = vmatmul.mubr.bf16.gmra.mrb[0].mxu0 %v2029
        %v2065 = vpop.f32.mrb[0].mxu0
        %v2066 = vadd.f32 0.0, %v2065
        %v2067 = vpop.f32.mrb[0].mxu0
        %v2068 = vpop.f32.mrb[0].mxu0
        %v2069 = vpop.f32.mrb[0].mxu0
        %2070 = vdwg.mxu0
        %v2072 = vsel %vm1936, %v1983, 0
        %2074 = vmatprep.subr.bf16.mxu0 0
        %2075 = vmatpush1.bf16.msra.mxu0 %v1747
        %2076 = vmatprep.subr.bf16.mxu0 0
        %2077 = vmatpush1.bf16.msra.mxu0 0
        %2078 = vmatprep.subr.bf16.mxu0 0
        %2079 = vmatpush1.bf16.msra.mxu0 0
        %2080 = vmatprep.subr.bf16.mxu0 0
        %2081 = vmatpush1.bf16.msra.mxu0 0
        %2082 = vmatprep.subr.bf16.mxu0 0
        %2083 = vmatpush1.bf16.msra.mxu0 0
        %2084 = vmatprep.subr.bf16.mxu0 0
        %2085 = vmatpush1.bf16.msra.mxu0 0
        %2086 = vmatprep.subr.bf16.mxu0 0
        %2087 = vmatpush1.bf16.msra.mxu0 0
        %2088 = vmatprep.subr.bf16.mxu0 0
        %2089 = vmatpush1.bf16.msra.mxu0 0
        %2090 = vmatprep.subr.bf16.mxu0 0
        %2091 = vmatpush1.bf16.msra.mxu0 0
        %2092 = vmatprep.subr.bf16.mxu0 0
        %2093 = vmatpush1.bf16.msra.mxu0 0
        %2094 = vmatprep.subr.bf16.mxu0 0
        %2095 = vmatpush1.bf16.msra.mxu0 0
        %2096 = vmatprep.subr.bf16.mxu0 0
        %2097 = vmatpush1.bf16.msra.mxu0 0
        %2098 = vmatprep.subr.bf16.mxu0 0
        %2099 = vmatpush1.bf16.msra.mxu0 0
        %2100 = vmatprep.subr.bf16.mxu0 0
        %2101 = vmatpush1.bf16.msra.mxu0 0
        %2102 = vmatprep.subr.bf16.mxu0 0
        %2103 = vmatpush1.bf16.msra.mxu0 0
        %2104 = vmatprep.subr.bf16.mxu0 0
        %2105 = vmatpush1.bf16.msra.mxu0 0
        %2106 = vmatprep.mubr.bf16.mxu0 0
        %2107 = vmatmul.mubr.bf16.gmra.mrb[0].mxu0 %v2072
        %v2108 = vpop.f32.mrb[0].mxu0
        %v2109 = vadd.f32 0.0, %v2108
        %v2110 = vpop.f32.mrb[0].mxu0
        %v2111 = vpop.f32.mrb[0].mxu0
        %v2112 = vpop.f32.mrb[0].mxu0
        %2113 = vdwg.mxu0
        %v2115 = vsel %vm1936, %v1984, 0
        %2117 = vmatprep.subr.bf16.mxu0 0
        %2118 = vmatpush1.bf16.msra.mxu0 %v1750
        %2119 = vmatprep.subr.bf16.mxu0 0
        %2120 = vmatpush1.bf16.msra.mxu0 0
        %2121 = vmatprep.subr.bf16.mxu0 0
        %2122 = vmatpush1.bf16.msra.mxu0 0
        %2123 = vmatprep.subr.bf16.mxu0 0
        %2124 = vmatpush1.bf16.msra.mxu0 0
        %2125 = vmatprep.subr.bf16.mxu0 0
        %2126 = vmatpush1.bf16.msra.mxu0 0
        %2127 = vmatprep.subr.bf16.mxu0 0
        %2128 = vmatpush1.bf16.msra.mxu0 0
        %2129 = vmatprep.subr.bf16.mxu0 0
        %2130 = vmatpush1.bf16.msra.mxu0 0
        %2131 = vmatprep.subr.bf16.mxu0 0
        %2132 = vmatpush1.bf16.msra.mxu0 0
        %2133 = vmatprep.subr.bf16.mxu0 0
        %2134 = vmatpush1.bf16.msra.mxu0 0
        %2135 = vmatprep.subr.bf16.mxu0 0
        %2136 = vmatpush1.bf16.msra.mxu0 0
        %2137 = vmatprep.subr.bf16.mxu0 0
        %2138 = vmatpush1.bf16.msra.mxu0 0
        %2139 = vmatprep.subr.bf16.mxu0 0
        %2140 = vmatpush1.bf16.msra.mxu0 0
        %2141 = vmatprep.subr.bf16.mxu0 0
        %2142 = vmatpush1.bf16.msra.mxu0 0
        %2143 = vmatprep.subr.bf16.mxu0 0
        %2144 = vmatpush1.bf16.msra.mxu0 0
        %2145 = vmatprep.subr.bf16.mxu0 0
        %2146 = vmatpush1.bf16.msra.mxu0 0
        %2147 = vmatprep.subr.bf16.mxu0 0
        %2148 = vmatpush1.bf16.msra.mxu0 0
        %2149 = vmatprep.mubr.bf16.mxu0 0
        %2150 = vmatmul.mubr.bf16.gmra.mrb[0].mxu0 %v2115
        %v2151 = vpop.f32.mrb[0].mxu0
        %v2152 = vadd.f32 0.0, %v2151
        %v2153 = vpop.f32.mrb[0].mxu0
        %v2154 = vpop.f32.mrb[0].mxu0
        %v2155 = vpop.f32.mrb[0].mxu0
        %2156 = vdwg.mxu0
        %v2157 = vpack.c.bf16 %v2023, %v2023
        %2158 = vst.msk [vmem:[#allocation2] sm:$0xf] %vm1400, %v2157
        %v2159 = vpack.c.bf16 %v2066, %v2066
        %v2161 = vunpack.c.l.b16 %v2159
        %v2162 = vpack.c.b16 %v2161, %v2161
        %2163 = vrot.lane.b32.xlu0 %v2162, 8
        %v2164 = vpop.permute.xlu0 %2163
        %2166 = vst.msk [vmem:[#allocation2] sm:$0xf] %vm1409, %v2164
        %v2167 = vpack.c.bf16 %v2109, %v2109
        %v2169 = vunpack.c.l.b16 %v2167
        %v2170 = vpack.c.b16 %v2169, %v2169
        %2171 = vrot.lane.b32.xlu0 %v2170, 16
        %v2172 = vpop.permute.xlu0 %2171
        %2174 = vst.msk [vmem:[#allocation2] sm:$0xf] %vm1418, %v2172
        %v2175 = vpack.c.bf16 %v2152, %v2152
        %v2177 = vunpack.c.l.b16 %v2175
        %v2178 = vpack.c.b16 %v2177, %v2177
        %2179 = vrot.lane.b32.xlu0 %v2178, 24
        %v2180 = vpop.permute.xlu0 %2179
        %2182 = vst.msk [vmem:[#allocation2] sm:$0xf] %vm1427, %v2180
        %v2183 = vld [vmem:[#allocation2] sm:$0xf]
        %v2184 = vld [vmem:[#allocation19] sm:$0xf]
        %v2185 = vld [vmem:[#allocation19 + $0x4] sm:$0xf]
        %v2186 = vld [vmem:[#allocation19 + $0x8] sm:$0xf]
        %v2187 = vld [vmem:[#allocation19 + $0xc] sm:$0xf]
        %v2188 = vlaneseq
        %v2189 = vshrl.u32 %v2188, 7
        %v2190 = vsub.s32 1, %v2189
        %v2191 = vrot.slane %v825, %v2190
        %v2196 = vunpack.c.l.b16 %v2184
        %v2197 = vunpack.c.l.b16 %v2185
        %v2198 = vunpack.c.l.b16 %v2186
        %v2199 = vunpack.c.l.b16 %v2187
        %v2200 = vpack.c.b16 %v2197, %v2196
        %v2201 = vpack.c.b16 %v2199, %v2198
        %v2205 = vsel %vm850, %v2183, 0
        %2207 = vmatprep.subr.bf16.mxu0 0
        %2208 = vmatpush1.bf16.msra.mxu0 %v2200
        %2209 = vmatprep.subr.bf16.mxu0 0
        %2210 = vmatpush1.bf16.msra.mxu0 %v2201
        %2211 = vmatprep.subr.bf16.mxu0 0
        %2212 = vmatpush1.bf16.msra.mxu0 0
        %2213 = vmatprep.subr.bf16.mxu0 0
        %2214 = vmatpush1.bf16.msra.mxu0 0
        %2215 = vmatprep.subr.bf16.mxu0 0
        %2216 = vmatpush1.bf16.msra.mxu0 0
        %2217 = vmatprep.subr.bf16.mxu0 0
        %2218 = vmatpush1.bf16.msra.mxu0 0
        %2219 = vmatprep.subr.bf16.mxu0 0
        %2220 = vmatpush1.bf16.msra.mxu0 0
        %2221 = vmatprep.subr.bf16.mxu0 0
        %2222 = vmatpush1.bf16.msra.mxu0 0
        %2223 = vmatprep.subr.bf16.mxu0 0
        %2224 = vmatpush1.bf16.msra.mxu0 0
        %2225 = vmatprep.subr.bf16.mxu0 0
        %2226 = vmatpush1.bf16.msra.mxu0 0
        %2227 = vmatprep.subr.bf16.mxu0 0
        %2228 = vmatpush1.bf16.msra.mxu0 0
        %2229 = vmatprep.subr.bf16.mxu0 0
        %2230 = vmatpush1.bf16.msra.mxu0 0
        %2231 = vmatprep.subr.bf16.mxu0 0
        %2232 = vmatpush1.bf16.msra.mxu0 0
        %2233 = vmatprep.subr.bf16.mxu0 0
        %2234 = vmatpush1.bf16.msra.mxu0 0
        %2235 = vmatprep.subr.bf16.mxu0 0
        %2236 = vmatpush1.bf16.msra.mxu0 0
        %2237 = vmatprep.subr.bf16.mxu0 0
        %2238 = vmatpush1.bf16.msra.mxu0 0
        %2239 = vmatprep.mubr.bf16.mxu0 0
        %2240 = vmatmul.mubr.bf16.gmra.mrb[0].mxu0 %v2205
        %v2241 = vpop.f32.mrb[0].mxu0
        %v2242 = vadd.f32 %v2191, %v2241
        %v2243 = vpop.f32.mrb[0].mxu0
        %v2244 = vpop.f32.mrb[0].mxu0
        %v2245 = vpop.f32.mrb[0].mxu0
        %2246 = vdwg.mxu0
        %v2247 = vadd.f32 %v1977, %v1978
        %v2248 = vadd.f32 %v2247, %v1979
        %v2249 = vadd.f32 %v2248, %v1980
        %v2250 = vmul.f32 %v2249, 0.25
        %v2251 = vadd.f32 %v1517, %v2242
        %v2252 = vsel %vm850, %v2251, 0.0
        %2253 = vadd.xlane.f32.xlu0 %v2252
        %v2254 = vpop.xlane.xlu0 %2253
        %v2255 = vmul.f32 %v2254, %v1497
        %v2256 = vsub.f32 %v2251, %v2255
        %v2257 = vmul.f32 %v2256, %v2256
        %v2258 = vsel %vm850, %v2257, 0.0
        %2259 = vadd.xlane.f32.xlu0 %v2258
        %v2260 = vpop.xlane.xlu0 %2259
        %v2261 = vmul.f32 %v2260, %v1497
        %v2262 = vadd.f32 %v2261, 1e-05
        %v2263 = vrsqrt.pop %v2262
        %v2264 = vmul.f32 %v2256, %v2263
        %v2265 = vlaneseq
        %v2266 = vshrl.u32 %v2265, 7
        %v2267 = vsub.s32 5, %v2266
        %v2268 = vrot.slane %v825, %v2267
        %v2269 = vmul.f32 %v2264, %v2268
        %v2270 = vlaneseq
        %v2271 = vshrl.u32 %v2270, 7
        %v2272 = vsub.s32 6, %v2271
        %v2273 = vrot.slane %v825, %v2272
        %v2274 = vadd.f32 %v2269, %v2273
        %v2275 = vpack.c.bf16 %v2274, %v2274
        %v2276 = vld [vmem:[%s10] sm:$0xff]
        %v2277 = vld [vmem:[%s10 + $0x8] sm:$0xff]
        %v2278 = vld [vmem:[%s10 + $0x10] sm:$0xff]
        %v2279 = vld [vmem:[%s10 + $0x18] sm:$0xff]
        %v2280 = vld [vmem:[%s15] sm:$0x3]
        %v2282 = vlaneseq
        %v2283 = vshrl.u32 %v2282, 7
        %v2284 = vsub.s32 0, %v2283
        %v2285 = vrot.slane %v2280, %v2284
        %v2286 = vlaneseq
        %v2287 = vshrl.u32 %v2286, 7
        %v2288 = vsub.s32 1, %v2287
        %v2289 = vrot.slane %v2280, %v2288
        %v2296 = vunpack.c.l.b16 %v2276
        %v2297 = vunpack.c.h.b16 %v2276
        %v2298 = vunpack.c.l.b16 %v2277
        %v2299 = vunpack.c.h.b16 %v2277
        %v2300 = vunpack.c.l.b16 %v2278
        %v2301 = vunpack.c.h.b16 %v2278
        %v2302 = vunpack.c.l.b16 %v2279
        %v2303 = vunpack.c.h.b16 %v2279
        %v2304 = vpack.c.b16 %v2298, %v2296
        %v2305 = vpack.c.b16 %v2299, %v2297
        %v2306 = vpack.c.b16 %v2302, %v2300
        %v2307 = vpack.c.b16 %v2303, %v2301
        %v2313 = vsel %vm850, %v2275, 0
        %2315 = vmatprep.subr.bf16.mxu0 %v2305
        %2316 = vmatpush1.bf16.msra.mxu0 %v2304
        %2317 = vmatprep.subr.bf16.mxu0 %v2307
        %2318 = vmatpush1.bf16.msra.mxu0 %v2306
        %2319 = vmatprep.subr.bf16.mxu0 0
        %2320 = vmatpush1.bf16.msra.mxu0 0
        %2321 = vmatprep.subr.bf16.mxu0 0
        %2322 = vmatpush1.bf16.msra.mxu0 0
        %2323 = vmatprep.subr.bf16.mxu0 0
        %2324 = vmatpush1.bf16.msra.mxu0 0
        %2325 = vmatprep.subr.bf16.mxu0 0
        %2326 = vmatpush1.bf16.msra.mxu0 0
        %2327 = vmatprep.subr.bf16.mxu0 0
        %2328 = vmatpush1.bf16.msra.mxu0 0
        %2329 = vmatprep.subr.bf16.mxu0 0
        %2330 = vmatpush1.bf16.msra.mxu0 0
        %2331 = vmatprep.subr.bf16.mxu0 0
        %2332 = vmatpush1.bf16.msra.mxu0 0
        %2333 = vmatprep.subr.bf16.mxu0 0
        %2334 = vmatpush1.bf16.msra.mxu0 0
        %2335 = vmatprep.subr.bf16.mxu0 0
        %2336 = vmatpush1.bf16.msra.mxu0 0
        %2337 = vmatprep.subr.bf16.mxu0 0
        %2338 = vmatpush1.bf16.msra.mxu0 0
        %2339 = vmatprep.subr.bf16.mxu0 0
        %2340 = vmatpush1.bf16.msra.mxu0 0
        %2341 = vmatprep.subr.bf16.mxu0 0
        %2342 = vmatpush1.bf16.msra.mxu0 0
        %2343 = vmatprep.subr.bf16.mxu0 0
        %2344 = vmatpush1.bf16.msra.mxu0 0
        %2345 = vmatprep.subr.bf16.mxu0 0
        %2346 = vmatpush1.bf16.msra.mxu0 0
        %2347 = vmatprep.mubr.bf16.mxu0 0
        %2348 = vmatmul.mubr.bf16.gmra.mrb[0].mxu0 %v2313
        %v2349 = vpop.f32.mrb[0].mxu0
        %v2350 = vadd.f32 %v2285, %v2349
        %v2351 = vpop.f32.mrb[0].mxu0
        %v2352 = vadd.f32 %v2289, %v2351
        %v2353 = vpop.f32.mrb[0].mxu0
        %v2354 = vpop.f32.mrb[0].mxu0
        %2355 = vdwg.mxu0
        %v2356 = vld [vmem:[%s713] sm:$0xf]
        %v2357 = vunpack.c.l.bf16 %v2356
        %v2358 = vpack.c.bf16 %v2350, %v2350
        %v2359 = vpack.c.bf16 %v2352, %v2352
        %2361 = vrot.lane.b32.xlu0 %v2358, 112
        %v2362 = vpop.permute.xlu0 %2361
        %2363 = vrot.lane.b32.xlu0 %v2358, 96
        %v2364 = vpop.permute.xlu0 %2363
        %2365 = vrot.lane.b32.xlu0 %v2358, 80
        %v2366 = vpop.permute.xlu0 %2365
        %2368 = vrot.lane.b32.xlu0 %v2359, 112
        %v2369 = vpop.permute.xlu0 %2368
        %2370 = vrot.lane.b32.xlu0 %v2359, 96
        %v2371 = vpop.permute.xlu0 %2370
        %2372 = vrot.lane.b32.xlu0 %v2359, 80
        %v2373 = vpop.permute.xlu0 %2372
        %2374 = vrot.lane.b32.xlu0 %v2358, 64
        %v2375 = vpop.permute.xlu0 %2374
        %v2377 = vsel %vm1936, %v2358, 0
        %v2380 = vsel %vm1936, %v2375, 0
        %2382 = vmatprep.subr.bf16.mxu0 0
        %2383 = vmatpush1.bf16.xpose.msra.mxu0 %v2380
        %2384 = vmatprep.subr.bf16.mxu0 0
        %2385 = vmatpush1.bf16.xpose.msra.mxu0 0
        %2386 = vmatprep.subr.bf16.mxu0 0
        %2387 = vmatpush1.bf16.xpose.msra.mxu0 0
        %2388 = vmatprep.subr.bf16.mxu0 0
        %2389 = vmatpush1.bf16.xpose.msra.mxu0 0
        %2390 = vmatprep.subr.bf16.mxu0 0
        %2391 = vmatpush1.bf16.xpose.msra.mxu0 0
        %2392 = vmatprep.subr.bf16.mxu0 0
        %2393 = vmatpush1.bf16.xpose.msra.mxu0 0
        %2394 = vmatprep.subr.bf16.mxu0 0
        %2395 = vmatpush1.bf16.xpose.msra.mxu0 0
        %2396 = vmatprep.subr.bf16.mxu0 0
        %2397 = vmatpush1.bf16.xpose.msra.mxu0 0
        %2398 = vmatprep.subr.bf16.mxu0 0
        %2399 = vmatpush1.bf16.xpose.msra.mxu0 0
        %2400 = vmatprep.subr.bf16.mxu0 0
        %2401 = vmatpush1.bf16.xpose.msra.mxu0 0
        %2402 = vmatprep.subr.bf16.mxu0 0
        %2403 = vmatpush1.bf16.xpose.msra.mxu0 0
        %2404 = vmatprep.subr.bf16.mxu0 0
        %2405 = vmatpush1.bf16.xpose.msra.mxu0 0
        %2406 = vmatprep.subr.bf16.mxu0 0
        %2407 = vmatpush1.bf16.xpose.msra.mxu0 0
        %2408 = vmatprep.subr.bf16.mxu0 0
        %2409 = vmatpush1.bf16.xpose.msra.mxu0 0
        %2410 = vmatprep.subr.bf16.mxu0 0
        %2411 = vmatpush1.bf16.xpose.msra.mxu0 0
        %2412 = vmatprep.subr.bf16.mxu0 0
        %2413 = vmatpush1.bf16.xpose.msra.mxu0 0
        %2414 = vmatprep.mubr.bf16.mxu0 0
        %2415 = vmatmul.mubr.bf16.gmra.mrb[0].mxu0 %v2377
        %v2416 = vpop.f32.mrb[0].mxu0
        %v2417 = vadd.f32 0.0, %v2416
        %v2418 = vpop.f32.mrb[0].mxu0
        %v2419 = vpop.f32.mrb[0].mxu0
        %v2420 = vpop.f32.mrb[0].mxu0
        %2421 = vdwg.mxu0
        %2422 = vrot.lane.b32.xlu0 %v2362, 64
        %v2423 = vpop.permute.xlu0 %2422
        %v2425 = vsel %vm1936, %v2362, 0
        %v2428 = vsel %vm1936, %v2423, 0
        %2430 = vmatprep.subr.bf16.mxu0 0
        %2431 = vmatpush1.bf16.xpose.msra.mxu0 %v2428
        %2432 = vmatprep.subr.bf16.mxu0 0
        %2433 = vmatpush1.bf16.xpose.msra.mxu0 0
        %2434 = vmatprep.subr.bf16.mxu0 0
        %2435 = vmatpush1.bf16.xpose.msra.mxu0 0
        %2436 = vmatprep.subr.bf16.mxu0 0
        %2437 = vmatpush1.bf16.xpose.msra.mxu0 0
        %2438 = vmatprep.subr.bf16.mxu0 0
        %2439 = vmatpush1.bf16.xpose.msra.mxu0 0
        %2440 = vmatprep.subr.bf16.mxu0 0
        %2441 = vmatpush1.bf16.xpose.msra.mxu0 0
        %2442 = vmatprep.subr.bf16.mxu0 0
        %2443 = vmatpush1.bf16.xpose.msra.mxu0 0
        %2444 = vmatprep.subr.bf16.mxu0 0
        %2445 = vmatpush1.bf16.xpose.msra.mxu0 0
        %2446 = vmatprep.subr.bf16.mxu0 0
        %2447 = vmatpush1.bf16.xpose.msra.mxu0 0
        %2448 = vmatprep.subr.bf16.mxu0 0
        %2449 = vmatpush1.bf16.xpose.msra.mxu0 0
        %2450 = vmatprep.subr.bf16.mxu0 0
        %2451 = vmatpush1.bf16.xpose.msra.mxu0 0
        %2452 = vmatprep.subr.bf16.mxu0 0
        %2453 = vmatpush1.bf16.xpose.msra.mxu0 0
        %2454 = vmatprep.subr.bf16.mxu0 0
        %2455 = vmatpush1.bf16.xpose.msra.mxu0 0
        %2456 = vmatprep.subr.bf16.mxu0 0
        %2457 = vmatpush1.bf16.xpose.msra.mxu0 0
        %2458 = vmatprep.subr.bf16.mxu0 0
        %2459 = vmatpush1.bf16.xpose.msra.mxu0 0
        %2460 = vmatprep.subr.bf16.mxu0 0
        %2461 = vmatpush1.bf16.xpose.msra.mxu0 0
        %2462 = vmatprep.mubr.bf16.mxu0 0
        %2463 = vmatmul.mubr.bf16.gmra.mrb[0].mxu0 %v2425
        %v2464 = vpop.f32.mrb[0].mxu0
        %v2465 = vadd.f32 0.0, %v2464
        %v2466 = vpop.f32.mrb[0].mxu0
        %v2467 = vpop.f32.mrb[0].mxu0
        %v2468 = vpop.f32.mrb[0].mxu0
        %2469 = vdwg.mxu0
        %2470 = vrot.lane.b32.xlu0 %v2364, 64
        %v2471 = vpop.permute.xlu0 %2470
        %v2473 = vsel %vm1936, %v2364, 0
        %v2476 = vsel %vm1936, %v2471, 0
        %2478 = vmatprep.subr.bf16.mxu0 0
        %2479 = vmatpush1.bf16.xpose.msra.mxu0 %v2476
        %2480 = vmatprep.subr.bf16.mxu0 0
        %2481 = vmatpush1.bf16.xpose.msra.mxu0 0
        %2482 = vmatprep.subr.bf16.mxu0 0
        %2483 = vmatpush1.bf16.xpose.msra.mxu0 0
        %2484 = vmatprep.subr.bf16.mxu0 0
        %2485 = vmatpush1.bf16.xpose.msra.mxu0 0
        %2486 = vmatprep.subr.bf16.mxu0 0
        %2487 = vmatpush1.bf16.xpose.msra.mxu0 0
        %2488 = vmatprep.subr.bf16.mxu0 0
        %2489 = vmatpush1.bf16.xpose.msra.mxu0 0
        %2490 = vmatprep.subr.bf16.mxu0 0
        %2491 = vmatpush1.bf16.xpose.msra.mxu0 0
        %2492 = vmatprep.subr.bf16.mxu0 0
        %2493 = vmatpush1.bf16.xpose.msra.mxu0 0
        %2494 = vmatprep.subr.bf16.mxu0 0
        %2495 = vmatpush1.bf16.xpose.msra.mxu0 0
        %2496 = vmatprep.subr.bf16.mxu0 0
        %2497 = vmatpush1.bf16.xpose.msra.mxu0 0
        %2498 = vmatprep.subr.bf16.mxu0 0
        %2499 = vmatpush1.bf16.xpose.msra.mxu0 0
        %2500 = vmatprep.subr.bf16.mxu0 0
        %2501 = vmatpush1.bf16.xpose.msra.mxu0 0
        %2502 = vmatprep.subr.bf16.mxu0 0
        %2503 = vmatpush1.bf16.xpose.msra.mxu0 0
        %2504 = vmatprep.subr.bf16.mxu0 0
        %2505 = vmatpush1.bf16.xpose.msra.mxu0 0
        %2506 = vmatprep.subr.bf16.mxu0 0
        %2507 = vmatpush1.bf16.xpose.msra.mxu0 0
        %2508 = vmatprep.subr.bf16.mxu0 0
        %2509 = vmatpush1.bf16.xpose.msra.mxu0 0
        %2510 = vmatprep.mubr.bf16.mxu0 0
        %2511 = vmatmul.mubr.bf16.gmra.mrb[0].mxu0 %v2473
        %v2512 = vpop.f32.mrb[0].mxu0
        %v2513 = vadd.f32 0.0, %v2512
        %v2514 = vpop.f32.mrb[0].mxu0
        %v2515 = vpop.f32.mrb[0].mxu0
        %v2516 = vpop.f32.mrb[0].mxu0
        %2517 = vdwg.mxu0
        %2518 = vrot.lane.b32.xlu0 %v2366, 64
        %v2519 = vpop.permute.xlu0 %2518
        %v2521 = vsel %vm1936, %v2366, 0
        %v2524 = vsel %vm1936, %v2519, 0
        %2526 = vmatprep.subr.bf16.mxu0 0
        %2527 = vmatpush1.bf16.xpose.msra.mxu0 %v2524
        %2528 = vmatprep.subr.bf16.mxu0 0
        %2529 = vmatpush1.bf16.xpose.msra.mxu0 0
        %2530 = vmatprep.subr.bf16.mxu0 0
        %2531 = vmatpush1.bf16.xpose.msra.mxu0 0
        %2532 = vmatprep.subr.bf16.mxu0 0
        %2533 = vmatpush1.bf16.xpose.msra.mxu0 0
        %2534 = vmatprep.subr.bf16.mxu0 0
        %2535 = vmatpush1.bf16.xpose.msra.mxu0 0
        %2536 = vmatprep.subr.bf16.mxu0 0
        %2537 = vmatpush1.bf16.xpose.msra.mxu0 0
        %2538 = vmatprep.subr.bf16.mxu0 0
        %2539 = vmatpush1.bf16.xpose.msra.mxu0 0
        %2540 = vmatprep.subr.bf16.mxu0 0
        %2541 = vmatpush1.bf16.xpose.msra.mxu0 0
        %2542 = vmatprep.subr.bf16.mxu0 0
        %2543 = vmatpush1.bf16.xpose.msra.mxu0 0
        %2544 = vmatprep.subr.bf16.mxu0 0
        %2545 = vmatpush1.bf16.xpose.msra.mxu0 0
        %2546 = vmatprep.subr.bf16.mxu0 0
        %2547 = vmatpush1.bf16.xpose.msra.mxu0 0
        %2548 = vmatprep.subr.bf16.mxu0 0
        %2549 = vmatpush1.bf16.xpose.msra.mxu0 0
        %2550 = vmatprep.subr.bf16.mxu0 0
        %2551 = vmatpush1.bf16.xpose.msra.mxu0 0
        %2552 = vmatprep.subr.bf16.mxu0 0
        %2553 = vmatpush1.bf16.xpose.msra.mxu0 0
        %2554 = vmatprep.subr.bf16.mxu0 0
        %2555 = vmatpush1.bf16.xpose.msra.mxu0 0
        %2556 = vmatprep.subr.bf16.mxu0 0
        %2557 = vmatpush1.bf16.xpose.msra.mxu0 0
        %2558 = vmatprep.mubr.bf16.mxu0 0
        %2559 = vmatmul.mubr.bf16.gmra.mrb[0].mxu0 %v2521
        %v2560 = vpop.f32.mrb[0].mxu0
        %v2561 = vadd.f32 0.0, %v2560
        %v2562 = vpop.f32.mrb[0].mxu0
        %v2563 = vpop.f32.mrb[0].mxu0
        %v2564 = vpop.f32.mrb[0].mxu0
        %2565 = vdwg.mxu0
        %v2566 = vadd.f32 %v2417, %v2357
        %v2567 = vadd.f32 %v2465, %v2357
        %v2568 = vadd.f32 %v2513, %v2357
        %v2569 = vadd.f32 %v2561, %v2357
        %v2570 = vsel %vm975, %v2566, -inf
        %2571 = vmax.xlane.f32.xlu0 %v2570
        %v2572 = vpop.xlane.xlu0 %2571
        %v2573 = vsel %vm975, %v2567, -inf
        %2574 = vmax.xlane.f32.xlu0 %v2573
        %v2575 = vpop.xlane.xlu0 %2574
        %v2576 = vsel %vm975, %v2568, -inf
        %2577 = vmax.xlane.f32.xlu0 %v2576
        %v2578 = vpop.xlane.xlu0 %2577
        %v2579 = vsel %vm975, %v2569, -inf
        %2580 = vmax.xlane.f32.xlu0 %v2579
        %v2581 = vpop.xlane.xlu0 %2580
        %v2582 = vsub.f32 %v2566, %v2572
        %v2583 = vsub.f32 %v2567, %v2575
        %v2584 = vsub.f32 %v2568, %v2578
        %v2585 = vsub.f32 %v2569, %v2581
        %v2586 = vmul.f32 %v2582, 1.442695
        %v2587 = vpow.pop %v2586
        %v2588 = vmul.f32 %v2583, 1.442695
        %v2589 = vpow.pop %v2588
        %v2590 = vmul.f32 %v2584, 1.442695
        %v2591 = vpow.pop %v2590
        %v2592 = vmul.f32 %v2585, 1.442695
        %v2593 = vpow.pop %v2592
        %v2594 = vsel %vm975, %v2587, 0.0
        %2595 = vadd.xlane.f32.xlu0 %v2594
        %v2596 = vpop.xlane.xlu0 %2595
        %v2597 = vsel %vm975, %v2589, 0.0
        %2598 = vadd.xlane.f32.xlu0 %v2597
        %v2599 = vpop.xlane.xlu0 %2598
        %v2600 = vsel %vm975, %v2591, 0.0
        %2601 = vadd.xlane.f32.xlu0 %v2600
        %v2602 = vpop.xlane.xlu0 %2601
        %v2603 = vsel %vm975, %v2593, 0.0
        %2604 = vadd.xlane.f32.xlu0 %v2603
        %v2605 = vpop.xlane.xlu0 %2604
        %v2606 = vrcp.pop %v2596
        %v2607 = vrcp.pop %v2599
        %v2608 = vrcp.pop %v2602
        %v2609 = vrcp.pop %v2605
        %v2610 = vmul.f32 %v2587, %v2606
        %v2611 = vmul.f32 %v2589, %v2607
        %v2612 = vmul.f32 %v2591, %v2608
        %v2613 = vmul.f32 %v2593, %v2609
        %v2614 = vpack.c.bf16 %v2610, %v2610
        %v2615 = vpack.c.bf16 %v2611, %v2611
        %v2616 = vpack.c.bf16 %v2612, %v2612
        %v2617 = vpack.c.bf16 %v2613, %v2613
        %v2619 = vsel %vm975, %v2614, 0
        %v2622 = vsel %vm1217, %v2359, 0
        %2624 = vmatprep.subr.bf16.mxu0 0
        %2625 = vmatpush1.bf16.msra.mxu0 %v2622
        %2626 = vmatprep.subr.bf16.mxu0 0
        %2627 = vmatpush1.bf16.msra.mxu0 0
        %2628 = vmatprep.subr.bf16.mxu0 0
        %2629 = vmatpush1.bf16.msra.mxu0 0
        %2630 = vmatprep.subr.bf16.mxu0 0
        %2631 = vmatpush1.bf16.msra.mxu0 0
        %2632 = vmatprep.subr.bf16.mxu0 0
        %2633 = vmatpush1.bf16.msra.mxu0 0
        %2634 = vmatprep.subr.bf16.mxu0 0
        %2635 = vmatpush1.bf16.msra.mxu0 0
        %2636 = vmatprep.subr.bf16.mxu0 0
        %2637 = vmatpush1.bf16.msra.mxu0 0
        %2638 = vmatprep.subr.bf16.mxu0 0
        %2639 = vmatpush1.bf16.msra.mxu0 0
        %2640 = vmatprep.subr.bf16.mxu0 0
        %2641 = vmatpush1.bf16.msra.mxu0 0
        %2642 = vmatprep.subr.bf16.mxu0 0
        %2643 = vmatpush1.bf16.msra.mxu0 0
        %2644 = vmatprep.subr.bf16.mxu0 0
        %2645 = vmatpush1.bf16.msra.mxu0 0
        %2646 = vmatprep.subr.bf16.mxu0 0
        %2647 = vmatpush1.bf16.msra.mxu0 0
        %2648 = vmatprep.subr.bf16.mxu0 0
        %2649 = vmatpush1.bf16.msra.mxu0 0
        %2650 = vmatprep.subr.bf16.mxu0 0
        %2651 = vmatpush1.bf16.msra.mxu0 0
        %2652 = vmatprep.subr.bf16.mxu0 0
        %2653 = vmatpush1.bf16.msra.mxu0 0
        %2654 = vmatprep.subr.bf16.mxu0 0
        %2655 = vmatpush1.bf16.msra.mxu0 0
        %2656 = vmatprep.mubr.bf16.mxu0 0
        %2657 = vmatmul.mubr.bf16.gmra.mrb[0].mxu0 %v2619
        %v2658 = vpop.f32.mrb[0].mxu0
        %v2659 = vadd.f32 0.0, %v2658
        %v2660 = vpop.f32.mrb[0].mxu0
        %v2661 = vpop.f32.mrb[0].mxu0
        %v2662 = vpop.f32.mrb[0].mxu0
        %2663 = vdwg.mxu0
        %v2665 = vsel %vm975, %v2615, 0
        %v2668 = vsel %vm1217, %v2369, 0
        %2670 = vmatprep.subr.bf16.mxu0 0
        %2671 = vmatpush1.bf16.msra.mxu0 %v2668
        %2672 = vmatprep.subr.bf16.mxu0 0
        %2673 = vmatpush1.bf16.msra.mxu0 0
        %2674 = vmatprep.subr.bf16.mxu0 0
        %2675 = vmatpush1.bf16.msra.mxu0 0
        %2676 = vmatprep.subr.bf16.mxu0 0
        %2677 = vmatpush1.bf16.msra.mxu0 0
        %2678 = vmatprep.subr.bf16.mxu0 0
        %2679 = vmatpush1.bf16.msra.mxu0 0
        %2680 = vmatprep.subr.bf16.mxu0 0
        %2681 = vmatpush1.bf16.msra.mxu0 0
        %2682 = vmatprep.subr.bf16.mxu0 0
        %2683 = vmatpush1.bf16.msra.mxu0 0
        %2684 = vmatprep.subr.bf16.mxu0 0
        %2685 = vmatpush1.bf16.msra.mxu0 0
        %2686 = vmatprep.subr.bf16.mxu0 0
        %2687 = vmatpush1.bf16.msra.mxu0 0
        %2688 = vmatprep.subr.bf16.mxu0 0
        %2689 = vmatpush1.bf16.msra.mxu0 0
        %2690 = vmatprep.subr.bf16.mxu0 0
        %2691 = vmatpush1.bf16.msra.mxu0 0
        %2692 = vmatprep.subr.bf16.mxu0 0
        %2693 = vmatpush1.bf16.msra.mxu0 0
        %2694 = vmatprep.subr.bf16.mxu0 0
        %2695 = vmatpush1.bf16.msra.mxu0 0
        %2696 = vmatprep.subr.bf16.mxu0 0
        %2697 = vmatpush1.bf16.msra.mxu0 0
        %2698 = vmatprep.subr.bf16.mxu0 0
        %2699 = vmatpush1.bf16.msra.mxu0 0
        %2700 = vmatprep.subr.bf16.mxu0 0
        %2701 = vmatpush1.bf16.msra.mxu0 0
        %2702 = vmatprep.mubr.bf16.mxu0 0
        %2703 = vmatmul.mubr.bf16.gmra.mrb[0].mxu0 %v2665
        %v2704 = vpop.f32.mrb[0].mxu0
        %v2705 = vadd.f32 0.0, %v2704
        %v2706 = vpop.f32.mrb[0].mxu0
        %v2707 = vpop.f32.mrb[0].mxu0
        %v2708 = vpop.f32.mrb[0].mxu0
        %2709 = vdwg.mxu0
        %v2711 = vsel %vm975, %v2616, 0
        %v2714 = vsel %vm1217, %v2371, 0
        %2716 = vmatprep.subr.bf16.mxu0 0
        %2717 = vmatpush1.bf16.msra.mxu0 %v2714
        %2718 = vmatprep.subr.bf16.mxu0 0
        %2719 = vmatpush1.bf16.msra.mxu0 0
        %2720 = vmatprep.subr.bf16.mxu0 0
        %2721 = vmatpush1.bf16.msra.mxu0 0
        %2722 = vmatprep.subr.bf16.mxu0 0
        %2723 = vmatpush1.bf16.msra.mxu0 0
        %2724 = vmatprep.subr.bf16.mxu0 0
        %2725 = vmatpush1.bf16.msra.mxu0 0
        %2726 = vmatprep.subr.bf16.mxu0 0
        %2727 = vmatpush1.bf16.msra.mxu0 0
        %2728 = vmatprep.subr.bf16.mxu0 0
        %2729 = vmatpush1.bf16.msra.mxu0 0
        %2730 = vmatprep.subr.bf16.mxu0 0
        %2731 = vmatpush1.bf16.msra.mxu0 0
        %2732 = vmatprep.subr.bf16.mxu0 0
        %2733 = vmatpush1.bf16.msra.mxu0 0
        %2734 = vmatprep.subr.bf16.mxu0 0
        %2735 = vmatpush1.bf16.msra.mxu0 0
        %2736 = vmatprep.subr.bf16.mxu0 0
        %2737 = vmatpush1.bf16.msra.mxu0 0
        %2738 = vmatprep.subr.bf16.mxu0 0
        %2739 = vmatpush1.bf16.msra.mxu0 0
        %2740 = vmatprep.subr.bf16.mxu0 0
        %2741 = vmatpush1.bf16.msra.mxu0 0
        %2742 = vmatprep.subr.bf16.mxu0 0
        %2743 = vmatpush1.bf16.msra.mxu0 0
        %2744 = vmatprep.subr.bf16.mxu0 0
        %2745 = vmatpush1.bf16.msra.mxu0 0
        %2746 = vmatprep.subr.bf16.mxu0 0
        %2747 = vmatpush1.bf16.msra.mxu0 0
        %2748 = vmatprep.mubr.bf16.mxu0 0
        %2749 = vmatmul.mubr.bf16.gmra.mrb[0].mxu0 %v2711
        %v2750 = vpop.f32.mrb[0].mxu0
        %v2751 = vadd.f32 0.0, %v2750
        %v2752 = vpop.f32.mrb[0].mxu0
        %v2753 = vpop.f32.mrb[0].mxu0
        %v2754 = vpop.f32.mrb[0].mxu0
        %2755 = vdwg.mxu0
        %v2757 = vsel %vm975, %v2617, 0
        %v2760 = vsel %vm1217, %v2373, 0
        %2762 = vmatprep.subr.bf16.mxu0 0
        %2763 = vmatpush1.bf16.msra.mxu0 %v2760
        %2764 = vmatprep.subr.bf16.mxu0 0
        %2765 = vmatpush1.bf16.msra.mxu0 0
        %2766 = vmatprep.subr.bf16.mxu0 0
        %2767 = vmatpush1.bf16.msra.mxu0 0
        %2768 = vmatprep.subr.bf16.mxu0 0
        %2769 = vmatpush1.bf16.msra.mxu0 0
        %2770 = vmatprep.subr.bf16.mxu0 0
        %2771 = vmatpush1.bf16.msra.mxu0 0
        %2772 = vmatprep.subr.bf16.mxu0 0
        %2773 = vmatpush1.bf16.msra.mxu0 0
        %2774 = vmatprep.subr.bf16.mxu0 0
        %2775 = vmatpush1.bf16.msra.mxu0 0
        %2776 = vmatprep.subr.bf16.mxu0 0
        %2777 = vmatpush1.bf16.msra.mxu0 0
        %2778 = vmatprep.subr.bf16.mxu0 0
        %2779 = vmatpush1.bf16.msra.mxu0 0
        %2780 = vmatprep.subr.bf16.mxu0 0
        %2781 = vmatpush1.bf16.msra.mxu0 0
        %2782 = vmatprep.subr.bf16.mxu0 0
        %2783 = vmatpush1.bf16.msra.mxu0 0
        %2784 = vmatprep.subr.bf16.mxu0 0
        %2785 = vmatpush1.bf16.msra.mxu0 0
        %2786 = vmatprep.subr.bf16.mxu0 0
        %2787 = vmatpush1.bf16.msra.mxu0 0
        %2788 = vmatprep.subr.bf16.mxu0 0
        %2789 = vmatpush1.bf16.msra.mxu0 0
        %2790 = vmatprep.subr.bf16.mxu0 0
        %2791 = vmatpush1.bf16.msra.mxu0 0
        %2792 = vmatprep.subr.bf16.mxu0 0
        %2793 = vmatpush1.bf16.msra.mxu0 0
        %2794 = vmatprep.mubr.bf16.mxu0 0
        %2795 = vmatmul.mubr.bf16.gmra.mrb[0].mxu0 %v2757
        %v2796 = vpop.f32.mrb[0].mxu0
        %v2797 = vadd.f32 0.0, %v2796
        %v2798 = vpop.f32.mrb[0].mxu0
        %v2799 = vpop.f32.mrb[0].mxu0
        %v2800 = vpop.f32.mrb[0].mxu0
        %2801 = vdwg.mxu0
        %v2802 = vpack.c.bf16 %v2659, %v2659
        %vm2803 = vcmask 125952
        %2804 = vst.msk [vmem:[#allocation3] sm:$0xf] %vm2803, %v2802
        %v2805 = vpack.c.bf16 %v2705, %v2705
        %v2807 = vunpack.c.l.b16 %v2805
        %v2808 = vpack.c.b16 %v2807, %v2807
        %2809 = vrot.lane.b32.xlu0 %v2808, 16
        %v2810 = vpop.permute.xlu0 %2809
        %vm2812 = vcmask 257152
        %2813 = vst.msk [vmem:[#allocation3] sm:$0xf] %vm2812, %v2810
        %v2814 = vpack.c.bf16 %v2751, %v2751
        %v2816 = vunpack.c.l.b16 %v2814
        %v2817 = vpack.c.b16 %v2816, %v2816
        %2818 = vrot.lane.b32.xlu0 %v2817, 32
        %v2819 = vpop.permute.xlu0 %2818
        %vm2821 = vcmask 388352
        %2822 = vst.msk [vmem:[#allocation3] sm:$0xf] %vm2821, %v2819
        %v2823 = vpack.c.bf16 %v2797, %v2797
        %v2825 = vunpack.c.l.b16 %v2823
        %v2826 = vpack.c.b16 %v2825, %v2825
        %2827 = vrot.lane.b32.xlu0 %v2826, 48
        %v2828 = vpop.permute.xlu0 %2827
        %vm2830 = vcmask 519552
        %2831 = vst.msk [vmem:[#allocation3] sm:$0xf] %vm2830, %v2828
        %v2832 = vld [vmem:[#allocation3] sm:$0xf]
        %v2833 = vld [vmem:[%s13] sm:$0xf]
        %v2834 = vld [vmem:[%s13 + $0x4] sm:$0xf]
        %v2835 = vld [vmem:[%s13 + $0x8] sm:$0xf]
        %v2836 = vld [vmem:[%s13 + $0xc] sm:$0xf]
        %v2837 = vld [vmem:[%s13 + $0x10] sm:$0xf]
        %v2838 = vld [vmem:[%s13 + $0x14] sm:$0xf]
        %v2839 = vld [vmem:[%s13 + $0x18] sm:$0xf]
        %v2840 = vld [vmem:[%s13 + $0x1c] sm:$0xf]
        %v2841 = vlaneseq
        %v2842 = vshrl.u32 %v2841, 7
        %v2843 = vsub.s32 2, %v2842
        %v2844 = vrot.slane %v825, %v2843
        %v2853 = vunpack.c.l.b16 %v2833
        %v2854 = vunpack.c.l.b16 %v2834
        %v2855 = vunpack.c.l.b16 %v2835
        %v2856 = vunpack.c.l.b16 %v2836
        %v2857 = vunpack.c.l.b16 %v2837
        %v2858 = vunpack.c.l.b16 %v2838
        %v2859 = vunpack.c.l.b16 %v2839
        %v2860 = vunpack.c.l.b16 %v2840
        %v2861 = vpack.c.b16 %v2854, %v2853
        %v2862 = vpack.c.b16 %v2856, %v2855
        %v2863 = vpack.c.b16 %v2858, %v2857
        %v2864 = vpack.c.b16 %v2860, %v2859
        %vm2869 = vcmask 523264
        %v2871 = vsel %vm2869, %v2832, 0
        %2873 = vmatprep.subr.bf16.mxu0 0
        %2874 = vmatpush1.bf16.msra.mxu0 %v2861
        %2875 = vmatprep.subr.bf16.mxu0 0
        %2876 = vmatpush1.bf16.msra.mxu0 %v2862
        %2877 = vmatprep.subr.bf16.mxu0 0
        %2878 = vmatpush1.bf16.msra.mxu0 %v2863
        %2879 = vmatprep.subr.bf16.mxu0 0
        %2880 = vmatpush1.bf16.msra.mxu0 %v2864
        %2881 = vmatprep.subr.bf16.mxu0 0
        %2882 = vmatpush1.bf16.msra.mxu0 0
        %2883 = vmatprep.subr.bf16.mxu0 0
        %2884 = vmatpush1.bf16.msra.mxu0 0
        %2885 = vmatprep.subr.bf16.mxu0 0
        %2886 = vmatpush1.bf16.msra.mxu0 0
        %2887 = vmatprep.subr.bf16.mxu0 0
        %2888 = vmatpush1.bf16.msra.mxu0 0
        %2889 = vmatprep.subr.bf16.mxu0 0
        %2890 = vmatpush1.bf16.msra.mxu0 0
        %2891 = vmatprep.subr.bf16.mxu0 0
        %2892 = vmatpush1.bf16.msra.mxu0 0
        %2893 = vmatprep.subr.bf16.mxu0 0
        %2894 = vmatpush1.bf16.msra.mxu0 0
        %2895 = vmatprep.subr.bf16.mxu0 0
        %2896 = vmatpush1.bf16.msra.mxu0 0
        %2897 = vmatprep.subr.bf16.mxu0 0
        %2898 = vmatpush1.bf16.msra.mxu0 0
        %2899 = vmatprep.subr.bf16.mxu0 0
        %2900 = vmatpush1.bf16.msra.mxu0 0
        %2901 = vmatprep.subr.bf16.mxu0 0
        %2902 = vmatpush1.bf16.msra.mxu0 0
        %2903 = vmatprep.subr.bf16.mxu0 0
        %2904 = vmatpush1.bf16.msra.mxu0 0
        %2905 = vmatprep.mubr.bf16.mxu0 0
        %2906 = vmatmul.mubr.bf16.gmra.mrb[0].mxu0 %v2871
        %v2907 = vpop.f32.mrb[0].mxu0
        %v2908 = vadd.f32 %v2844, %v2907
        %v2909 = vpop.f32.mrb[0].mxu0
        %v2910 = vpop.f32.mrb[0].mxu0
        %v2911 = vpop.f32.mrb[0].mxu0
        %2912 = vdwg.mxu0
        %v2913 = vadd.f32 %v2274, %v2908
        %v2914 = vsel %vm850, %v2913, 0.0
        %2915 = vadd.xlane.f32.xlu0 %v2914
        %v2916 = vpop.xlane.xlu0 %2915
        %v2917 = vmul.f32 %v2916, %v1497
        %v2918 = vsub.f32 %v2913, %v2917
        %v2919 = vmul.f32 %v2918, %v2918
        %v2920 = vsel %vm850, %v2919, 0.0
        %2921 = vadd.xlane.f32.xlu0 %v2920
        %v2922 = vpop.xlane.xlu0 %2921
        %v2923 = vmul.f32 %v2922, %v1497
        %v2924 = vadd.f32 %v2923, 1e-05
        %v2925 = vrsqrt.pop %v2924
        %v2926 = vmul.f32 %v2918, %v2925
        %v2927 = vlaneseq
        %v2928 = vshrl.u32 %v2927, 7
        %v2929 = vsub.s32 7, %v2928
        %v2930 = vrot.slane %v825, %v2929
        %v2931 = vmul.f32 %v2926, %v2930
        %v2932 = vlaneseq
        %v2933 = vshrl.u32 %v2932, 7
        %v2934 = vsub.s32 0, %v2933
        %v2935 = vrot.slane %v826, %v2934
        %v2936 = vadd.f32 %v2931, %v2935
        %2937 = vst.msk [vmem:[%s807] sm:$0xff] %vm850, %v2936
        %2938 = vst.msk [vmem:[%s814] sm:$0xff] %vm1936, %v2250
        %s2939 = sand.u32 %s438, 1
        %s2940 = scalar_lea.sflag [#allocation6], %s2939
        %s2941 = sand.u32 %s438, 1
        %s2942 = smul.addr %s2941, 8
        %s2943 = scalar_lea.vmem [#allocation21], %s2942
        %s2944 = sand.u32 %s464, 1
        %s2945 = scalar_lea.sflag [#allocation23], %s2944
        %s2946 = sand.u32 %s464, 1
        %s2947 = smul.addr %s2946, 8
        %s2948 = scalar_lea.vmem [#allocation22], %s2947
        // Predicated region
        $region129: #{tpu_custom_call.1} parent=87 // pred_check
          %p2949 = pneg %p448
        $region130: #{tpu_custom_call.1} parent=87 // pred_check_branch
          %2951 = sbr.rel (%p2949) target = $region132
        $region131: #{tpu_custom_call.1} parent=87 // pred_region
          %s2953 = ssub.s32 128, 128
          %2954 = vsyncadd %s2940, %s2953
          %s2955 = smul.addr %s48, 128
          %s2956 = scalar_lea.hbm %s17, %s2955
          %s2958 = sshll.u32 %s2943, 4
          %s2959 = int_to_ptr.vmem [resolvable:$true] %s2958
          %2961 = dma.vmem_to_hbm [thread:$0]  %s2959, 128, %s2956, %s2940
        $region132: #{tpu_custom_call.1} parent=87 // pred_fallthru
          _
        // Predicated region
        $region133: #{tpu_custom_call.1} parent=87 // pred_check
          %p2962 = pneg %p474
        $region134: #{tpu_custom_call.1} parent=87 // pred_check_branch
          %2964 = sbr.rel (%p2962) target = $region136
        $region135: #{tpu_custom_call.1} parent=87 // pred_region
          %s2966 = ssub.s32 128, 128
          %2967 = vsyncadd %s2945, %s2966
          %s2968 = smul.addr %s48, 128
          %s2969 = scalar_lea.hbm %s18, %s2968
          %s2971 = sshll.u32 %s2948, 4
          %s2972 = int_to_ptr.vmem [resolvable:$true] %s2971
          %2974 = dma.vmem_to_hbm [thread:$0]  %s2972, 128, %s2969, %s2945
        $region136: #{tpu_custom_call.1} parent=87 // pred_fallthru
          _
      $region88: #{tpu_custom_call.1} parent=5 // pred_fallthru
        _
      %p2975 = scmp.le.s32.totalorder 2, %s43
      // Predicated region
      $region137: #{tpu_custom_call.1} parent=5 // pred_check
        %p2976 = pneg %p2975
      $region138: #{tpu_custom_call.1} parent=5 // pred_check_branch
        %2978 = sbr.rel (%p2976) target = $region140
      $region139: #{tpu_custom_call.1} parent=5 // pred_region
        %s2979 = ssub.s32 %s43, 2
        // Predicated region
        $region141: #{tpu_custom_call.1} parent=139 // pred_check
          %p2980 = pneg %p454
        $region142: #{tpu_custom_call.1} parent=139 // pred_check_branch
          %2982 = sbr.rel (%p2980) target = $region144
        $region143: #{tpu_custom_call.1} parent=139 // pred_region
          %s2983 = sand.u32 %s439, 1
          %s2984 = scalar_lea.sflag [#allocation6], %s2983
          %s2985 = sand.u32 %s439, 1
          %s2986 = smul.addr %s2985, 8
          %s2987 = scalar_lea.vmem [#allocation21], %s2986
          %2988 = dma.done %s2984, 128
        $region144: #{tpu_custom_call.1} parent=139 // pred_fallthru
          _
        // Predicated region
        $region145: #{tpu_custom_call.1} parent=139 // pred_check
          %p2989 = pneg %p480
        $region146: #{tpu_custom_call.1} parent=139 // pred_check_branch
          %2991 = sbr.rel (%p2989) target = $region148
        $region147: #{tpu_custom_call.1} parent=139 // pred_region
          %s2992 = sand.u32 %s465, 1
          %s2993 = scalar_lea.sflag [#allocation23], %s2992
          %s2994 = sand.u32 %s465, 1
          %s2995 = smul.addr %s2994, 8
          %s2996 = scalar_lea.vmem [#allocation22], %s2995
          %2997 = dma.done %s2993, 128
        $region148: #{tpu_custom_call.1} parent=139 // pred_fallthru
          _
      $region140: #{tpu_custom_call.1} parent=5 // pred_fallthru
        _
    $region6: #{tpu_custom_call.1} parent=1 // loop_footer
      %s47 = sadd.s32 1, %s43
    $region7: #{tpu_custom_call.1} parent=1 // loop_footer_branch
      %42 = sbr.rel target = $region3
    $region8: #{tpu_custom_call.1} parent=1 // loop_exit
      _
    %2998 = vsyncpa [#allocation5], 1
    %s2999 = scalar_lea.sflag [#allocation5], 1
    %3000 = vsyncpa %s2999, 1
    %3001 = vsyncpa [#allocation8], 1
    %s3002 = scalar_lea.sflag [#allocation8], 1
    %3003 = vsyncpa %s3002, 1
    %3004 = vsyncpa [#allocation11], 1
    %s3005 = scalar_lea.sflag [#allocation11], 1
    %3006 = vsyncpa %s3005, 1
    %3007 = vsyncpa [#allocation14], 1
    %3008 = vsyncpa [#allocation17], 1
    %3009 = vsyncpa [#allocation20], 1
    %3010 = vsyncpa [#allocation6], 1
    %s3011 = scalar_lea.sflag [#allocation6], 1
    %3012 = vsyncpa %s3011, 1
    %3013 = vsyncpa [#allocation23], 1
    %s3014 = scalar_lea.sflag [#allocation23], 1
    %3015 = vsyncpa %s3014, 1

</llo_original>
